<compile_context>
chip_gen: v5e
topology: v5e:2x2
jax: 0.10.0
libtpu: 0.0.40
codegen_flags: <defaults>
</compile_context>

<pallas_src>
import functools

import jax
import jax.numpy as jnp
from jax.experimental import pallas as pl
from jax.experimental.pallas import tpu as pltpu

EPS = 1e-5


def _round_up(x, m):
    return (x + m - 1) // m * m


# ----------------------------------------------------------------------------------
# in-kernel helpers (traced inside Pallas kernels)
# ----------------------------------------------------------------------------------
def _layernorm(x, g, b):
    mu = jnp.mean(x, axis=-1, keepdims=True)
    var = jnp.mean(jnp.square(x - mu), axis=-1, keepdims=True)
    return (x - mu) * jax.lax.rsqrt(var + EPS) * g + b


# ----------------------------------------------------------------------------------
# Kernel 1: fused conv-as-matmul + bias + LayerNorm(channels) + ReLU, M-tiled
#   patches: (M, K)  weight: (K, N)  bias/gamma/beta: (1, N)  out: (M, N)
# ----------------------------------------------------------------------------------
def _conv_ln_relu_kernel(p_ref, w_ref, b_ref, g_ref, beta_ref, o_ref):
    y = jnp.dot(p_ref[...], w_ref[...], preferred_element_type=jnp.float32)
    y = y + b_ref[...]
    y = _layernorm(y, g_ref[...], beta_ref[...])
    o_ref[...] = jnp.maximum(y, 0.0).astype(o_ref.dtype)


def conv_ln_relu(patches, w, b, g, beta, *, tile_m=512):
    M, K = patches.shape
    N = w.shape[1]
    # pad K to a multiple of 8 (sublane alignment of the weight); zero rows/cols
    # contribute nothing to the matmul.
    Kp = _round_up(K, 8)
    if Kp != K:
        patches = jnp.pad(patches, ((0, 0), (0, Kp - K)))
        w = jnp.pad(w, ((0, Kp - K), (0, 0)))
    tm = min(tile_m, M)
    return pl.pallas_call(
        _conv_ln_relu_kernel,
        out_shape=jax.ShapeDtypeStruct((M, N), patches.dtype),
        grid=(pl.cdiv(M, tm),),
        in_specs=[
            pl.BlockSpec((tm, Kp), lambda i: (i, 0)),
            pl.BlockSpec((Kp, N), lambda i: (0, 0)),
            pl.BlockSpec((1, N), lambda i: (0, 0)),
            pl.BlockSpec((1, N), lambda i: (0, 0)),
            pl.BlockSpec((1, N), lambda i: (0, 0)),
        ],
        out_specs=pl.BlockSpec((tm, N), lambda i: (i, 0)),
        compiler_params=pltpu.CompilerParams(dimension_semantics=("parallel",)),
    )(patches, w, b, g, beta)


# ----------------------------------------------------------------------------------
# Kernel 2: fused encoder tail — patch projection + cls/pos embed + n_blks
#           transformer blocks (stacked weights, grid over blocks) + final LayerNorm.
#           Activation carry lives in a VMEM scratch across grid steps.
# ----------------------------------------------------------------------------------
def _encoder_kernel(tok_ref, pw_ref, pb_ref, cls_ref, pos_ref,
                    g1_ref, be1_ref, wqkv_ref, wo_ref, bo_ref,
                    g2_ref, be2_ref, w1_ref, mb1_ref, w2_ref, mb2_ref,
                    ng_ref, nb_ref, o_ref, x_sc, att_sc,
                    *, B, n_tok, T, Tp, D, n_head, head_size):
    l = pl.program_id(0)
    hs = head_size
    Hh = n_head * hs
    BT = B * Tp

    # ---- step 0: patch projection + cls token + positional embedding ------------
    @pl.when(l == 0)
    def _init():
        proj = jnp.dot(tok_ref[...], pw_ref[...],
                       preferred_element_type=jnp.float32) + pb_ref[...]
        row0 = (cls_ref[...] + pos_ref[0:1, :]).reshape(1, 1, D)
        x_sc[:, 0:1, :] = jnp.broadcast_to(row0, (B, 1, D))
        x_sc[:, 1:1 + n_tok, :] = (proj.reshape(B, n_tok, D)
                                   + pos_ref[1:1 + n_tok, :].reshape(1, n_tok, D))
        if Tp > 1 + n_tok:  # zero the alignment-only padded rows
            x_sc[:, 1 + n_tok:, :] = jnp.zeros((B, Tp - 1 - n_tok, D), jnp.float32)
        # dropout is identity at inference

    # ---- transformer block `l` (pre-norm, non-causal MHA + ReLU MLP) -------------
    x = x_sc[...]                       # (B, Tp, D) f32 carry
    xf = x.reshape(BT, D)

    h = _layernorm(xf, g1_ref[0], be1_ref[0])
    qkv = jnp.dot(h, wqkv_ref[0], preferred_element_type=jnp.float32)   # (BT, 3*Hh)
    qkv3 = qkv.reshape(B, Tp, 3 * Hh)

    # mask padded key positions (>= T) out of the softmax
    kmask = jax.lax.broadcasted_iota(jnp.int32, (1, Tp, Tp), 2) < T

    for hd in range(n_head):            # short static loop; einsums batched over B
        q_h = qkv3[:, :, hd * hs:(hd + 1) * hs]
        k_h = qkv3[:, :, Hh + hd * hs:Hh + (hd + 1) * hs]
        v_h = qkv3[:, :, 2 * Hh + hd * hs:2 * Hh + (hd + 1) * hs]
        # 1/sqrt(head_size) is folded into Wq at init
        s = jnp.einsum("bqd,bkd->bqk", q_h, k_h,
                       preferred_element_type=jnp.float32)              # (B, Tp, Tp)
        s = jnp.where(kmask, s, -1e30)
        s = s - jnp.max(s, axis=-1, keepdims=True)
        probs = jnp.exp(s)
        probs = probs * pl.reciprocal(jnp.sum(probs, axis=-1, keepdims=True),
                                      approx=True)
        oh = jnp.einsum("bqk,bkd->bqd", probs, v_h,
                        preferred_element_type=jnp.float32)             # (B, Tp, hs)
        att_sc[:, hd * hs:(hd + 1) * hs] = oh.reshape(BT, hs)

    # single output projection over all heads
    att = jnp.dot(att_sc[...], wo_ref[0], preferred_element_type=jnp.float32) + bo_ref[0]
    x1 = xf + att

    h2 = _layernorm(x1, g2_ref[0], be2_ref[0])
    m = jnp.dot(h2, w1_ref[0], preferred_element_type=jnp.float32) + mb1_ref[0]
    m = jnp.maximum(m, 0.0)
    m = jnp.dot(m, w2_ref[0], preferred_element_type=jnp.float32) + mb2_ref[0]
    x2 = x1 + m

    x_sc[...] = x2.reshape(B, Tp, D)

    # ---- last step: fused final LayerNorm + writeback ----------------------------
    @pl.when(l == pl.num_programs(0) - 1)
    def _final():
        y = _layernorm(x2, ng_ref[...], nb_ref[...])
        o_ref[...] = y.reshape(B, Tp, D).astype(o_ref.dtype)


def encoder_transformer(tok2d, p, *, B, n_tok, T, Tp, D, n_head, head_size):
    Hh = n_head * head_size
    Dm = p["w1"].shape[-1]
    n_blks = p["wqkv"].shape[0]
    patch_dim = tok2d.shape[1]
    pos_pad = jnp.pad(p["pos_embed"], ((0, Tp - T), (0, 0)))

    kern = functools.partial(_encoder_kernel, B=B, n_tok=n_tok, T=T, Tp=Tp, D=D,
                             n_head=n_head, head_size=head_size)
    c2 = lambda l: (0, 0)
    pb3 = lambda l: (l, 0, 0)
    return pl.pallas_call(
        kern,
        out_shape=jax.ShapeDtypeStruct((B, Tp, D), jnp.float32),
        grid=(n_blks,),
        in_specs=[
            pl.BlockSpec((B * n_tok, patch_dim), c2),   # tokens (flattened)
            pl.BlockSpec((patch_dim, D), c2),           # proj_w
            pl.BlockSpec((1, D), c2),                   # proj_b
            pl.BlockSpec((1, D), c2),                   # cls_token
            pl.BlockSpec((Tp, D), c2),                  # pos_embed (padded to Tp)
            pl.BlockSpec((1, 1, D), pb3),               # ln1 gamma
            pl.BlockSpec((1, 1, D), pb3),               # ln1 beta
            pl.BlockSpec((1, D, 3 * Hh), pb3),          # fused Wqkv
            pl.BlockSpec((1, Hh, D), pb3),              # Wo
            pl.BlockSpec((1, 1, D), pb3),               # bo
            pl.BlockSpec((1, 1, D), pb3),               # ln2 gamma
            pl.BlockSpec((1, 1, D), pb3),               # ln2 beta
            pl.BlockSpec((1, D, Dm), pb3),              # W1
            pl.BlockSpec((1, 1, Dm), pb3),              # b1
            pl.BlockSpec((1, Dm, D), pb3),              # W2
            pl.BlockSpec((1, 1, D), pb3),               # b2
            pl.BlockSpec((1, D), c2),                   # final norm gamma
            pl.BlockSpec((1, D), c2),                   # final norm beta
        ],
        out_specs=pl.BlockSpec((B, Tp, D), lambda l: (0, 0, 0)),
        scratch_shapes=[pltpu.VMEM((B, Tp, D), jnp.float32),      # activation carry
                        pltpu.VMEM((B * Tp, Hh), jnp.float32)],   # head outputs
        compiler_params=pltpu.CompilerParams(dimension_semantics=("arbitrary",)),
    )(tok2d, p["proj_w"], p["proj_b"], p["cls_token"], pos_pad,
      p["blk_ln1_g"], p["blk_ln1_b"], p["wqkv"], p["wo"], p["bo"],
      p["blk_ln2_g"], p["blk_ln2_b"], p["w1"], p["b1"], p["w2"], p["b2"],
      p["norm_g"], p["norm_b"])


# ----------------------------------------------------------------------------------
# glue: im2col (row-major (kh, kw, Cin) feature order, consistent with our weights)
# ----------------------------------------------------------------------------------
def im2col(x_nhwc, kh, kw, stride, pad):
    # TODO(synk): at real image resolutions, fuse this gather into the kernel DMA
    # (or use lax.conv for the stem) instead of materializing a kh*kw-inflated tensor.
    x = jnp.pad(x_nhwc, ((0, 0), (pad, pad), (pad, pad), (0, 0)))
    B, H, W, C = x.shape
    Ho = (H - kh) // stride + 1
    Wo = (W - kw) // stride + 1
    cols = []
    for i in range(kh):
        for j in range(kw):
            cols.append(x[:, i:i + Ho * stride:stride, j:j + Wo * stride:stride, :])
    patches = jnp.concatenate(cols, axis=-1)              # (B, Ho, Wo, kh*kw*C)
    return patches.reshape(B * Ho * Wo, kh * kw * C), Ho, Wo


# ----------------------------------------------------------------------------------
# parameters (deterministic, synthetic)
# ----------------------------------------------------------------------------------
def init_params(key, *, img_size, patch_size, in_channels, img_embd_dim,
                n_blks, n_head, head_size):
    D = img_embd_dim
    Hh = n_head * head_size
    Dm = 4 * D
    patch_dim = (patch_size // 2) ** 2 * 64
    n_patches = (img_size // patch_size) ** 2
    keys = iter(jax.random.split(key, 16))

    def w(shape, scale=0.02):
        return (scale * jax.random.normal(next(keys), shape)).astype(jnp.float32)

    def ones(*s):
        return jnp.ones(s, jnp.float32)

    def zeros(*s):
        return jnp.zeros(s, jnp.float32)

    # attention score scale 1/sqrt(head_size) folded into Wq (same forward math)
    wq = w((n_blks, D, Hh)) * (1.0 / (head_size ** 0.5))
    wk = w((n_blks, D, Hh))
    wv = w((n_blks, D, Hh))

    return {
        # conv stem
        "conv1_w": w((7 * 7 * in_channels, 32)), "conv1_b": zeros(1, 32),
        "conv_ln1_g": ones(1, 32), "conv_ln1_b": zeros(1, 32),
        "conv2_w": w((3 * 3 * 32, 64)), "conv2_b": zeros(1, 64),
        "conv_ln2_g": ones(1, 64), "conv_ln2_b": zeros(1, 64),
        # projection / embeddings / final norm
        "proj_w": w((patch_dim, D)), "proj_b": zeros(1, D),
        "cls_token": w((1, D)),
        "pos_embed": w((n_patches + 1, D)),
        "norm_g": ones(1, D), "norm_b": zeros(1, D),
        # transformer blocks: weights stacked along a leading n_blks axis
        "blk_ln1_g": ones(n_blks, 1, D), "blk_ln1_b": zeros(n_blks, 1, D),
        "wqkv": jnp.concatenate([wq, wk, wv], axis=-1),    # (n_blks, D, 3*Hh)
        "wo": w((n_blks, Hh, D)), "bo": zeros(n_blks, 1, D),
        "blk_ln2_g": ones(n_blks, 1, D), "blk_ln2_b": zeros(n_blks, 1, D),
        "w1": w((n_blks, D, Dm)), "b1": zeros(n_blks, 1, Dm),
        "w2": w((n_blks, Dm, D)), "b2": zeros(n_blks, 1, D),
    }


# ----------------------------------------------------------------------------------
# full forward
# ----------------------------------------------------------------------------------
def visual_encoder_forward(x_nchw, p, *, cfg):
    B = x_nchw.shape[0]
    D = cfg["img_embd_dim"]
    patch_dim = (cfg["patch_size"] // 2) ** 2 * 64

    xh = jnp.transpose(x_nchw, (0, 2, 3, 1))               # NCHW -> NHWC

    # PatchEmbedding: conv1(7x7, s2, p3) + LN(32) + ReLU
    pat1, H1, W1 = im2col(xh, 7, 7, 2, 3)
    y1 = conv_ln_relu(pat1, p["conv1_w"], p["conv1_b"],
                      p["conv_ln1_g"], p["conv_ln1_b"]).reshape(B, H1, W1, 32)

    # conv2(3x3, s1, p1) + LN(64) + ReLU
    pat2, H2, W2 = im2col(y1, 3, 3, 1, 1)
    y2 = conv_ln_relu(pat2, p["conv2_w"], p["conv2_b"],
                      p["conv_ln2_g"], p["conv_ln2_b"]).reshape(B, H2, W2, 64)

    # tokens (row-major over H, W, C — same as torch .reshape of the NHWC tensor)
    tokens = y2.reshape(B, -1, patch_dim)
    n_tok = tokens.shape[1]
    T = n_tok + 1
    Tp = _round_up(T, 8)

    # projection + cls + pos + dropout(identity) + all blocks + final LN: one kernel
    seq = encoder_transformer(tokens.reshape(B * n_tok, patch_dim), p,
                              B=B, n_tok=n_tok, T=T, Tp=Tp, D=D,
                              n_head=cfg["n_head"], head_size=cfg["head_size"])
    seq = seq[:, :T, :]                                    # drop alignment padding
    return seq[:, 0], seq


# ----------------------------------------------------------------------------------
if __name__ == "__main__":
    cfg = dict(img_size=16, patch_size=8, in_channels=3, img_embd_dim=32,
               n_blks=2, n_head=4, head_size=8)

    key = jax.random.PRNGKey(0)
    kp, kx = jax.random.split(key)
    params = init_params(kp, **cfg)
    x = jax.random.normal(
        kx, (2, cfg["in_channels"], cfg["img_size"], cfg["img_size"]), jnp.float32)

    fwd = jax.jit(functools.partial(visual_encoder_forward, cfg=cfg))
    cls_out, seq_out = fwd(x, params)
    jax.block_until_ready((cls_out, seq_out))

    n_tokens = (cfg["img_size"] // cfg["patch_size"]) ** 2 + 1   # 5
    assert cls_out.shape == (2, cfg["img_embd_dim"])
    assert seq_out.shape == (2, n_tokens, cfg["img_embd_dim"])
    assert bool(jnp.isfinite(seq_out).all())
    print("KERNEL_OK")
</pallas_src>

<mosaic_0001>
module attributes {stable_mosaic.version = 11 : i64} {
  func.func @_conv_ln_relu_kernel(%arg0: i32, %arg1: memref<128x152xf32, #tpu.memory_space<vmem>>, %arg2: memref<152x32xf32, #tpu.memory_space<vmem>>, %arg3: memref<1x32xf32, #tpu.memory_space<vmem>>, %arg4: memref<1x32xf32, #tpu.memory_space<vmem>>, %arg5: memref<1x32xf32, #tpu.memory_space<vmem>>, %arg6: memref<128x32xf32, #tpu.memory_space<vmem>>) attributes {dimension_semantics = [#tpu.dimension_semantics<parallel>], iteration_bounds = array<i64: 1>, scalar_prefetch = 0 : i64, scratch_operands = 0 : i64, tpu.core_type = #tpu.core_type<tc>, window_params = [{transform_indices = @transform_0, window_bounds = array<i64: 128, 152>}, {pipeline_mode = #tpu.pipeline_mode<synchronous>, transform_indices = @transform_1, window_bounds = array<i64: 152, 32>}, {pipeline_mode = #tpu.pipeline_mode<synchronous>, transform_indices = @transform_2, window_bounds = array<i64: 1, 32>}, {pipeline_mode = #tpu.pipeline_mode<synchronous>, transform_indices = @transform_3, window_bounds = array<i64: 1, 32>}, {pipeline_mode = #tpu.pipeline_mode<synchronous>, transform_indices = @transform_4, window_bounds = array<i64: 1, 32>}, {transform_indices = @transform_5, window_bounds = array<i64: 128, 32>}]} {
    %c0 = arith.constant 0 : index
    %c0_0 = arith.constant 0 : index
    %0 = vector.load %arg1[%c0, %c0_0] : memref<128x152xf32, #tpu.memory_space<vmem>>, vector<128x152xf32>
    %c0_1 = arith.constant 0 : index
    %c0_2 = arith.constant 0 : index
    %1 = vector.load %arg2[%c0_1, %c0_2] : memref<152x32xf32, #tpu.memory_space<vmem>>, vector<152x32xf32>
    %cst = arith.constant dense<0.000000e+00> : vector<128x32xf32>
    %2 = tpu.matmul %0, %1, %cst {dimension_numbers = #tpu.dot_dimension_numbers<[1], [0], [0], [1], [0, 0, 1, 1], [], []>} : vector<128x152xf32>, vector<152x32xf32>, vector<128x32xf32> -> vector<128x32xf32>
    %c0_3 = arith.constant 0 : index
    %c0_4 = arith.constant 0 : index
    %3 = vector.load %arg3[%c0_3, %c0_4] : memref<1x32xf32, #tpu.memory_space<vmem>>, vector<1x32xf32>
    %4 = vector.broadcast %3 : vector<1x32xf32> to vector<128x32xf32>
    %5 = arith.addf %2, %4 : vector<128x32xf32>
    %c0_5 = arith.constant 0 : index
    %c0_6 = arith.constant 0 : index
    %6 = vector.load %arg4[%c0_5, %c0_6] : memref<1x32xf32, #tpu.memory_space<vmem>>, vector<1x32xf32>
    %c0_7 = arith.constant 0 : index
    %c0_8 = arith.constant 0 : index
    %7 = vector.load %arg5[%c0_7, %c0_8] : memref<1x32xf32, #tpu.memory_space<vmem>>, vector<1x32xf32>
    %cst_9 = arith.constant dense<0.000000e+00> : vector<128xf32>
    %8 = vector.multi_reduction <add>, %5, %cst_9 [1] : vector<128x32xf32> to vector<128xf32>
    %9 = vector.shape_cast %8 : vector<128xf32> to vector<128x1xf32>
    %cst_10 = arith.constant 3.200000e+01 : f32
    %10 = vector.broadcast %cst_10 : f32 to vector<128x1xf32>
    %11 = arith.divf %9, %10 : vector<128x1xf32>
    %12 = vector.broadcast %11 : vector<128x1xf32> to vector<128x32xf32>
    %13 = arith.subf %5, %12 : vector<128x32xf32>
    %14 = arith.mulf %13, %13 : vector<128x32xf32>
    %cst_11 = arith.constant dense<0.000000e+00> : vector<128xf32>
    %15 = vector.multi_reduction <add>, %14, %cst_11 [1] : vector<128x32xf32> to vector<128xf32>
    %16 = vector.shape_cast %15 : vector<128xf32> to vector<128x1xf32>
    %cst_12 = arith.constant 3.200000e+01 : f32
    %17 = vector.broadcast %cst_12 : f32 to vector<128x1xf32>
    %18 = arith.divf %16, %17 : vector<128x1xf32>
    %19 = vector.broadcast %11 : vector<128x1xf32> to vector<128x32xf32>
    %20 = arith.subf %5, %19 : vector<128x32xf32>
    %cst_13 = arith.constant 9.99999974E-6 : f32
    %21 = vector.broadcast %cst_13 : f32 to vector<128x1xf32>
    %22 = arith.addf %18, %21 : vector<128x1xf32>
    %23 = math.rsqrt %22 : vector<128x1xf32>
    %24 = vector.broadcast %23 : vector<128x1xf32> to vector<128x32xf32>
    %25 = arith.mulf %20, %24 : vector<128x32xf32>
    %26 = vector.broadcast %6 : vector<1x32xf32> to vector<128x32xf32>
    %27 = arith.mulf %25, %26 : vector<128x32xf32>
    %28 = vector.broadcast %7 : vector<1x32xf32> to vector<128x32xf32>
    %29 = arith.addf %27, %28 : vector<128x32xf32>
    %cst_14 = arith.constant 0.000000e+00 : f32
    %30 = vector.broadcast %cst_14 : f32 to vector<128x32xf32>
    %31 = arith.maximumf %29, %30 : vector<128x32xf32>
    %c0_15 = arith.constant 0 : index
    %c0_16 = arith.constant 0 : index
    %32 = vector.load %arg6[%c0_15, %c0_16] : memref<128x32xf32, #tpu.memory_space<vmem>>, vector<128x32xf32>
    tpu.vector_store %arg6[%c0_15, %c0_16], %31 {strides = array<i32>} : memref<128x32xf32, #tpu.memory_space<vmem>>, vector<128x32xf32>,
    return
  }
  func.func @transform_0(%arg0: i32) -> (i32, i32) {
    %c0_i32 = arith.constant 0 : i32
    %c0_i32_0 = arith.constant 0 : i32
    return %arg0, %c0_i32 : i32, i32
  }
  func.func @transform_1(%arg0: i32) -> (i32, i32) {
    %c0_i32 = arith.constant 0 : i32
    %c0_i32_0 = arith.constant 0 : i32
    %c0_i32_1 = arith.constant 0 : i32
    return %c0_i32, %c0_i32_0 : i32, i32
  }
  func.func @transform_2(%arg0: i32) -> (i32, i32) {
    %c0_i32 = arith.constant 0 : i32
    %c0_i32_0 = arith.constant 0 : i32
    %c0_i32_1 = arith.constant 0 : i32
    return %c0_i32, %c0_i32_0 : i32, i32
  }
  func.func @transform_3(%arg0: i32) -> (i32, i32) {
    %c0_i32 = arith.constant 0 : i32
    %c0_i32_0 = arith.constant 0 : i32
    %c0_i32_1 = arith.constant 0 : i32
    return %c0_i32, %c0_i32_0 : i32, i32
  }
  func.func @transform_4(%arg0: i32) -> (i32, i32) {
    %c0_i32 = arith.constant 0 : i32
    %c0_i32_0 = arith.constant 0 : i32
    %c0_i32_1 = arith.constant 0 : i32
    return %c0_i32, %c0_i32_0 : i32, i32
  }
  func.func @transform_5(%arg0: i32) -> (i32, i32) {
    %c0_i32 = arith.constant 0 : i32
    %c0_i32_0 = arith.constant 0 : i32
    return %arg0, %c0_i32 : i32, i32
  }
}

module attributes {stable_mosaic.version = 11 : i64} {
  func.func @_conv_ln_relu_kernel(%arg0: i32, %arg1: memref<128x288xf32, #tpu.memory_space<vmem>>, %arg2: memref<288x64xf32, #tpu.memory_space<vmem>>, %arg3: memref<1x64xf32, #tpu.memory_space<vmem>>, %arg4: memref<1x64xf32, #tpu.memory_space<vmem>>, %arg5: memref<1x64xf32, #tpu.memory_space<vmem>>, %arg6: memref<128x64xf32, #tpu.memory_space<vmem>>) attributes {dimension_semantics = [#tpu.dimension_semantics<parallel>], iteration_bounds = array<i64: 1>, scalar_prefetch = 0 : i64, scratch_operands = 0 : i64, tpu.core_type = #tpu.core_type<tc>, window_params = [{transform_indices = @transform_0, window_bounds = array<i64: 128, 288>}, {pipeline_mode = #tpu.pipeline_mode<synchronous>, transform_indices = @transform_1, window_bounds = array<i64: 288, 64>}, {pipeline_mode = #tpu.pipeline_mode<synchronous>, transform_indices = @transform_2, window_bounds = array<i64: 1, 64>}, {pipeline_mode = #tpu.pipeline_mode<synchronous>, transform_indices = @transform_3, window_bounds = array<i64: 1, 64>}, {pipeline_mode = #tpu.pipeline_mode<synchronous>, transform_indices = @transform_4, window_bounds = array<i64: 1, 64>}, {transform_indices = @transform_5, window_bounds = array<i64: 128, 64>}]} {
    %c0 = arith.constant 0 : index
    %c0_0 = arith.constant 0 : index
    %0 = vector.load %arg1[%c0, %c0_0] : memref<128x288xf32, #tpu.memory_space<vmem>>, vector<128x288xf32>
    %c0_1 = arith.constant 0 : index
    %c0_2 = arith.constant 0 : index
    %1 = vector.load %arg2[%c0_1, %c0_2] : memref<288x64xf32, #tpu.memory_space<vmem>>, vector<288x64xf32>
    %cst = arith.constant dense<0.000000e+00> : vector<128x64xf32>
    %2 = tpu.matmul %0, %1, %cst {dimension_numbers = #tpu.dot_dimension_numbers<[1], [0], [0], [1], [0, 0, 1, 1], [], []>} : vector<128x288xf32>, vector<288x64xf32>, vector<128x64xf32> -> vector<128x64xf32>
    %c0_3 = arith.constant 0 : index
    %c0_4 = arith.constant 0 : index
    %3 = vector.load %arg3[%c0_3, %c0_4] : memref<1x64xf32, #tpu.memory_space<vmem>>, vector<1x64xf32>
    %4 = vector.broadcast %3 : vector<1x64xf32> to vector<128x64xf32>
    %5 = arith.addf %2, %4 : vector<128x64xf32>
    %c0_5 = arith.constant 0 : index
    %c0_6 = arith.constant 0 : index
    %6 = vector.load %arg4[%c0_5, %c0_6] : memref<1x64xf32, #tpu.memory_space<vmem>>, vector<1x64xf32>
    %c0_7 = arith.constant 0 : index
    %c0_8 = arith.constant 0 : index
    %7 = vector.load %arg5[%c0_7, %c0_8] : memref<1x64xf32, #tpu.memory_space<vmem>>, vector<1x64xf32>
    %cst_9 = arith.constant dense<0.000000e+00> : vector<128xf32>
    %8 = vector.multi_reduction <add>, %5, %cst_9 [1] : vector<128x64xf32> to vector<128xf32>
    %9 = vector.shape_cast %8 : vector<128xf32> to vector<128x1xf32>
    %cst_10 = arith.constant 6.400000e+01 : f32
    %10 = vector.broadcast %cst_10 : f32 to vector<128x1xf32>
    %11 = arith.divf %9, %10 : vector<128x1xf32>
    %12 = vector.broadcast %11 : vector<128x1xf32> to vector<128x64xf32>
    %13 = arith.subf %5, %12 : vector<128x64xf32>
    %14 = arith.mulf %13, %13 : vector<128x64xf32>
    %cst_11 = arith.constant dense<0.000000e+00> : vector<128xf32>
    %15 = vector.multi_reduction <add>, %14, %cst_11 [1] : vector<128x64xf32> to vector<128xf32>
    %16 = vector.shape_cast %15 : vector<128xf32> to vector<128x1xf32>
    %cst_12 = arith.constant 6.400000e+01 : f32
    %17 = vector.broadcast %cst_12 : f32 to vector<128x1xf32>
    %18 = arith.divf %16, %17 : vector<128x1xf32>
    %19 = vector.broadcast %11 : vector<128x1xf32> to vector<128x64xf32>
    %20 = arith.subf %5, %19 : vector<128x64xf32>
    %cst_13 = arith.constant 9.99999974E-6 : f32
    %21 = vector.broadcast %cst_13 : f32 to vector<128x1xf32>
    %22 = arith.addf %18, %21 : vector<128x1xf32>
    %23 = math.rsqrt %22 : vector<128x1xf32>
    %24 = vector.broadcast %23 : vector<128x1xf32> to vector<128x64xf32>
    %25 = arith.mulf %20, %24 : vector<128x64xf32>
    %26 = vector.broadcast %6 : vector<1x64xf32> to vector<128x64xf32>
    %27 = arith.mulf %25, %26 : vector<128x64xf32>
    %28 = vector.broadcast %7 : vector<1x64xf32> to vector<128x64xf32>
    %29 = arith.addf %27, %28 : vector<128x64xf32>
    %cst_14 = arith.constant 0.000000e+00 : f32
    %30 = vector.broadcast %cst_14 : f32 to vector<128x64xf32>
    %31 = arith.maximumf %29, %30 : vector<128x64xf32>
    %c0_15 = arith.constant 0 : index
    %c0_16 = arith.constant 0 : index
    %32 = vector.load %arg6[%c0_15, %c0_16] : memref<128x64xf32, #tpu.memory_space<vmem>>, vector<128x64xf32>
    tpu.vector_store %arg6[%c0_15, %c0_16], %31 {strides = array<i32>} : memref<128x64xf32, #tpu.memory_space<vmem>>, vector<128x64xf32>,
    return
  }
  func.func @transform_0(%arg0: i32) -> (i32, i32) {
    %c0_i32 = arith.constant 0 : i32
    %c0_i32_0 = arith.constant 0 : i32
    return %arg0, %c0_i32 : i32, i32
  }
  func.func @transform_1(%arg0: i32) -> (i32, i32) {
    %c0_i32 = arith.constant 0 : i32
    %c0_i32_0 = arith.constant 0 : i32
    %c0_i32_1 = arith.constant 0 : i32
    return %c0_i32, %c0_i32_0 : i32, i32
  }
  func.func @transform_2(%arg0: i32) -> (i32, i32) {
    %c0_i32 = arith.constant 0 : i32
    %c0_i32_0 = arith.constant 0 : i32
    %c0_i32_1 = arith.constant 0 : i32
    return %c0_i32, %c0_i32_0 : i32, i32
  }
  func.func @transform_3(%arg0: i32) -> (i32, i32) {
    %c0_i32 = arith.constant 0 : i32
    %c0_i32_0 = arith.constant 0 : i32
    %c0_i32_1 = arith.constant 0 : i32
    return %c0_i32, %c0_i32_0 : i32, i32
  }
  func.func @transform_4(%arg0: i32) -> (i32, i32) {
    %c0_i32 = arith.constant 0 : i32
    %c0_i32_0 = arith.constant 0 : i32
    %c0_i32_1 = arith.constant 0 : i32
    return %c0_i32, %c0_i32_0 : i32, i32
  }
  func.func @transform_5(%arg0: i32) -> (i32, i32) {
    %c0_i32 = arith.constant 0 : i32
    %c0_i32_0 = arith.constant 0 : i32
    return %arg0, %c0_i32 : i32, i32
  }
}

module attributes {stable_mosaic.version = 11 : i64} {
  func.func @_encoder_kernel(%arg0: i32, %arg1: memref<8x1024xf32, #tpu.memory_space<vmem>>, %arg2: memref<1024x32xf32, #tpu.memory_space<vmem>>, %arg3: memref<1x32xf32, #tpu.memory_space<vmem>>, %arg4: memref<1x32xf32, #tpu.memory_space<vmem>>, %arg5: memref<8x32xf32, #tpu.memory_space<vmem>>, %arg6: memref<1x1x32xf32, #tpu.memory_space<vmem>>, %arg7: memref<1x1x32xf32, #tpu.memory_space<vmem>>, %arg8: memref<1x32x96xf32, #tpu.memory_space<vmem>>, %arg9: memref<1x32x32xf32, #tpu.memory_space<vmem>>, %arg10: memref<1x1x32xf32, #tpu.memory_space<vmem>>, %arg11: memref<1x1x32xf32, #tpu.memory_space<vmem>>, %arg12: memref<1x1x32xf32, #tpu.memory_space<vmem>>, %arg13: memref<1x32x128xf32, #tpu.memory_space<vmem>>, %arg14: memref<1x1x128xf32, #tpu.memory_space<vmem>>, %arg15: memref<1x128x32xf32, #tpu.memory_space<vmem>>, %arg16: memref<1x1x32xf32, #tpu.memory_space<vmem>>, %arg17: memref<1x32xf32, #tpu.memory_space<vmem>>, %arg18: memref<1x32xf32, #tpu.memory_space<vmem>>, %arg19: memref<2x8x32xf32, #tpu.memory_space<vmem>>, %arg20: memref<2x8x32xf32, #tpu.memory_space<vmem>>, %arg21: memref<16x32xf32, #tpu.memory_space<vmem>>) attributes {dimension_semantics = [#tpu.dimension_semantics<arbitrary>], iteration_bounds = array<i64: 2>, scalar_prefetch = 0 : i64, scratch_operands = 2 : i64, tpu.core_type = #tpu.core_type<tc>, window_params = [{pipeline_mode = #tpu.pipeline_mode<synchronous>, transform_indices = @transform_0, window_bounds = array<i64: 8, 1024>}, {pipeline_mode = #tpu.pipeline_mode<synchronous>, transform_indices = @transform_1, window_bounds = array<i64: 1024, 32>}, {pipeline_mode = #tpu.pipeline_mode<synchronous>, transform_indices = @transform_2, window_bounds = array<i64: 1, 32>}, {pipeline_mode = #tpu.pipeline_mode<synchronous>, transform_indices = @transform_3, window_bounds = array<i64: 1, 32>}, {pipeline_mode = #tpu.pipeline_mode<synchronous>, transform_indices = @transform_4, window_bounds = array<i64: 8, 32>}, {transform_indices = @transform_5, window_bounds = array<i64: 1, 1, 32>}, {transform_indices = @transform_6, window_bounds = array<i64: 1, 1, 32>}, {transform_indices = @transform_7, window_bounds = array<i64: 1, 32, 96>}, {transform_indices = @transform_8, window_bounds = array<i64: 1, 32, 32>}, {transform_indices = @transform_9, window_bounds = array<i64: 1, 1, 32>}, {transform_indices = @transform_10, window_bounds = array<i64: 1, 1, 32>}, {transform_indices = @transform_11, window_bounds = array<i64: 1, 1, 32>}, {transform_indices = @transform_12, window_bounds = array<i64: 1, 32, 128>}, {transform_indices = @transform_13, window_bounds = array<i64: 1, 1, 128>}, {transform_indices = @transform_14, window_bounds = array<i64: 1, 128, 32>}, {transform_indices = @transform_15, window_bounds = array<i64: 1, 1, 32>}, {pipeline_mode = #tpu.pipeline_mode<synchronous>, transform_indices = @transform_16, window_bounds = array<i64: 1, 32>}, {pipeline_mode = #tpu.pipeline_mode<synchronous>, transform_indices = @transform_17, window_bounds = array<i64: 1, 32>}, {pipeline_mode = #tpu.pipeline_mode<synchronous>, transform_indices = @transform_18, window_bounds = array<i64: 2, 8, 32>}]} {
    %c0_i32 = arith.constant 0 : i32
    %0 = arith.cmpi eq, %arg0, %c0_i32 : i32
    %1 = arith.extui %0 : i1 to i32
    %c0_i32_0 = arith.constant 0 : i32
    %2 = arith.cmpi ne, %1, %c0_i32_0 : i32
    scf.if %2 {
      %c0_81 = arith.constant 0 : index
      %c0_82 = arith.constant 0 : index
      %179 = vector.load %arg1[%c0_81, %c0_82] : memref<8x1024xf32, #tpu.memory_space<vmem>>, vector<8x1024xf32>
      %c0_83 = arith.constant 0 : index
      %c0_84 = arith.constant 0 : index
      %180 = vector.load %arg2[%c0_83, %c0_84] : memref<1024x32xf32, #tpu.memory_space<vmem>>, vector<1024x32xf32>
      %cst_85 = arith.constant dense<0.000000e+00> : vector<8x32xf32>
      %181 = tpu.matmul %179, %180, %cst_85 {dimension_numbers = #tpu.dot_dimension_numbers<[1], [0], [0], [1], [0, 0, 1, 1], [], []>} : vector<8x1024xf32>, vector<1024x32xf32>, vector<8x32xf32> -> vector<8x32xf32>
      %c0_86 = arith.constant 0 : index
      %c0_87 = arith.constant 0 : index
      %182 = vector.load %arg3[%c0_86, %c0_87] : memref<1x32xf32, #tpu.memory_space<vmem>>, vector<1x32xf32>
      %183 = vector.broadcast %182 : vector<1x32xf32> to vector<8x32xf32>
      %184 = arith.addf %181, %183 : vector<8x32xf32>
      %c0_88 = arith.constant 0 : index
      %c0_89 = arith.constant 0 : index
      %185 = vector.load %arg4[%c0_88, %c0_89] : memref<1x32xf32, #tpu.memory_space<vmem>>, vector<1x32xf32>
      %c0_90 = arith.constant 0 : index
      %c0_91 = arith.constant 0 : index
      %186 = vector.load %arg5[%c0_90, %c0_91] : memref<8x32xf32, #tpu.memory_space<vmem>>, vector<1x32xf32>
      %187 = arith.addf %185, %186 : vector<1x32xf32>
      %188 = vector.shape_cast %187 : vector<1x32xf32> to vector<1x1x32xf32>
      %189 = vector.shape_cast %188 : vector<1x1x32xf32> to vector<1x1x32xf32>
      %190 = vector.broadcast %189 : vector<1x1x32xf32> to vector<2x1x32xf32>
      %c0_92 = arith.constant 0 : index
      %c0_93 = arith.constant 0 : index
      %c0_94 = arith.constant 0 : index
      %191 = vector.load %arg20[%c0_92, %c0_93, %c0_94] : memref<2x8x32xf32, #tpu.memory_space<vmem>>, vector<2x1x32xf32>
      tpu.vector_store %arg20[%c0_92, %c0_93, %c0_94], %190 {strides = array<i32>} : memref<2x8x32xf32, #tpu.memory_space<vmem>>, vector<2x1x32xf32>,
      %192 = vector.shape_cast %184 : vector<8x32xf32> to vector<2x4x32xf32>
      %c1 = arith.constant 1 : index
      %c0_95 = arith.constant 0 : index
      %193 = vector.load %arg5[%c1, %c0_95] : memref<8x32xf32, #tpu.memory_space<vmem>>, vector<4x32xf32>
      %194 = vector.shape_cast %193 : vector<4x32xf32> to vector<1x4x32xf32>
      %195 = vector.broadcast %194 : vector<1x4x32xf32> to vector<2x4x32xf32>
      %196 = arith.addf %192, %195 : vector<2x4x32xf32>
      %c0_96 = arith.constant 0 : index
      %c1_97 = arith.constant 1 : index
      %c0_98 = arith.constant 0 : index
      %197 = vector.load %arg20[%c0_96, %c1_97, %c0_98] : memref<2x8x32xf32, #tpu.memory_space<vmem>>, vector<2x4x32xf32>
      tpu.vector_store %arg20[%c0_96, %c1_97, %c0_98], %196 {strides = array<i32>} : memref<2x8x32xf32, #tpu.memory_space<vmem>>, vector<2x4x32xf32>,
      %cst_99 = arith.constant 0.000000e+00 : f32
      %198 = vector.broadcast %cst_99 : f32 to vector<2x3x32xf32>
      %c0_100 = arith.constant 0 : index
      %c5 = arith.constant 5 : index
      %c0_101 = arith.constant 0 : index
      %199 = vector.load %arg20[%c0_100, %c5, %c0_101] : memref<2x8x32xf32, #tpu.memory_space<vmem>>, vector<2x3x32xf32>
      tpu.vector_store %arg20[%c0_100, %c5, %c0_101], %198 {strides = array<i32>} : memref<2x8x32xf32, #tpu.memory_space<vmem>>, vector<2x3x32xf32>,
    } else {
    }
    %c0 = arith.constant 0 : index
    %c0_1 = arith.constant 0 : index
    %c0_2 = arith.constant 0 : index
    %3 = vector.load %arg20[%c0, %c0_1, %c0_2] : memref<2x8x32xf32, #tpu.memory_space<vmem>>, vector<2x8x32xf32>
    %4 = vector.shape_cast %3 : vector<2x8x32xf32> to vector<16x32xf32>
    %c0_3 = arith.constant 0 : index
    %c0_4 = arith.constant 0 : index
    %c0_5 = arith.constant 0 : index
    %5 = vector.load %arg6[%c0_3, %c0_4, %c0_5] : memref<1x1x32xf32, #tpu.memory_space<vmem>>, vector<1x1x32xf32>
    %6 = vector.shape_cast %5 : vector<1x1x32xf32> to vector<1x32xf32>
    %c0_6 = arith.constant 0 : index
    %c0_7 = arith.constant 0 : index
    %c0_8 = arith.constant 0 : index
    %7 = vector.load %arg7[%c0_6, %c0_7, %c0_8] : memref<1x1x32xf32, #tpu.memory_space<vmem>>, vector<1x1x32xf32>
    %8 = vector.shape_cast %7 : vector<1x1x32xf32> to vector<1x32xf32>
    %cst = arith.constant dense<0.000000e+00> : vector<16xf32>
    %9 = vector.multi_reduction <add>, %4, %cst [1] : vector<16x32xf32> to vector<16xf32>
    %10 = vector.shape_cast %9 : vector<16xf32> to vector<16x1xf32>
    %cst_9 = arith.constant 3.200000e+01 : f32
    %11 = vector.broadcast %cst_9 : f32 to vector<16x1xf32>
    %12 = arith.divf %10, %11 : vector<16x1xf32>
    %13 = vector.broadcast %12 : vector<16x1xf32> to vector<16x32xf32>
    %14 = arith.subf %4, %13 : vector<16x32xf32>
    %15 = arith.mulf %14, %14 : vector<16x32xf32>
    %cst_10 = arith.constant dense<0.000000e+00> : vector<16xf32>
    %16 = vector.multi_reduction <add>, %15, %cst_10 [1] : vector<16x32xf32> to vector<16xf32>
    %17 = vector.shape_cast %16 : vector<16xf32> to vector<16x1xf32>
    %cst_11 = arith.constant 3.200000e+01 : f32
    %18 = vector.broadcast %cst_11 : f32 to vector<16x1xf32>
    %19 = arith.divf %17, %18 : vector<16x1xf32>
    %20 = vector.broadcast %12 : vector<16x1xf32> to vector<16x32xf32>
    %21 = arith.subf %4, %20 : vector<16x32xf32>
    %cst_12 = arith.constant 9.99999974E-6 : f32
    %22 = vector.broadcast %cst_12 : f32 to vector<16x1xf32>
    %23 = arith.addf %19, %22 : vector<16x1xf32>
    %24 = math.rsqrt %23 : vector<16x1xf32>
    %25 = vector.broadcast %24 : vector<16x1xf32> to vector<16x32xf32>
    %26 = arith.mulf %21, %25 : vector<16x32xf32>
    %27 = vector.broadcast %6 : vector<1x32xf32> to vector<16x32xf32>
    %28 = arith.mulf %26, %27 : vector<16x32xf32>
    %29 = vector.broadcast %8 : vector<1x32xf32> to vector<16x32xf32>
    %30 = arith.addf %28, %29 : vector<16x32xf32>
    %c0_13 = arith.constant 0 : index
    %c0_14 = arith.constant 0 : index
    %c0_15 = arith.constant 0 : index
    %31 = vector.load %arg8[%c0_13, %c0_14, %c0_15] : memref<1x32x96xf32, #tpu.memory_space<vmem>>, vector<1x32x96xf32>
    %32 = vector.shape_cast %31 : vector<1x32x96xf32> to vector<32x96xf32>
    %cst_16 = arith.constant dense<0.000000e+00> : vector<16x96xf32>
    %33 = tpu.matmul %30, %32, %cst_16 {dimension_numbers = #tpu.dot_dimension_numbers<[1], [0], [0], [1], [0, 0, 1, 1], [], []>} : vector<16x32xf32>, vector<32x96xf32>, vector<16x96xf32> -> vector<16x96xf32>
    %34 = vector.shape_cast %33 : vector<16x96xf32> to vector<2x8x96xf32>
    %35 = tpu.iota {dimensions = array<i32: 2>} : vector<1x8x8xi32>
    %c5_i32 = arith.constant 5 : i32
    %36 = vector.broadcast %c5_i32 : i32 to vector<1x8x8xi32>
    %37 = arith.cmpi slt, %35, %36 : vector<1x8x8xi32>
    %38 = vector.extract_strided_slice %34 {offsets = [0, 0, 0], sizes = [2, 8, 8], strides = [1, 1, 1]} : vector<2x8x96xf32> to vector<2x8x8xf32>
    %39 = vector.extract_strided_slice %34 {offsets = [0, 0, 32], sizes = [2, 8, 8], strides = [1, 1, 1]} : vector<2x8x96xf32> to vector<2x8x8xf32>
    %40 = vector.extract_strided_slice %34 {offsets = [0, 0, 64], sizes = [2, 8, 8], strides = [1, 1, 1]} : vector<2x8x96xf32> to vector<2x8x8xf32>
    "tpu.trace_start"() <{level = 10 : i32, message = "bqd,bkd->bqk"}> : () -> ()
    %cst_17 = arith.constant dense<0.000000e+00> : vector<2x8x8xf32>
    %41 = tpu.matmul %38, %39, %cst_17 {dimension_numbers = #tpu.dot_dimension_numbers<[2], [2], [1], [1], [0, 0, 0, 1, 1, 1], [0], [0]>} : vector<2x8x8xf32>, vector<2x8x8xf32>, vector<2x8x8xf32> -> vector<2x8x8xf32>
    %cst_18 = arith.constant -1.000000e+30 : f32
    "tpu.trace_stop"() : () -> ()
    %42 = vector.shape_cast %37 : vector<1x8x8xi1> to vector<1x8x8xi1>
    %43 = vector.broadcast %42 : vector<1x8x8xi1> to vector<2x8x8xi1>
    %44 = vector.broadcast %cst_18 : f32 to vector<2x8x8xf32>
    %45 = arith.select %43, %41, %44 : vector<2x8x8xi1>, vector<2x8x8xf32>
    %cst_19 = arith.constant dense<0xFF800000> : vector<2x8xf32>
    %46 = vector.multi_reduction <maximumf>, %45, %cst_19 [2] : vector<2x8x8xf32> to vector<2x8xf32>
    %47 = vector.shape_cast %46 : vector<2x8xf32> to vector<2x8x1xf32>
    %48 = vector.broadcast %47 : vector<2x8x1xf32> to vector<2x8x8xf32>
    %49 = arith.subf %45, %48 : vector<2x8x8xf32>
    %50 = math.exp %49 : vector<2x8x8xf32>
    %cst_20 = arith.constant dense<0.000000e+00> : vector<2x8xf32>
    %51 = vector.multi_reduction <add>, %50, %cst_20 [2] : vector<2x8x8xf32> to vector<2x8xf32>
    %52 = vector.shape_cast %51 : vector<2x8xf32> to vector<2x8x1xf32>
    %53 = tpu.reciprocal %52 {approx = true} : vector<2x8x1xf32> -> vector<2x8x1xf32>
    %54 = vector.broadcast %53 : vector<2x8x1xf32> to vector<2x8x8xf32>
    %55 = arith.mulf %50, %54 : vector<2x8x8xf32>
    "tpu.trace_start"() <{level = 10 : i32, message = "bqk,bkd->bqd"}> : () -> ()
    %cst_21 = arith.constant dense<0.000000e+00> : vector<2x8x8xf32>
    %56 = tpu.matmul %55, %40, %cst_21 {dimension_numbers = #tpu.dot_dimension_numbers<[2], [1], [1], [2], [0, 0, 0, 1, 1, 2], [0], [0]>} : vector<2x8x8xf32>, vector<2x8x8xf32>, vector<2x8x8xf32> -> vector<2x8x8xf32>
    "tpu.trace_stop"() : () -> ()
    %57 = vector.shape_cast %56 : vector<2x8x8xf32> to vector<16x8xf32>
    %c0_22 = arith.constant 0 : index
    %c0_23 = arith.constant 0 : index
    %58 = vector.load %arg21[%c0_22, %c0_23] : memref<16x32xf32, #tpu.memory_space<vmem>>, vector<16x8xf32>
    tpu.vector_store %arg21[%c0_22, %c0_23], %57 {strides = array<i32>} : memref<16x32xf32, #tpu.memory_space<vmem>>, vector<16x8xf32>,
    %59 = vector.extract_strided_slice %34 {offsets = [0, 0, 8], sizes = [2, 8, 8], strides = [1, 1, 1]} : vector<2x8x96xf32> to vector<2x8x8xf32>
    %60 = vector.extract_strided_slice %34 {offsets = [0, 0, 40], sizes = [2, 8, 8], strides = [1, 1, 1]} : vector<2x8x96xf32> to vector<2x8x8xf32>
    %61 = vector.extract_strided_slice %34 {offsets = [0, 0, 72], sizes = [2, 8, 8], strides = [1, 1, 1]} : vector<2x8x96xf32> to vector<2x8x8xf32>
    "tpu.trace_start"() <{level = 10 : i32, message = "bqd,bkd->bqk"}> : () -> ()
    %cst_24 = arith.constant dense<0.000000e+00> : vector<2x8x8xf32>
    %62 = tpu.matmul %59, %60, %cst_24 {dimension_numbers = #tpu.dot_dimension_numbers<[2], [2], [1], [1], [0, 0, 0, 1, 1, 1], [0], [0]>} : vector<2x8x8xf32>, vector<2x8x8xf32>, vector<2x8x8xf32> -> vector<2x8x8xf32>
    %cst_25 = arith.constant -1.000000e+30 : f32
    "tpu.trace_stop"() : () -> ()
    %63 = vector.shape_cast %37 : vector<1x8x8xi1> to vector<1x8x8xi1>
    %64 = vector.broadcast %63 : vector<1x8x8xi1> to vector<2x8x8xi1>
    %65 = vector.broadcast %cst_25 : f32 to vector<2x8x8xf32>
    %66 = arith.select %64, %62, %65 : vector<2x8x8xi1>, vector<2x8x8xf32>
    %cst_26 = arith.constant dense<0xFF800000> : vector<2x8xf32>
    %67 = vector.multi_reduction <maximumf>, %66, %cst_26 [2] : vector<2x8x8xf32> to vector<2x8xf32>
    %68 = vector.shape_cast %67 : vector<2x8xf32> to vector<2x8x1xf32>
    %69 = vector.broadcast %68 : vector<2x8x1xf32> to vector<2x8x8xf32>
    %70 = arith.subf %66, %69 : vector<2x8x8xf32>
    %71 = math.exp %70 : vector<2x8x8xf32>
    %cst_27 = arith.constant dense<0.000000e+00> : vector<2x8xf32>
    %72 = vector.multi_reduction <add>, %71, %cst_27 [2] : vector<2x8x8xf32> to vector<2x8xf32>
    %73 = vector.shape_cast %72 : vector<2x8xf32> to vector<2x8x1xf32>
    %74 = tpu.reciprocal %73 {approx = true} : vector<2x8x1xf32> -> vector<2x8x1xf32>
    %75 = vector.broadcast %74 : vector<2x8x1xf32> to vector<2x8x8xf32>
    %76 = arith.mulf %71, %75 : vector<2x8x8xf32>
    "tpu.trace_start"() <{level = 10 : i32, message = "bqk,bkd->bqd"}> : () -> ()
    %cst_28 = arith.constant dense<0.000000e+00> : vector<2x8x8xf32>
    %77 = tpu.matmul %76, %61, %cst_28 {dimension_numbers = #tpu.dot_dimension_numbers<[2], [1], [1], [2], [0, 0, 0, 1, 1, 2], [0], [0]>} : vector<2x8x8xf32>, vector<2x8x8xf32>, vector<2x8x8xf32> -> vector<2x8x8xf32>
    "tpu.trace_stop"() : () -> ()
    %78 = vector.shape_cast %77 : vector<2x8x8xf32> to vector<16x8xf32>
    %c0_29 = arith.constant 0 : index
    %c8 = arith.constant 8 : index
    %79 = vector.load %arg21[%c0_29, %c8] : memref<16x32xf32, #tpu.memory_space<vmem>>, vector<16x8xf32>
    tpu.vector_store %arg21[%c0_29, %c8], %78 {strides = array<i32>} : memref<16x32xf32, #tpu.memory_space<vmem>>, vector<16x8xf32>,
    %80 = vector.extract_strided_slice %34 {offsets = [0, 0, 16], sizes = [2, 8, 8], strides = [1, 1, 1]} : vector<2x8x96xf32> to vector<2x8x8xf32>
    %81 = vector.extract_strided_slice %34 {offsets = [0, 0, 48], sizes = [2, 8, 8], strides = [1, 1, 1]} : vector<2x8x96xf32> to vector<2x8x8xf32>
    %82 = vector.extract_strided_slice %34 {offsets = [0, 0, 80], sizes = [2, 8, 8], strides = [1, 1, 1]} : vector<2x8x96xf32> to vector<2x8x8xf32>
    "tpu.trace_start"() <{level = 10 : i32, message = "bqd,bkd->bqk"}> : () -> ()
    %cst_30 = arith.constant dense<0.000000e+00> : vector<2x8x8xf32>
    %83 = tpu.matmul %80, %81, %cst_30 {dimension_numbers = #tpu.dot_dimension_numbers<[2], [2], [1], [1], [0, 0, 0, 1, 1, 1], [0], [0]>} : vector<2x8x8xf32>, vector<2x8x8xf32>, vector<2x8x8xf32> -> vector<2x8x8xf32>
    %cst_31 = arith.constant -1.000000e+30 : f32
    "tpu.trace_stop"() : () -> ()
    %84 = vector.shape_cast %37 : vector<1x8x8xi1> to vector<1x8x8xi1>
    %85 = vector.broadcast %84 : vector<1x8x8xi1> to vector<2x8x8xi1>
    %86 = vector.broadcast %cst_31 : f32 to vector<2x8x8xf32>
    %87 = arith.select %85, %83, %86 : vector<2x8x8xi1>, vector<2x8x8xf32>
    %cst_32 = arith.constant dense<0xFF800000> : vector<2x8xf32>
    %88 = vector.multi_reduction <maximumf>, %87, %cst_32 [2] : vector<2x8x8xf32> to vector<2x8xf32>
    %89 = vector.shape_cast %88 : vector<2x8xf32> to vector<2x8x1xf32>
    %90 = vector.broadcast %89 : vector<2x8x1xf32> to vector<2x8x8xf32>
    %91 = arith.subf %87, %90 : vector<2x8x8xf32>
    %92 = math.exp %91 : vector<2x8x8xf32>
    %cst_33 = arith.constant dense<0.000000e+00> : vector<2x8xf32>
    %93 = vector.multi_reduction <add>, %92, %cst_33 [2] : vector<2x8x8xf32> to vector<2x8xf32>
    %94 = vector.shape_cast %93 : vector<2x8xf32> to vector<2x8x1xf32>
    %95 = tpu.reciprocal %94 {approx = true} : vector<2x8x1xf32> -> vector<2x8x1xf32>
    %96 = vector.broadcast %95 : vector<2x8x1xf32> to vector<2x8x8xf32>
    %97 = arith.mulf %92, %96 : vector<2x8x8xf32>
    "tpu.trace_start"() <{level = 10 : i32, message = "bqk,bkd->bqd"}> : () -> ()
    %cst_34 = arith.constant dense<0.000000e+00> : vector<2x8x8xf32>
    %98 = tpu.matmul %97, %82, %cst_34 {dimension_numbers = #tpu.dot_dimension_numbers<[2], [1], [1], [2], [0, 0, 0, 1, 1, 2], [0], [0]>} : vector<2x8x8xf32>, vector<2x8x8xf32>, vector<2x8x8xf32> -> vector<2x8x8xf32>
    "tpu.trace_stop"() : () -> ()
    %99 = vector.shape_cast %98 : vector<2x8x8xf32> to vector<16x8xf32>
    %c0_35 = arith.constant 0 : index
    %c16 = arith.constant 16 : index
    %100 = vector.load %arg21[%c0_35, %c16] : memref<16x32xf32, #tpu.memory_space<vmem>>, vector<16x8xf32>
    tpu.vector_store %arg21[%c0_35, %c16], %99 {strides = array<i32>} : memref<16x32xf32, #tpu.memory_space<vmem>>, vector<16x8xf32>,
    %101 = vector.extract_strided_slice %34 {offsets = [0, 0, 24], sizes = [2, 8, 8], strides = [1, 1, 1]} : vector<2x8x96xf32> to vector<2x8x8xf32>
    %102 = vector.extract_strided_slice %34 {offsets = [0, 0, 56], sizes = [2, 8, 8], strides = [1, 1, 1]} : vector<2x8x96xf32> to vector<2x8x8xf32>
    %103 = vector.extract_strided_slice %34 {offsets = [0, 0, 88], sizes = [2, 8, 8], strides = [1, 1, 1]} : vector<2x8x96xf32> to vector<2x8x8xf32>
    "tpu.trace_start"() <{level = 10 : i32, message = "bqd,bkd->bqk"}> : () -> ()
    %cst_36 = arith.constant dense<0.000000e+00> : vector<2x8x8xf32>
    %104 = tpu.matmul %101, %102, %cst_36 {dimension_numbers = #tpu.dot_dimension_numbers<[2], [2], [1], [1], [0, 0, 0, 1, 1, 1], [0], [0]>} : vector<2x8x8xf32>, vector<2x8x8xf32>, vector<2x8x8xf32> -> vector<2x8x8xf32>
    %cst_37 = arith.constant -1.000000e+30 : f32
    "tpu.trace_stop"() : () -> ()
    %105 = vector.shape_cast %37 : vector<1x8x8xi1> to vector<1x8x8xi1>
    %106 = vector.broadcast %105 : vector<1x8x8xi1> to vector<2x8x8xi1>
    %107 = vector.broadcast %cst_37 : f32 to vector<2x8x8xf32>
    %108 = arith.select %106, %104, %107 : vector<2x8x8xi1>, vector<2x8x8xf32>
    %cst_38 = arith.constant dense<0xFF800000> : vector<2x8xf32>
    %109 = vector.multi_reduction <maximumf>, %108, %cst_38 [2] : vector<2x8x8xf32> to vector<2x8xf32>
    %110 = vector.shape_cast %109 : vector<2x8xf32> to vector<2x8x1xf32>
    %111 = vector.broadcast %110 : vector<2x8x1xf32> to vector<2x8x8xf32>
    %112 = arith.subf %108, %111 : vector<2x8x8xf32>
    %113 = math.exp %112 : vector<2x8x8xf32>
    %cst_39 = arith.constant dense<0.000000e+00> : vector<2x8xf32>
    %114 = vector.multi_reduction <add>, %113, %cst_39 [2] : vector<2x8x8xf32> to vector<2x8xf32>
    %115 = vector.shape_cast %114 : vector<2x8xf32> to vector<2x8x1xf32>
    %116 = tpu.reciprocal %115 {approx = true} : vector<2x8x1xf32> -> vector<2x8x1xf32>
    %117 = vector.broadcast %116 : vector<2x8x1xf32> to vector<2x8x8xf32>
    %118 = arith.mulf %113, %117 : vector<2x8x8xf32>
    "tpu.trace_start"() <{level = 10 : i32, message = "bqk,bkd->bqd"}> : () -> ()
    %cst_40 = arith.constant dense<0.000000e+00> : vector<2x8x8xf32>
    %119 = tpu.matmul %118, %103, %cst_40 {dimension_numbers = #tpu.dot_dimension_numbers<[2], [1], [1], [2], [0, 0, 0, 1, 1, 2], [0], [0]>} : vector<2x8x8xf32>, vector<2x8x8xf32>, vector<2x8x8xf32> -> vector<2x8x8xf32>
    "tpu.trace_stop"() : () -> ()
    %120 = vector.shape_cast %119 : vector<2x8x8xf32> to vector<16x8xf32>
    %c0_41 = arith.constant 0 : index
    %c24 = arith.constant 24 : index
    %121 = vector.load %arg21[%c0_41, %c24] : memref<16x32xf32, #tpu.memory_space<vmem>>, vector<16x8xf32>
    tpu.vector_store %arg21[%c0_41, %c24], %120 {strides = array<i32>} : memref<16x32xf32, #tpu.memory_space<vmem>>, vector<16x8xf32>,
    %c0_42 = arith.constant 0 : index
    %c0_43 = arith.constant 0 : index
    %122 = vector.load %arg21[%c0_42, %c0_43] : memref<16x32xf32, #tpu.memory_space<vmem>>, vector<16x32xf32>
    %c0_44 = arith.constant 0 : index
    %c0_45 = arith.constant 0 : index
    %c0_46 = arith.constant 0 : index
    %123 = vector.load %arg9[%c0_44, %c0_45, %c0_46] : memref<1x32x32xf32, #tpu.memory_space<vmem>>, vector<1x32x32xf32>
    %124 = vector.shape_cast %123 : vector<1x32x32xf32> to vector<32x32xf32>
    %cst_47 = arith.constant dense<0.000000e+00> : vector<16x32xf32>
    %125 = tpu.matmul %122, %124, %cst_47 {dimension_numbers = #tpu.dot_dimension_numbers<[1], [0], [0], [1], [0, 0, 1, 1], [], []>} : vector<16x32xf32>, vector<32x32xf32>, vector<16x32xf32> -> vector<16x32xf32>
    %c0_48 = arith.constant 0 : index
    %c0_49 = arith.constant 0 : index
    %c0_50 = arith.constant 0 : index
    %126 = vector.load %arg10[%c0_48, %c0_49, %c0_50] : memref<1x1x32xf32, #tpu.memory_space<vmem>>, vector<1x1x32xf32>
    %127 = vector.shape_cast %126 : vector<1x1x32xf32> to vector<1x32xf32>
    %128 = vector.broadcast %127 : vector<1x32xf32> to vector<16x32xf32>
    %129 = arith.addf %125, %128 : vector<16x32xf32>
    %130 = arith.addf %4, %129 : vector<16x32xf32>
    %c0_51 = arith.constant 0 : index
    %c0_52 = arith.constant 0 : index
    %c0_53 = arith.constant 0 : index
    %131 = vector.load %arg11[%c0_51, %c0_52, %c0_53] : memref<1x1x32xf32, #tpu.memory_space<vmem>>, vector<1x1x32xf32>
    %132 = vector.shape_cast %131 : vector<1x1x32xf32> to vector<1x32xf32>
    %c0_54 = arith.constant 0 : index
    %c0_55 = arith.constant 0 : index
    %c0_56 = arith.constant 0 : index
    %133 = vector.load %arg12[%c0_54, %c0_55, %c0_56] : memref<1x1x32xf32, #tpu.memory_space<vmem>>, vector<1x1x32xf32>
    %134 = vector.shape_cast %133 : vector<1x1x32xf32> to vector<1x32xf32>
    %cst_57 = arith.constant dense<0.000000e+00> : vector<16xf32>
    %135 = vector.multi_reduction <add>, %130, %cst_57 [1] : vector<16x32xf32> to vector<16xf32>
    %136 = vector.shape_cast %135 : vector<16xf32> to vector<16x1xf32>
    %cst_58 = arith.constant 3.200000e+01 : f32
    %137 = vector.broadcast %cst_58 : f32 to vector<16x1xf32>
    %138 = arith.divf %136, %137 : vector<16x1xf32>
    %139 = vector.broadcast %138 : vector<16x1xf32> to vector<16x32xf32>
    %140 = arith.subf %130, %139 : vector<16x32xf32>
    %141 = arith.mulf %140, %140 : vector<16x32xf32>
    %cst_59 = arith.constant dense<0.000000e+00> : vector<16xf32>
    %142 = vector.multi_reduction <add>, %141, %cst_59 [1] : vector<16x32xf32> to vector<16xf32>
    %143 = vector.shape_cast %142 : vector<16xf32> to vector<16x1xf32>
    %cst_60 = arith.constant 3.200000e+01 : f32
    %144 = vector.broadcast %cst_60 : f32 to vector<16x1xf32>
    %145 = arith.divf %143, %144 : vector<16x1xf32>
    %146 = vector.broadcast %138 : vector<16x1xf32> to vector<16x32xf32>
    %147 = arith.subf %130, %146 : vector<16x32xf32>
    %cst_61 = arith.constant 9.99999974E-6 : f32
    %148 = vector.broadcast %cst_61 : f32 to vector<16x1xf32>
    %149 = arith.addf %145, %148 : vector<16x1xf32>
    %150 = math.rsqrt %149 : vector<16x1xf32>
    %151 = vector.broadcast %150 : vector<16x1xf32> to vector<16x32xf32>
    %152 = arith.mulf %147, %151 : vector<16x32xf32>
    %153 = vector.broadcast %132 : vector<1x32xf32> to vector<16x32xf32>
    %154 = arith.mulf %152, %153 : vector<16x32xf32>
    %155 = vector.broadcast %134 : vector<1x32xf32> to vector<16x32xf32>
    %156 = arith.addf %154, %155 : vector<16x32xf32>
    %c0_62 = arith.constant 0 : index
    %c0_63 = arith.constant 0 : index
    %c0_64 = arith.constant 0 : index
    %157 = vector.load %arg13[%c0_62, %c0_63, %c0_64] : memref<1x32x128xf32, #tpu.memory_space<vmem>>, vector<1x32x128xf32>
    %158 = vector.shape_cast %157 : vector<1x32x128xf32> to vector<32x128xf32>
    %cst_65 = arith.constant dense<0.000000e+00> : vector<16x128xf32>
    %159 = tpu.matmul %156, %158, %cst_65 {dimension_numbers = #tpu.dot_dimension_numbers<[1], [0], [0], [1], [0, 0, 1, 1], [], []>} : vector<16x32xf32>, vector<32x128xf32>, vector<16x128xf32> -> vector<16x128xf32>
    %c0_66 = arith.constant 0 : index
    %c0_67 = arith.constant 0 : index
    %c0_68 = arith.constant 0 : index
    %160 = vector.load %arg14[%c0_66, %c0_67, %c0_68] : memref<1x1x128xf32, #tpu.memory_space<vmem>>, vector<1x1x128xf32>
    %161 = vector.shape_cast %160 : vector<1x1x128xf32> to vector<1x128xf32>
    %162 = vector.broadcast %161 : vector<1x128xf32> to vector<16x128xf32>
    %163 = arith.addf %159, %162 : vector<16x128xf32>
    %cst_69 = arith.constant 0.000000e+00 : f32
    %164 = vector.broadcast %cst_69 : f32 to vector<16x128xf32>
    %165 = arith.maximumf %163, %164 : vector<16x128xf32>
    %c0_70 = arith.constant 0 : index
    %c0_71 = arith.constant 0 : index
    %c0_72 = arith.constant 0 : index
    %166 = vector.load %arg15[%c0_70, %c0_71, %c0_72] : memref<1x128x32xf32, #tpu.memory_space<vmem>>, vector<1x128x32xf32>
    %167 = vector.shape_cast %166 : vector<1x128x32xf32> to vector<128x32xf32>
    %cst_73 = arith.constant dense<0.000000e+00> : vector<16x32xf32>
    %168 = tpu.matmul %165, %167, %cst_73 {dimension_numbers = #tpu.dot_dimension_numbers<[1], [0], [0], [1], [0, 0, 1, 1], [], []>} : vector<16x128xf32>, vector<128x32xf32>, vector<16x32xf32> -> vector<16x32xf32>
    %c0_74 = arith.constant 0 : index
    %c0_75 = arith.constant 0 : index
    %c0_76 = arith.constant 0 : index
    %169 = vector.load %arg16[%c0_74, %c0_75, %c0_76] : memref<1x1x32xf32, #tpu.memory_space<vmem>>, vector<1x1x32xf32>
    %170 = vector.shape_cast %169 : vector<1x1x32xf32> to vector<1x32xf32>
    %171 = vector.broadcast %170 : vector<1x32xf32> to vector<16x32xf32>
    %172 = arith.addf %168, %171 : vector<16x32xf32>
    %173 = arith.addf %130, %172 : vector<16x32xf32>
    %174 = vector.shape_cast %173 : vector<16x32xf32> to vector<2x8x32xf32>
    %c0_77 = arith.constant 0 : index
    %c0_78 = arith.constant 0 : index
    %c0_79 = arith.constant 0 : index
    %175 = vector.load %arg20[%c0_77, %c0_78, %c0_79] : memref<2x8x32xf32, #tpu.memory_space<vmem>>, vector<2x8x32xf32>
    tpu.vector_store %arg20[%c0_77, %c0_78, %c0_79], %174 {strides = array<i32>} : memref<2x8x32xf32, #tpu.memory_space<vmem>>, vector<2x8x32xf32>,
    %c1_i32 = arith.constant 1 : i32
    %176 = arith.cmpi eq, %arg0, %c1_i32 : i32
    %177 = arith.extui %176 : i1 to i32
    %c0_i32_80 = arith.constant 0 : i32
    %178 = arith.cmpi ne, %177, %c0_i32_80 : i32
    scf.if %178 {
      %c0_81 = arith.constant 0 : index
      %c0_82 = arith.constant 0 : index
      %179 = vector.load %arg17[%c0_81, %c0_82] : memref<1x32xf32, #tpu.memory_space<vmem>>, vector<1x32xf32>
      %c0_83 = arith.constant 0 : index
      %c0_84 = arith.constant 0 : index
      %180 = vector.load %arg18[%c0_83, %c0_84] : memref<1x32xf32, #tpu.memory_space<vmem>>, vector<1x32xf32>
      %cst_85 = arith.constant dense<0.000000e+00> : vector<16xf32>
      %181 = vector.multi_reduction <add>, %173, %cst_85 [1] : vector<16x32xf32> to vector<16xf32>
      %182 = vector.shape_cast %181 : vector<16xf32> to vector<16x1xf32>
      %cst_86 = arith.constant 3.200000e+01 : f32
      %183 = vector.broadcast %cst_86 : f32 to vector<16x1xf32>
      %184 = arith.divf %182, %183 : vector<16x1xf32>
      %185 = vector.broadcast %184 : vector<16x1xf32> to vector<16x32xf32>
      %186 = arith.subf %173, %185 : vector<16x32xf32>
      %187 = arith.mulf %186, %186 : vector<16x32xf32>
      %cst_87 = arith.constant dense<0.000000e+00> : vector<16xf32>
      %188 = vector.multi_reduction <add>, %187, %cst_87 [1] : vector<16x32xf32> to vector<16xf32>
      %189 = vector.shape_cast %188 : vector<16xf32> to vector<16x1xf32>
      %cst_88 = arith.constant 3.200000e+01 : f32
      %190 = vector.broadcast %cst_88 : f32 to vector<16x1xf32>
      %191 = arith.divf %189, %190 : vector<16x1xf32>
      %192 = vector.broadcast %184 : vector<16x1xf32> to vector<16x32xf32>
      %193 = arith.subf %173, %192 : vector<16x32xf32>
      %cst_89 = arith.constant 9.99999974E-6 : f32
      %194 = vector.broadcast %cst_89 : f32 to vector<16x1xf32>
      %195 = arith.addf %191, %194 : vector<16x1xf32>
      %196 = math.rsqrt %195 : vector<16x1xf32>
      %197 = vector.broadcast %196 : vector<16x1xf32> to vector<16x32xf32>
      %198 = arith.mulf %193, %197 : vector<16x32xf32>
      %199 = vector.broadcast %179 : vector<1x32xf32> to vector<16x32xf32>
      %200 = arith.mulf %198, %199 : vector<16x32xf32>
      %201 = vector.broadcast %180 : vector<1x32xf32> to vector<16x32xf32>
      %202 = arith.addf %200, %201 : vector<16x32xf32>
      %203 = vector.shape_cast %202 : vector<16x32xf32> to vector<2x8x32xf32>
      %c0_90 = arith.constant 0 : index
      %c0_91 = arith.constant 0 : index
      %c0_92 = arith.constant 0 : index
      %204 = vector.load %arg19[%c0_90, %c0_91, %c0_92] : memref<2x8x32xf32, #tpu.memory_space<vmem>>, vector<2x8x32xf32>
      tpu.vector_store %arg19[%c0_90, %c0_91, %c0_92], %203 {strides = array<i32>} : memref<2x8x32xf32, #tpu.memory_space<vmem>>, vector<2x8x32xf32>,
    } else {
    }
    return
  }
  func.func @transform_0(%arg0: i32) -> (i32, i32) {
    %c0_i32 = arith.constant 0 : i32
    %c0_i32_0 = arith.constant 0 : i32
    %c0_i32_1 = arith.constant 0 : i32
    return %c0_i32, %c0_i32_0 : i32, i32
  }
  func.func @transform_1(%arg0: i32) -> (i32, i32) {
    %c0_i32 = arith.constant 0 : i32
    %c0_i32_0 = arith.constant 0 : i32
    %c0_i32_1 = arith.constant 0 : i32
    return %c0_i32, %c0_i32_0 : i32, i32
  }
  func.func @transform_2(%arg0: i32) -> (i32, i32) {
    %c0_i32 = arith.constant 0 : i32
    %c0_i32_0 = arith.constant 0 : i32
    %c0_i32_1 = arith.constant 0 : i32
    return %c0_i32, %c0_i32_0 : i32, i32
  }
  func.func @transform_3(%arg0: i32) -> (i32, i32) {
    %c0_i32 = arith.constant 0 : i32
    %c0_i32_0 = arith.constant 0 : i32
    %c0_i32_1 = arith.constant 0 : i32
    return %c0_i32, %c0_i32_0 : i32, i32
  }
  func.func @transform_4(%arg0: i32) -> (i32, i32) {
    %c0_i32 = arith.constant 0 : i32
    %c0_i32_0 = arith.constant 0 : i32
    %c0_i32_1 = arith.constant 0 : i32
    return %c0_i32, %c0_i32_0 : i32, i32
  }
  func.func @transform_5(%arg0: i32) -> (i32, i32, i32) {
    %c0_i32 = arith.constant 0 : i32
    %c0_i32_0 = arith.constant 0 : i32
    %c0_i32_1 = arith.constant 0 : i32
    return %arg0, %c0_i32, %c0_i32_0 : i32, i32, i32
  }
  func.func @transform_6(%arg0: i32) -> (i32, i32, i32) {
    %c0_i32 = arith.constant 0 : i32
    %c0_i32_0 = arith.constant 0 : i32
    %c0_i32_1 = arith.constant 0 : i32
    return %arg0, %c0_i32, %c0_i32_0 : i32, i32, i32
  }
  func.func @transform_7(%arg0: i32) -> (i32, i32, i32) {
    %c0_i32 = arith.constant 0 : i32
    %c0_i32_0 = arith.constant 0 : i32
    %c0_i32_1 = arith.constant 0 : i32
    return %arg0, %c0_i32, %c0_i32_0 : i32, i32, i32
  }
  func.func @transform_8(%arg0: i32) -> (i32, i32, i32) {
    %c0_i32 = arith.constant 0 : i32
    %c0_i32_0 = arith.constant 0 : i32
    %c0_i32_1 = arith.constant 0 : i32
    return %arg0, %c0_i32, %c0_i32_0 : i32, i32, i32
  }
  func.func @transform_9(%arg0: i32) -> (i32, i32, i32) {
    %c0_i32 = arith.constant 0 : i32
    %c0_i32_0 = arith.constant 0 : i32
    %c0_i32_1 = arith.constant 0 : i32
    return %arg0, %c0_i32, %c0_i32_0 : i32, i32, i32
  }
  func.func @transform_10(%arg0: i32) -> (i32, i32, i32) {
    %c0_i32 = arith.constant 0 : i32
    %c0_i32_0 = arith.constant 0 : i32
    %c0_i32_1 = arith.constant 0 : i32
    return %arg0, %c0_i32, %c0_i32_0 : i32, i32, i32
  }
  func.func @transform_11(%arg0: i32) -> (i32, i32, i32) {
    %c0_i32 = arith.constant 0 : i32
    %c0_i32_0 = arith.constant 0 : i32
    %c0_i32_1 = arith.constant 0 : i32
    return %arg0, %c0_i32, %c0_i32_0 : i32, i32, i32
  }
  func.func @transform_12(%arg0: i32) -> (i32, i32, i32) {
    %c0_i32 = arith.constant 0 : i32
    %c0_i32_0 = arith.constant 0 : i32
    %c0_i32_1 = arith.constant 0 : i32
    return %arg0, %c0_i32, %c0_i32_0 : i32, i32, i32
  }
  func.func @transform_13(%arg0: i32) -> (i32, i32, i32) {
    %c0_i32 = arith.constant 0 : i32
    %c0_i32_0 = arith.constant 0 : i32
    %c0_i32_1 = arith.constant 0 : i32
    return %arg0, %c0_i32, %c0_i32_0 : i32, i32, i32
  }
  func.func @transform_14(%arg0: i32) -> (i32, i32, i32) {
    %c0_i32 = arith.constant 0 : i32
    %c0_i32_0 = arith.constant 0 : i32
    %c0_i32_1 = arith.constant 0 : i32
    return %arg0, %c0_i32, %c0_i32_0 : i32, i32, i32
  }
  func.func @transform_15(%arg0: i32) -> (i32, i32, i32) {
    %c0_i32 = arith.constant 0 : i32
    %c0_i32_0 = arith.constant 0 : i32
    %c0_i32_1 = arith.constant 0 : i32
    return %arg0, %c0_i32, %c0_i32_0 : i32, i32, i32
  }
  func.func @transform_16(%arg0: i32) -> (i32, i32) {
    %c0_i32 = arith.constant 0 : i32
    %c0_i32_0 = arith.constant 0 : i32
    %c0_i32_1 = arith.constant 0 : i32
    return %c0_i32, %c0_i32_0 : i32, i32
  }
  func.func @transform_17(%arg0: i32) -> (i32, i32) {
    %c0_i32 = arith.constant 0 : i32
    %c0_i32_0 = arith.constant 0 : i32
    %c0_i32_1 = arith.constant 0 : i32
    return %c0_i32, %c0_i32_0 : i32, i32
  }
  func.func @transform_18(%arg0: i32) -> (i32, i32, i32) {
    %c0_i32 = arith.constant 0 : i32
    %c0_i32_0 = arith.constant 0 : i32
    %c0_i32_1 = arith.constant 0 : i32
    %c0_i32_2 = arith.constant 0 : i32
    return %c0_i32, %c0_i32_0, %c0_i32_1 : i32, i32, i32
  }
}

</mosaic_0001>

<llo_original>
// kernel: visual_encoder_forward.3
$region0: #{visual_encoder_forward.3}
  #allocation0 [shape = 'u32[]', space=smem, size = 0x4, offset = 0x4, fixed_abs, tag = 'smem constant byte address 0x4 - core index']
  #allocation1 [shape = 'u32[72,128]{1,0:T(1,128)}', space=vmem, size = 0x9000, scoped, tag = 'internal scratch']
  %s0 = inlined_call_operand.vmem [shape: f32[128,152], index: 0, kind: input, shape index: {}]
  %s1 = inlined_call_operand.vmem [shape: f32[152,32], index: 1, kind: input, shape index: {}]
  %s2 = inlined_call_operand.vmem [shape: f32[1,32], index: 2, kind: input, shape index: {}]
  %s3 = inlined_call_operand.vmem [shape: f32[1,32], index: 3, kind: input, shape index: {}]
  %s4 = inlined_call_operand.vmem [shape: f32[1,32], index: 4, kind: input, shape index: {}]
  %s5 = inlined_call_operand.vmem [shape: f32[128,32], index: 5, kind: output, shape index: {}]
  %s6 = sld [smem:[#allocation0]]
  $region30: #{visual_encoder_forward.3} parent=0
    _
  %s8 = ssub.s32 1, %s6
  %s9 = scalar_select 0, %s8, %s6
  // Predicated region
  $region2: #{visual_encoder_forward.3} parent=0 // pred_check
    _
  $region3: #{visual_encoder_forward.3} parent=0 // pred_check_branch
    %11 = sbr.rel (0) target = $region5
  $region4: #{visual_encoder_forward.3} parent=0 // pred_region
    _
  $region5: #{visual_encoder_forward.3} parent=0 // pred_fallthru
    _
  // Predicated region
  $region6: #{visual_encoder_forward.3} parent=0 // pred_check
    _
  $region7: #{visual_encoder_forward.3} parent=0 // pred_check_branch
    %13 = sbr.rel (0) target = $region9
  $region8: #{visual_encoder_forward.3} parent=0 // pred_region
    _
  $region9: #{visual_encoder_forward.3} parent=0 // pred_fallthru
    _
  // Predicated region
  $region10: #{visual_encoder_forward.3} parent=0 // pred_check
    _
  $region11: #{visual_encoder_forward.3} parent=0 // pred_check_branch
    %15 = sbr.rel (0) target = $region13
  $region12: #{visual_encoder_forward.3} parent=0 // pred_region
    _
  $region13: #{visual_encoder_forward.3} parent=0 // pred_fallthru
    _
  // Predicated region
  $region14: #{visual_encoder_forward.3} parent=0 // pred_check
    _
  $region15: #{visual_encoder_forward.3} parent=0 // pred_check_branch
    %17 = sbr.rel (0) target = $region17
  $region16: #{visual_encoder_forward.3} parent=0 // pred_region
    _
  $region17: #{visual_encoder_forward.3} parent=0 // pred_fallthru
    _
  // Predicated region
  $region18: #{visual_encoder_forward.3} parent=0 // pred_check
    _
  $region19: #{visual_encoder_forward.3} parent=0 // pred_check_branch
    %19 = sbr.rel (0) target = $region21
  $region20: #{visual_encoder_forward.3} parent=0 // pred_region
    _
  $region21: #{visual_encoder_forward.3} parent=0 // pred_fallthru
    _
  %v20 = vld [vmem:[%s0] sm:$0xff]
  %v21 = vld [vmem:[%s0 + $0x8] sm:$0xff]
  %v22 = vld [vmem:[%s0 + $0x10] sm:$0xff]
  %v23 = vld [vmem:[%s0 + $0x18] sm:$0xff]
  %v24 = vld [vmem:[%s0 + $0x20] sm:$0xff]
  %v25 = vld [vmem:[%s0 + $0x28] sm:$0xff]
  %v26 = vld [vmem:[%s0 + $0x30] sm:$0xff]
  %v27 = vld [vmem:[%s0 + $0x38] sm:$0xff]
  %v28 = vld [vmem:[%s0 + $0x40] sm:$0xff]
  %v29 = vld [vmem:[%s0 + $0x48] sm:$0xff]
  %v30 = vld [vmem:[%s0 + $0x50] sm:$0xff]
  %v31 = vld [vmem:[%s0 + $0x58] sm:$0xff]
  %v32 = vld [vmem:[%s0 + $0x60] sm:$0xff]
  %v33 = vld [vmem:[%s0 + $0x68] sm:$0xff]
  %v34 = vld [vmem:[%s0 + $0x70] sm:$0xff]
  %v35 = vld [vmem:[%s0 + $0x78] sm:$0xff]
  %v36 = vld [vmem:[%s0 + $0x80] sm:$0xff]
  %v37 = vld [vmem:[%s0 + $0x88] sm:$0xff]
  %v38 = vld [vmem:[%s0 + $0x90] sm:$0xff]
  %v39 = vld [vmem:[%s0 + $0x98] sm:$0xff]
  %v40 = vld [vmem:[%s0 + $0xa0] sm:$0xff]
  %v41 = vld [vmem:[%s0 + $0xa8] sm:$0xff]
  %v42 = vld [vmem:[%s0 + $0xb0] sm:$0xff]
  %v43 = vld [vmem:[%s0 + $0xb8] sm:$0xff]
  %v44 = vld [vmem:[%s0 + $0xc0] sm:$0xff]
  %v45 = vld [vmem:[%s0 + $0xc8] sm:$0xff]
  %v46 = vld [vmem:[%s0 + $0xd0] sm:$0xff]
  %v47 = vld [vmem:[%s0 + $0xd8] sm:$0xff]
  %v48 = vld [vmem:[%s0 + $0xe0] sm:$0xff]
  %v49 = vld [vmem:[%s0 + $0xe8] sm:$0xff]
  %v50 = vld [vmem:[%s0 + $0xf0] sm:$0xff]
  %v51 = vld [vmem:[%s0 + $0xf8] sm:$0xff]
  %v52 = vld [vmem:[%s1] sm:$0xff]
  %v53 = vld [vmem:[%s1 + $0x8] sm:$0xff]
  %v54 = vld [vmem:[%s1 + $0x10] sm:$0xff]
  %v55 = vld [vmem:[%s1 + $0x18] sm:$0xff]
  %v56 = vld [vmem:[%s1 + $0x20] sm:$0xff]
  %v57 = vld [vmem:[%s1 + $0x28] sm:$0xff]
  %v58 = vld [vmem:[%s1 + $0x30] sm:$0xff]
  %v59 = vld [vmem:[%s1 + $0x38] sm:$0xff]
  %v60 = vld [vmem:[%s1 + $0x40] sm:$0xff]
  %v61 = vld [vmem:[%s1 + $0x48] sm:$0xff]
  %v62 = vld [vmem:[%s1 + $0x50] sm:$0xff]
  %v63 = vld [vmem:[%s1 + $0x58] sm:$0xff]
  %v64 = vld [vmem:[%s1 + $0x60] sm:$0xff]
  %v65 = vld [vmem:[%s1 + $0x68] sm:$0xff]
  %v66 = vld [vmem:[%s1 + $0x70] sm:$0xff]
  %v67 = vld [vmem:[%s1 + $0x78] sm:$0xff]
  %v68 = vld [vmem:[%s1 + $0x80] sm:$0xff]
  %v69 = vld [vmem:[%s1 + $0x88] sm:$0xff]
  %v70 = vld [vmem:[%s1 + $0x90] sm:$0xff]
  %v71 = vld [vmem:[%s2] sm:$0x1]
  %v73 = vperm.slane %v71, 0
  %vm75 = vcmask 195584
  %v77 = vsel %vm75, %v21, 0
  %v80 = vsel %vm75, %v23, 0
  %v83 = vsel %vm75, %v25, 0
  %v86 = vsel %vm75, %v27, 0
  %v89 = vsel %vm75, %v29, 0
  %v92 = vsel %vm75, %v31, 0
  %v95 = vsel %vm75, %v33, 0
  %v98 = vsel %vm75, %v35, 0
  %v101 = vsel %vm75, %v37, 0
  %v104 = vsel %vm75, %v39, 0
  %v107 = vsel %vm75, %v41, 0
  %v110 = vsel %vm75, %v43, 0
  %v113 = vsel %vm75, %v45, 0
  %v116 = vsel %vm75, %v47, 0
  %v119 = vsel %vm75, %v49, 0
  %v122 = vsel %vm75, %v51, 0
  %124 = vmatpush.msra.mxu0 %v67
  %125 = vmatpush.msra.mxu0 %v66
  %126 = vmatpush.msra.mxu0 %v65
  %127 = vmatpush.msra.mxu0 %v64
  %128 = vmatpush.msra.mxu0 %v63
  %129 = vmatpush.msra.mxu0 %v62
  %130 = vmatpush.msra.mxu0 %v61
  %131 = vmatpush.msra.mxu0 %v60
  %132 = vmatpush.msra.mxu0 %v59
  %133 = vmatpush.msra.mxu0 %v58
  %134 = vmatpush.msra.mxu0 %v57
  %135 = vmatpush.msra.mxu0 %v56
  %136 = vmatpush.msra.mxu0 %v55
  %137 = vmatpush.msra.mxu0 %v54
  %138 = vmatpush.msra.mxu0 %v53
  %139 = vmatpush.msra.mxu0 %v52
  %140 = vmatmul.f32.gmra.mxu0 %v20
  %v141 = vpop.f32.mrf.mxu0
  %v142 = vadd.f32 %v73, %v141
  %143 = vmatmul.f32.gmra.mxu0 %v22
  %v144 = vpop.f32.mrf.mxu0
  %v145 = vadd.f32 %v73, %v144
  %146 = vmatmul.f32.gmra.mxu0 %v24
  %v147 = vpop.f32.mrf.mxu0
  %v148 = vadd.f32 %v73, %v147
  %149 = vmatmul.f32.gmra.mxu0 %v26
  %v150 = vpop.f32.mrf.mxu0
  %v151 = vadd.f32 %v73, %v150
  %152 = vmatmul.f32.gmra.mxu0 %v28
  %v153 = vpop.f32.mrf.mxu0
  %v154 = vadd.f32 %v73, %v153
  %155 = vmatmul.f32.gmra.mxu0 %v30
  %v156 = vpop.f32.mrf.mxu0
  %v157 = vadd.f32 %v73, %v156
  %158 = vmatmul.f32.gmra.mxu0 %v32
  %v159 = vpop.f32.mrf.mxu0
  %v160 = vadd.f32 %v73, %v159
  %161 = vmatmul.f32.gmra.mxu0 %v34
  %v162 = vpop.f32.mrf.mxu0
  %v163 = vadd.f32 %v73, %v162
  %164 = vmatmul.f32.gmra.mxu0 %v36
  %v165 = vpop.f32.mrf.mxu0
  %v166 = vadd.f32 %v73, %v165
  %167 = vmatmul.f32.gmra.mxu0 %v38
  %v168 = vpop.f32.mrf.mxu0
  %v169 = vadd.f32 %v73, %v168
  %170 = vmatmul.f32.gmra.mxu0 %v40
  %v171 = vpop.f32.mrf.mxu0
  %v172 = vadd.f32 %v73, %v171
  %173 = vmatmul.f32.gmra.mxu0 %v42
  %v174 = vpop.f32.mrf.mxu0
  %v175 = vadd.f32 %v73, %v174
  %176 = vmatmul.f32.gmra.mxu0 %v44
  %v177 = vpop.f32.mrf.mxu0
  %v178 = vadd.f32 %v73, %v177
  %179 = vmatmul.f32.gmra.mxu0 %v46
  %v180 = vpop.f32.mrf.mxu0
  %v181 = vadd.f32 %v73, %v180
  %182 = vmatmul.f32.gmra.mxu0 %v48
  %v183 = vpop.f32.mrf.mxu0
  %v184 = vadd.f32 %v73, %v183
  %185 = vmatmul.f32.gmra.mxu0 %v50
  %v186 = vpop.f32.mrf.mxu0
  %v187 = vadd.f32 %v73, %v186
  %188 = vdwg.mxu0
  %189 = vmatpush.msra.mxu0 0.0
  %190 = vmatpush.msra.mxu0 0.0
  %191 = vmatpush.msra.mxu0 0.0
  %192 = vmatpush.msra.mxu0 0.0
  %193 = vmatpush.msra.mxu0 0.0
  %194 = vmatpush.msra.mxu0 0.0
  %195 = vmatpush.msra.mxu0 0.0
  %196 = vmatpush.msra.mxu0 0.0
  %197 = vmatpush.msra.mxu0 0.0
  %198 = vmatpush.msra.mxu0 0.0
  %199 = vmatpush.msra.mxu0 0.0
  %200 = vmatpush.msra.mxu0 0.0
  %201 = vmatpush.msra.mxu0 0.0
  %202 = vmatpush.msra.mxu0 %v70
  %203 = vmatpush.msra.mxu0 %v69
  %204 = vmatpush.msra.mxu0 %v68
  %205 = vmatmul.f32.gmra.mxu0 %v77
  %v206 = vpop.f32.mrf.mxu0
  %v207 = vadd.f32 %v142, %v206
  %208 = vmatmul.f32.gmra.mxu0 %v80
  %v209 = vpop.f32.mrf.mxu0
  %v210 = vadd.f32 %v145, %v209
  %211 = vmatmul.f32.gmra.mxu0 %v83
  %v212 = vpop.f32.mrf.mxu0
  %v213 = vadd.f32 %v148, %v212
  %214 = vmatmul.f32.gmra.mxu0 %v86
  %v215 = vpop.f32.mrf.mxu0
  %v216 = vadd.f32 %v151, %v215
  %217 = vmatmul.f32.gmra.mxu0 %v89
  %v218 = vpop.f32.mrf.mxu0
  %v219 = vadd.f32 %v154, %v218
  %220 = vmatmul.f32.gmra.mxu0 %v92
  %v221 = vpop.f32.mrf.mxu0
  %v222 = vadd.f32 %v157, %v221
  %223 = vmatmul.f32.gmra.mxu0 %v95
  %v224 = vpop.f32.mrf.mxu0
  %v225 = vadd.f32 %v160, %v224
  %226 = vmatmul.f32.gmra.mxu0 %v98
  %v227 = vpop.f32.mrf.mxu0
  %v228 = vadd.f32 %v163, %v227
  %229 = vmatmul.f32.gmra.mxu0 %v101
  %v230 = vpop.f32.mrf.mxu0
  %v231 = vadd.f32 %v166, %v230
  %232 = vmatmul.f32.gmra.mxu0 %v104
  %v233 = vpop.f32.mrf.mxu0
  %v234 = vadd.f32 %v169, %v233
  %235 = vmatmul.f32.gmra.mxu0 %v107
  %v236 = vpop.f32.mrf.mxu0
  %v237 = vadd.f32 %v172, %v236
  %238 = vmatmul.f32.gmra.mxu0 %v110
  %v239 = vpop.f32.mrf.mxu0
  %v240 = vadd.f32 %v175, %v239
  %241 = vmatmul.f32.gmra.mxu0 %v113
  %v242 = vpop.f32.mrf.mxu0
  %v243 = vadd.f32 %v178, %v242
  %244 = vmatmul.f32.gmra.mxu0 %v116
  %v245 = vpop.f32.mrf.mxu0
  %v246 = vadd.f32 %v181, %v245
  %247 = vmatmul.f32.gmra.mxu0 %v119
  %v248 = vpop.f32.mrf.mxu0
  %v249 = vadd.f32 %v184, %v248
  %250 = vmatmul.f32.gmra.mxu0 %v122
  %v251 = vpop.f32.mrf.mxu0
  %v252 = vadd.f32 %v187, %v251
  %253 = vdwg.mxu0
  %v254 = vld [vmem:[%s3] sm:$0x1]
  %v255 = vld [vmem:[%s4] sm:$0x1]
  %vm256 = vcmask 261120
  %v257 = vsel %vm256, %v207, 0.0
  %258 = vadd.xlane.f32.xlu0 %v257
  %v259 = vpop.xlane.xlu0 %258
  %v260 = vsel %vm256, %v210, 0.0
  %261 = vadd.xlane.f32.xlu0 %v260
  %v262 = vpop.xlane.xlu0 %261
  %v263 = vsel %vm256, %v213, 0.0
  %264 = vadd.xlane.f32.xlu0 %v263
  %v265 = vpop.xlane.xlu0 %264
  %v266 = vsel %vm256, %v216, 0.0
  %267 = vadd.xlane.f32.xlu0 %v266
  %v268 = vpop.xlane.xlu0 %267
  %v269 = vsel %vm256, %v219, 0.0
  %270 = vadd.xlane.f32.xlu0 %v269
  %v271 = vpop.xlane.xlu0 %270
  %v272 = vsel %vm256, %v222, 0.0
  %273 = vadd.xlane.f32.xlu0 %v272
  %v274 = vpop.xlane.xlu0 %273
  %v275 = vsel %vm256, %v225, 0.0
  %276 = vadd.xlane.f32.xlu0 %v275
  %v277 = vpop.xlane.xlu0 %276
  %v278 = vsel %vm256, %v228, 0.0
  %279 = vadd.xlane.f32.xlu0 %v278
  %v280 = vpop.xlane.xlu0 %279
  %v281 = vsel %vm256, %v231, 0.0
  %282 = vadd.xlane.f32.xlu0 %v281
  %v283 = vpop.xlane.xlu0 %282
  %v284 = vsel %vm256, %v234, 0.0
  %285 = vadd.xlane.f32.xlu0 %v284
  %v286 = vpop.xlane.xlu0 %285
  %v287 = vsel %vm256, %v237, 0.0
  %288 = vadd.xlane.f32.xlu0 %v287
  %v289 = vpop.xlane.xlu0 %288
  %v290 = vsel %vm256, %v240, 0.0
  %291 = vadd.xlane.f32.xlu0 %v290
  %v292 = vpop.xlane.xlu0 %291
  %v293 = vsel %vm256, %v243, 0.0
  %294 = vadd.xlane.f32.xlu0 %v293
  %v295 = vpop.xlane.xlu0 %294
  %v296 = vsel %vm256, %v246, 0.0
  %297 = vadd.xlane.f32.xlu0 %v296
  %v298 = vpop.xlane.xlu0 %297
  %v299 = vsel %vm256, %v249, 0.0
  %300 = vadd.xlane.f32.xlu0 %v299
  %v301 = vpop.xlane.xlu0 %300
  %v302 = vsel %vm256, %v252, 0.0
  %303 = vadd.xlane.f32.xlu0 %v302
  %v304 = vpop.xlane.xlu0 %303
  %v305 = vrcp.pop 32.0
  %v306 = vmul.f32 32.0, %v305
  %v307 = vsub.f32 1.0, %v306
  %v308 = vmul.f32 %v305, %v307
  %v309 = vadd.f32 %v305, %v308
  %vm310 = vweird.f32 %v305
  %v311 = vsel %vm310, %v305, %v309
  %v312 = vmul.f32 %v259, %v311
  %v313 = vmul.f32 %v262, %v311
  %v314 = vmul.f32 %v265, %v311
  %v315 = vmul.f32 %v268, %v311
  %v316 = vmul.f32 %v271, %v311
  %v317 = vmul.f32 %v274, %v311
  %v318 = vmul.f32 %v277, %v311
  %v319 = vmul.f32 %v280, %v311
  %v320 = vmul.f32 %v283, %v311
  %v321 = vmul.f32 %v286, %v311
  %v322 = vmul.f32 %v289, %v311
  %v323 = vmul.f32 %v292, %v311
  %v324 = vmul.f32 %v295, %v311
  %v325 = vmul.f32 %v298, %v311
  %v326 = vmul.f32 %v301, %v311
  %v327 = vmul.f32 %v304, %v311
  %v328 = vsub.f32 %v207, %v312
  %v329 = vsub.f32 %v210, %v313
  %v330 = vsub.f32 %v213, %v314
  %v331 = vsub.f32 %v216, %v315
  %v332 = vsub.f32 %v219, %v316
  %v333 = vsub.f32 %v222, %v317
  %v334 = vsub.f32 %v225, %v318
  %v335 = vsub.f32 %v228, %v319
  %v336 = vsub.f32 %v231, %v320
  %v337 = vsub.f32 %v234, %v321
  %v338 = vsub.f32 %v237, %v322
  %v339 = vsub.f32 %v240, %v323
  %v340 = vsub.f32 %v243, %v324
  %v341 = vsub.f32 %v246, %v325
  %v342 = vsub.f32 %v249, %v326
  %v343 = vsub.f32 %v252, %v327
  %v344 = vmul.f32 %v328, %v328
  %v345 = vmul.f32 %v329, %v329
  %v346 = vmul.f32 %v330, %v330
  %v347 = vmul.f32 %v331, %v331
  %v348 = vmul.f32 %v332, %v332
  %v349 = vmul.f32 %v333, %v333
  %v350 = vmul.f32 %v334, %v334
  %v351 = vmul.f32 %v335, %v335
  %v352 = vmul.f32 %v336, %v336
  %v353 = vmul.f32 %v337, %v337
  %v354 = vmul.f32 %v338, %v338
  %v355 = vmul.f32 %v339, %v339
  %v356 = vmul.f32 %v340, %v340
  %v357 = vmul.f32 %v341, %v341
  %v358 = vmul.f32 %v342, %v342
  %v359 = vmul.f32 %v343, %v343
  %v360 = vsel %vm256, %v344, 0.0
  %361 = vadd.xlane.f32.xlu0 %v360
  %v362 = vpop.xlane.xlu0 %361
  %v363 = vsel %vm256, %v345, 0.0
  %364 = vadd.xlane.f32.xlu0 %v363
  %v365 = vpop.xlane.xlu0 %364
  %v366 = vsel %vm256, %v346, 0.0
  %367 = vadd.xlane.f32.xlu0 %v366
  %v368 = vpop.xlane.xlu0 %367
  %v369 = vsel %vm256, %v347, 0.0
  %370 = vadd.xlane.f32.xlu0 %v369
  %v371 = vpop.xlane.xlu0 %370
  %v372 = vsel %vm256, %v348, 0.0
  %373 = vadd.xlane.f32.xlu0 %v372
  %v374 = vpop.xlane.xlu0 %373
  %v375 = vsel %vm256, %v349, 0.0
  %376 = vadd.xlane.f32.xlu0 %v375
  %v377 = vpop.xlane.xlu0 %376
  %v378 = vsel %vm256, %v350, 0.0
  %379 = vadd.xlane.f32.xlu0 %v378
  %v380 = vpop.xlane.xlu0 %379
  %v381 = vsel %vm256, %v351, 0.0
  %382 = vadd.xlane.f32.xlu0 %v381
  %v383 = vpop.xlane.xlu0 %382
  %v384 = vsel %vm256, %v352, 0.0
  %385 = vadd.xlane.f32.xlu0 %v384
  %v386 = vpop.xlane.xlu0 %385
  %v387 = vsel %vm256, %v353, 0.0
  %388 = vadd.xlane.f32.xlu0 %v387
  %v389 = vpop.xlane.xlu0 %388
  %v390 = vsel %vm256, %v354, 0.0
  %391 = vadd.xlane.f32.xlu0 %v390
  %v392 = vpop.xlane.xlu0 %391
  %v393 = vsel %vm256, %v355, 0.0
  %394 = vadd.xlane.f32.xlu0 %v393
  %v395 = vpop.xlane.xlu0 %394
  %v396 = vsel %vm256, %v356, 0.0
  %397 = vadd.xlane.f32.xlu0 %v396
  %v398 = vpop.xlane.xlu0 %397
  %v399 = vsel %vm256, %v357, 0.0
  %400 = vadd.xlane.f32.xlu0 %v399
  %v401 = vpop.xlane.xlu0 %400
  %v402 = vsel %vm256, %v358, 0.0
  %403 = vadd.xlane.f32.xlu0 %v402
  %v404 = vpop.xlane.xlu0 %403
  %v405 = vsel %vm256, %v359, 0.0
  %406 = vadd.xlane.f32.xlu0 %v405
  %v407 = vpop.xlane.xlu0 %406
  %v408 = vmul.f32 %v362, %v311
  %v409 = vmul.f32 %v365, %v311
  %v410 = vmul.f32 %v368, %v311
  %v411 = vmul.f32 %v371, %v311
  %v412 = vmul.f32 %v374, %v311
  %v413 = vmul.f32 %v377, %v311
  %v414 = vmul.f32 %v380, %v311
  %v415 = vmul.f32 %v383, %v311
  %v416 = vmul.f32 %v386, %v311
  %v417 = vmul.f32 %v389, %v311
  %v418 = vmul.f32 %v392, %v311
  %v419 = vmul.f32 %v395, %v311
  %v420 = vmul.f32 %v398, %v311
  %v421 = vmul.f32 %v401, %v311
  %v422 = vmul.f32 %v404, %v311
  %v423 = vmul.f32 %v407, %v311
  %v424 = vadd.f32 %v408, 1e-05
  %v425 = vadd.f32 %v409, 1e-05
  %v426 = vadd.f32 %v410, 1e-05
  %v427 = vadd.f32 %v411, 1e-05
  %v428 = vadd.f32 %v412, 1e-05
  %v429 = vadd.f32 %v413, 1e-05
  %v430 = vadd.f32 %v414, 1e-05
  %v431 = vadd.f32 %v415, 1e-05
  %v432 = vadd.f32 %v416, 1e-05
  %v433 = vadd.f32 %v417, 1e-05
  %v434 = vadd.f32 %v418, 1e-05
  %v435 = vadd.f32 %v419, 1e-05
  %v436 = vadd.f32 %v420, 1e-05
  %v437 = vadd.f32 %v421, 1e-05
  %v438 = vadd.f32 %v422, 1e-05
  %v439 = vadd.f32 %v423, 1e-05
  %v440 = vrsqrt.pop %v424
  %v441 = vmul.f32 %v440, %v424
  %v442 = vmul.f32 %v441, %v440
  %v443 = vmul.f32 0.5, %v442
  %v444 = vsub.f32 1.5, %v443
  %v445 = vmul.f32 %v440, %v444
  %vm446 = vweird.f32 %v424
  %vm447 = vweird.f32 %v440
  %vm448 = vmor %vm446, %vm447
  %v449 = vsel %vm448, %v440, %v445
  %v450 = vrsqrt.pop %v425
  %v451 = vmul.f32 %v450, %v425
  %v452 = vmul.f32 %v451, %v450
  %v453 = vmul.f32 0.5, %v452
  %v454 = vsub.f32 1.5, %v453
  %v455 = vmul.f32 %v450, %v454
  %vm456 = vweird.f32 %v425
  %vm457 = vweird.f32 %v450
  %vm458 = vmor %vm456, %vm457
  %v459 = vsel %vm458, %v450, %v455
  %v460 = vrsqrt.pop %v426
  %v461 = vmul.f32 %v460, %v426
  %v462 = vmul.f32 %v461, %v460
  %v463 = vmul.f32 0.5, %v462
  %v464 = vsub.f32 1.5, %v463
  %v465 = vmul.f32 %v460, %v464
  %vm466 = vweird.f32 %v426
  %vm467 = vweird.f32 %v460
  %vm468 = vmor %vm466, %vm467
  %v469 = vsel %vm468, %v460, %v465
  %v470 = vrsqrt.pop %v427
  %v471 = vmul.f32 %v470, %v427
  %v472 = vmul.f32 %v471, %v470
  %v473 = vmul.f32 0.5, %v472
  %v474 = vsub.f32 1.5, %v473
  %v475 = vmul.f32 %v470, %v474
  %vm476 = vweird.f32 %v427
  %vm477 = vweird.f32 %v470
  %vm478 = vmor %vm476, %vm477
  %v479 = vsel %vm478, %v470, %v475
  %v480 = vrsqrt.pop %v428
  %v481 = vmul.f32 %v480, %v428
  %v482 = vmul.f32 %v481, %v480
  %v483 = vmul.f32 0.5, %v482
  %v484 = vsub.f32 1.5, %v483
  %v485 = vmul.f32 %v480, %v484
  %vm486 = vweird.f32 %v428
  %vm487 = vweird.f32 %v480
  %vm488 = vmor %vm486, %vm487
  %v489 = vsel %vm488, %v480, %v485
  %v490 = vrsqrt.pop %v429
  %v491 = vmul.f32 %v490, %v429
  %v492 = vmul.f32 %v491, %v490
  %v493 = vmul.f32 0.5, %v492
  %v494 = vsub.f32 1.5, %v493
  %v495 = vmul.f32 %v490, %v494
  %vm496 = vweird.f32 %v429
  %vm497 = vweird.f32 %v490
  %vm498 = vmor %vm496, %vm497
  %v499 = vsel %vm498, %v490, %v495
  %v500 = vrsqrt.pop %v430
  %v501 = vmul.f32 %v500, %v430
  %v502 = vmul.f32 %v501, %v500
  %v503 = vmul.f32 0.5, %v502
  %v504 = vsub.f32 1.5, %v503
  %v505 = vmul.f32 %v500, %v504
  %vm506 = vweird.f32 %v430
  %vm507 = vweird.f32 %v500
  %vm508 = vmor %vm506, %vm507
  %v509 = vsel %vm508, %v500, %v505
  %v510 = vrsqrt.pop %v431
  %v511 = vmul.f32 %v510, %v431
  %v512 = vmul.f32 %v511, %v510
  %v513 = vmul.f32 0.5, %v512
  %v514 = vsub.f32 1.5, %v513
  %v515 = vmul.f32 %v510, %v514
  %vm516 = vweird.f32 %v431
  %vm517 = vweird.f32 %v510
  %vm518 = vmor %vm516, %vm517
  %v519 = vsel %vm518, %v510, %v515
  %v520 = vrsqrt.pop %v432
  %v521 = vmul.f32 %v520, %v432
  %v522 = vmul.f32 %v521, %v520
  %v523 = vmul.f32 0.5, %v522
  %v524 = vsub.f32 1.5, %v523
  %v525 = vmul.f32 %v520, %v524
  %vm526 = vweird.f32 %v432
  %vm527 = vweird.f32 %v520
  %vm528 = vmor %vm526, %vm527
  %v529 = vsel %vm528, %v520, %v525
  %v530 = vrsqrt.pop %v433
  %v531 = vmul.f32 %v530, %v433
  %v532 = vmul.f32 %v531, %v530
  %v533 = vmul.f32 0.5, %v532
  %v534 = vsub.f32 1.5, %v533
  %v535 = vmul.f32 %v530, %v534
  %vm536 = vweird.f32 %v433
  %vm537 = vweird.f32 %v530
  %vm538 = vmor %vm536, %vm537
  %v539 = vsel %vm538, %v530, %v535
  %v540 = vrsqrt.pop %v434
  %v541 = vmul.f32 %v540, %v434
  %v542 = vmul.f32 %v541, %v540
  %v543 = vmul.f32 0.5, %v542
  %v544 = vsub.f32 1.5, %v543
  %v545 = vmul.f32 %v540, %v544
  %vm546 = vweird.f32 %v434
  %vm547 = vweird.f32 %v540
  %vm548 = vmor %vm546, %vm547
  %v549 = vsel %vm548, %v540, %v545
  %v550 = vrsqrt.pop %v435
  %v551 = vmul.f32 %v550, %v435
  %v552 = vmul.f32 %v551, %v550
  %v553 = vmul.f32 0.5, %v552
  %v554 = vsub.f32 1.5, %v553
  %v555 = vmul.f32 %v550, %v554
  %vm556 = vweird.f32 %v435
  %vm557 = vweird.f32 %v550
  %vm558 = vmor %vm556, %vm557
  %v559 = vsel %vm558, %v550, %v555
  %v560 = vrsqrt.pop %v436
  %v561 = vmul.f32 %v560, %v436
  %v562 = vmul.f32 %v561, %v560
  %v563 = vmul.f32 0.5, %v562
  %v564 = vsub.f32 1.5, %v563
  %v565 = vmul.f32 %v560, %v564
  %vm566 = vweird.f32 %v436
  %vm567 = vweird.f32 %v560
  %vm568 = vmor %vm566, %vm567
  %v569 = vsel %vm568, %v560, %v565
  %v570 = vrsqrt.pop %v437
  %v571 = vmul.f32 %v570, %v437
  %v572 = vmul.f32 %v571, %v570
  %v573 = vmul.f32 0.5, %v572
  %v574 = vsub.f32 1.5, %v573
  %v575 = vmul.f32 %v570, %v574
  %vm576 = vweird.f32 %v437
  %vm577 = vweird.f32 %v570
  %vm578 = vmor %vm576, %vm577
  %v579 = vsel %vm578, %v570, %v575
  %v580 = vrsqrt.pop %v438
  %v581 = vmul.f32 %v580, %v438
  %v582 = vmul.f32 %v581, %v580
  %v583 = vmul.f32 0.5, %v582
  %v584 = vsub.f32 1.5, %v583
  %v585 = vmul.f32 %v580, %v584
  %vm586 = vweird.f32 %v438
  %vm587 = vweird.f32 %v580
  %vm588 = vmor %vm586, %vm587
  %v589 = vsel %vm588, %v580, %v585
  %v590 = vrsqrt.pop %v439
  %v591 = vmul.f32 %v590, %v439
  %v592 = vmul.f32 %v591, %v590
  %v593 = vmul.f32 0.5, %v592
  %v594 = vsub.f32 1.5, %v593
  %v595 = vmul.f32 %v590, %v594
  %vm596 = vweird.f32 %v439
  %vm597 = vweird.f32 %v590
  %vm598 = vmor %vm596, %vm597
  %v599 = vsel %vm598, %v590, %v595
  %v600 = vmul.f32 %v328, %v449
  %v601 = vmul.f32 %v329, %v459
  %v602 = vmul.f32 %v330, %v469
  %v603 = vmul.f32 %v331, %v479
  %v604 = vmul.f32 %v332, %v489
  %v605 = vmul.f32 %v333, %v499
  %v606 = vmul.f32 %v334, %v509
  %v607 = vmul.f32 %v335, %v519
  %v608 = vmul.f32 %v336, %v529
  %v609 = vmul.f32 %v337, %v539
  %v610 = vmul.f32 %v338, %v549
  %v611 = vmul.f32 %v339, %v559
  %v612 = vmul.f32 %v340, %v569
  %v613 = vmul.f32 %v341, %v579
  %v614 = vmul.f32 %v342, %v589
  %v615 = vmul.f32 %v343, %v599
  %v617 = vperm.slane %v254, 0
  %v619 = vmul.f32 %v600, %v617
  %v620 = vmul.f32 %v601, %v617
  %v621 = vmul.f32 %v602, %v617
  %v622 = vmul.f32 %v603, %v617
  %v623 = vmul.f32 %v604, %v617
  %v624 = vmul.f32 %v605, %v617
  %v625 = vmul.f32 %v606, %v617
  %v626 = vmul.f32 %v607, %v617
  %v627 = vmul.f32 %v608, %v617
  %v628 = vmul.f32 %v609, %v617
  %v629 = vmul.f32 %v610, %v617
  %v630 = vmul.f32 %v611, %v617
  %v631 = vmul.f32 %v612, %v617
  %v632 = vmul.f32 %v613, %v617
  %v633 = vmul.f32 %v614, %v617
  %v634 = vmul.f32 %v615, %v617
  %v636 = vperm.slane %v255, 0
  %v638 = vadd.f32 %v619, %v636
  %v639 = vadd.f32 %v620, %v636
  %v640 = vadd.f32 %v621, %v636
  %v641 = vadd.f32 %v622, %v636
  %v642 = vadd.f32 %v623, %v636
  %v643 = vadd.f32 %v624, %v636
  %v644 = vadd.f32 %v625, %v636
  %v645 = vadd.f32 %v626, %v636
  %v646 = vadd.f32 %v627, %v636
  %v647 = vadd.f32 %v628, %v636
  %v648 = vadd.f32 %v629, %v636
  %v649 = vadd.f32 %v630, %v636
  %v650 = vadd.f32 %v631, %v636
  %v651 = vadd.f32 %v632, %v636
  %v652 = vadd.f32 %v633, %v636
  %v653 = vadd.f32 %v634, %v636
  %v654 = vmax.f32 %v638, 0.0
  %v655 = vmax.f32 %v639, 0.0
  %v656 = vmax.f32 %v640, 0.0
  %v657 = vmax.f32 %v641, 0.0
  %v658 = vmax.f32 %v642, 0.0
  %v659 = vmax.f32 %v643, 0.0
  %v660 = vmax.f32 %v644, 0.0
  %v661 = vmax.f32 %v645, 0.0
  %v662 = vmax.f32 %v646, 0.0
  %v663 = vmax.f32 %v647, 0.0
  %v664 = vmax.f32 %v648, 0.0
  %v665 = vmax.f32 %v649, 0.0
  %v666 = vmax.f32 %v650, 0.0
  %v667 = vmax.f32 %v651, 0.0
  %v668 = vmax.f32 %v652, 0.0
  %v669 = vmax.f32 %v653, 0.0
  %670 = vst.msk [vmem:[%s5] sm:$0xff] %vm256, %v654
  %671 = vst.msk [vmem:[%s5 + $0x8] sm:$0xff] %vm256, %v655
  %672 = vst.msk [vmem:[%s5 + $0x10] sm:$0xff] %vm256, %v656
  %673 = vst.msk [vmem:[%s5 + $0x18] sm:$0xff] %vm256, %v657
  %674 = vst.msk [vmem:[%s5 + $0x20] sm:$0xff] %vm256, %v658
  %675 = vst.msk [vmem:[%s5 + $0x28] sm:$0xff] %vm256, %v659
  %676 = vst.msk [vmem:[%s5 + $0x30] sm:$0xff] %vm256, %v660
  %677 = vst.msk [vmem:[%s5 + $0x38] sm:$0xff] %vm256, %v661
  %678 = vst.msk [vmem:[%s5 + $0x40] sm:$0xff] %vm256, %v662
  %679 = vst.msk [vmem:[%s5 + $0x48] sm:$0xff] %vm256, %v663
  %680 = vst.msk [vmem:[%s5 + $0x50] sm:$0xff] %vm256, %v664
  %681 = vst.msk [vmem:[%s5 + $0x58] sm:$0xff] %vm256, %v665
  %682 = vst.msk [vmem:[%s5 + $0x60] sm:$0xff] %vm256, %v666
  %683 = vst.msk [vmem:[%s5 + $0x68] sm:$0xff] %vm256, %v667
  %684 = vst.msk [vmem:[%s5 + $0x70] sm:$0xff] %vm256, %v668
  %685 = vst.msk [vmem:[%s5 + $0x78] sm:$0xff] %vm256, %v669
  // Predicated region
  $region22: #{visual_encoder_forward.3} parent=0 // pred_check
    _
  $region23: #{visual_encoder_forward.3} parent=0 // pred_check_branch
    %687 = sbr.rel (0) target = $region25
  $region24: #{visual_encoder_forward.3} parent=0 // pred_region
    _
  $region25: #{visual_encoder_forward.3} parent=0 // pred_fallthru
    _
  // Predicated region
  $region26: #{visual_encoder_forward.3} parent=0 // pred_check
    _
  $region27: #{visual_encoder_forward.3} parent=0 // pred_check_branch
    %689 = sbr.rel (0) target = $region29
  $region28: #{visual_encoder_forward.3} parent=0 // pred_region
    _
  $region29: #{visual_encoder_forward.3} parent=0 // pred_fallthru
    _

// kernel: visual_encoder_forward.4
$region0: #{visual_encoder_forward.4}
  #allocation0 [shape = 'u32[]', space=smem, size = 0x4, offset = 0x4, fixed_abs, tag = 'smem constant byte address 0x4 - core index']
  #allocation1 [shape = 'u32[72,128]{1,0:T(1,128)}', space=vmem, size = 0x9000, scoped, tag = 'internal scratch']
  %s0 = inlined_call_operand.vmem [shape: f32[128,288], index: 0, kind: input, shape index: {}]
  %s1 = inlined_call_operand.vmem [shape: f32[288,64], index: 1, kind: input, shape index: {}]
  %s2 = inlined_call_operand.vmem [shape: f32[1,64], index: 2, kind: input, shape index: {}]
  %s3 = inlined_call_operand.vmem [shape: f32[1,64], index: 3, kind: input, shape index: {}]
  %s4 = inlined_call_operand.vmem [shape: f32[1,64], index: 4, kind: input, shape index: {}]
  %s5 = inlined_call_operand.vmem [shape: f32[128,64], index: 5, kind: output, shape index: {}]
  %s6 = sld [smem:[#allocation0]]
  $region30: #{visual_encoder_forward.4} parent=0
    _
  %s8 = ssub.s32 1, %s6
  %s9 = scalar_select 0, %s8, %s6
  // Predicated region
  $region2: #{visual_encoder_forward.4} parent=0 // pred_check
    _
  $region3: #{visual_encoder_forward.4} parent=0 // pred_check_branch
    %11 = sbr.rel (0) target = $region5
  $region4: #{visual_encoder_forward.4} parent=0 // pred_region
    _
  $region5: #{visual_encoder_forward.4} parent=0 // pred_fallthru
    _
  // Predicated region
  $region6: #{visual_encoder_forward.4} parent=0 // pred_check
    _
  $region7: #{visual_encoder_forward.4} parent=0 // pred_check_branch
    %13 = sbr.rel (0) target = $region9
  $region8: #{visual_encoder_forward.4} parent=0 // pred_region
    _
  $region9: #{visual_encoder_forward.4} parent=0 // pred_fallthru
    _
  // Predicated region
  $region10: #{visual_encoder_forward.4} parent=0 // pred_check
    _
  $region11: #{visual_encoder_forward.4} parent=0 // pred_check_branch
    %15 = sbr.rel (0) target = $region13
  $region12: #{visual_encoder_forward.4} parent=0 // pred_region
    _
  $region13: #{visual_encoder_forward.4} parent=0 // pred_fallthru
    _
  // Predicated region
  $region14: #{visual_encoder_forward.4} parent=0 // pred_check
    _
  $region15: #{visual_encoder_forward.4} parent=0 // pred_check_branch
    %17 = sbr.rel (0) target = $region17
  $region16: #{visual_encoder_forward.4} parent=0 // pred_region
    _
  $region17: #{visual_encoder_forward.4} parent=0 // pred_fallthru
    _
  // Predicated region
  $region18: #{visual_encoder_forward.4} parent=0 // pred_check
    _
  $region19: #{visual_encoder_forward.4} parent=0 // pred_check_branch
    %19 = sbr.rel (0) target = $region21
  $region20: #{visual_encoder_forward.4} parent=0 // pred_region
    _
  $region21: #{visual_encoder_forward.4} parent=0 // pred_fallthru
    _
  %v20 = vld [vmem:[%s0] sm:$0xff]
  %v21 = vld [vmem:[%s0 + $0x8] sm:$0xff]
  %v22 = vld [vmem:[%s0 + $0x10] sm:$0xff]
  %v23 = vld [vmem:[%s0 + $0x18] sm:$0xff]
  %v24 = vld [vmem:[%s0 + $0x20] sm:$0xff]
  %v25 = vld [vmem:[%s0 + $0x28] sm:$0xff]
  %v26 = vld [vmem:[%s0 + $0x30] sm:$0xff]
  %v27 = vld [vmem:[%s0 + $0x38] sm:$0xff]
  %v28 = vld [vmem:[%s0 + $0x40] sm:$0xff]
  %v29 = vld [vmem:[%s0 + $0x48] sm:$0xff]
  %v30 = vld [vmem:[%s0 + $0x50] sm:$0xff]
  %v31 = vld [vmem:[%s0 + $0x58] sm:$0xff]
  %v32 = vld [vmem:[%s0 + $0x60] sm:$0xff]
  %v33 = vld [vmem:[%s0 + $0x68] sm:$0xff]
  %v34 = vld [vmem:[%s0 + $0x70] sm:$0xff]
  %v35 = vld [vmem:[%s0 + $0x78] sm:$0xff]
  %v36 = vld [vmem:[%s0 + $0x80] sm:$0xff]
  %v37 = vld [vmem:[%s0 + $0x88] sm:$0xff]
  %v38 = vld [vmem:[%s0 + $0x90] sm:$0xff]
  %v39 = vld [vmem:[%s0 + $0x98] sm:$0xff]
  %v40 = vld [vmem:[%s0 + $0xa0] sm:$0xff]
  %v41 = vld [vmem:[%s0 + $0xa8] sm:$0xff]
  %v42 = vld [vmem:[%s0 + $0xb0] sm:$0xff]
  %v43 = vld [vmem:[%s0 + $0xb8] sm:$0xff]
  %v44 = vld [vmem:[%s0 + $0xc0] sm:$0xff]
  %v45 = vld [vmem:[%s0 + $0xc8] sm:$0xff]
  %v46 = vld [vmem:[%s0 + $0xd0] sm:$0xff]
  %v47 = vld [vmem:[%s0 + $0xd8] sm:$0xff]
  %v48 = vld [vmem:[%s0 + $0xe0] sm:$0xff]
  %v49 = vld [vmem:[%s0 + $0xe8] sm:$0xff]
  %v50 = vld [vmem:[%s0 + $0xf0] sm:$0xff]
  %v51 = vld [vmem:[%s0 + $0xf8] sm:$0xff]
  %v52 = vld [vmem:[%s0 + $0x100] sm:$0xff]
  %v53 = vld [vmem:[%s0 + $0x108] sm:$0xff]
  %v54 = vld [vmem:[%s0 + $0x110] sm:$0xff]
  %v55 = vld [vmem:[%s0 + $0x118] sm:$0xff]
  %v56 = vld [vmem:[%s0 + $0x120] sm:$0xff]
  %v57 = vld [vmem:[%s0 + $0x128] sm:$0xff]
  %v58 = vld [vmem:[%s0 + $0x130] sm:$0xff]
  %v59 = vld [vmem:[%s0 + $0x138] sm:$0xff]
  %v60 = vld [vmem:[%s0 + $0x140] sm:$0xff]
  %v61 = vld [vmem:[%s0 + $0x148] sm:$0xff]
  %v62 = vld [vmem:[%s0 + $0x150] sm:$0xff]
  %v63 = vld [vmem:[%s0 + $0x158] sm:$0xff]
  %v64 = vld [vmem:[%s0 + $0x160] sm:$0xff]
  %v65 = vld [vmem:[%s0 + $0x168] sm:$0xff]
  %v66 = vld [vmem:[%s0 + $0x170] sm:$0xff]
  %v67 = vld [vmem:[%s0 + $0x178] sm:$0xff]
  %v68 = vld [vmem:[%s1] sm:$0xff]
  %v69 = vld [vmem:[%s1 + $0x8] sm:$0xff]
  %v70 = vld [vmem:[%s1 + $0x10] sm:$0xff]
  %v71 = vld [vmem:[%s1 + $0x18] sm:$0xff]
  %v72 = vld [vmem:[%s1 + $0x20] sm:$0xff]
  %v73 = vld [vmem:[%s1 + $0x28] sm:$0xff]
  %v74 = vld [vmem:[%s1 + $0x30] sm:$0xff]
  %v75 = vld [vmem:[%s1 + $0x38] sm:$0xff]
  %v76 = vld [vmem:[%s1 + $0x40] sm:$0xff]
  %v77 = vld [vmem:[%s1 + $0x48] sm:$0xff]
  %v78 = vld [vmem:[%s1 + $0x50] sm:$0xff]
  %v79 = vld [vmem:[%s1 + $0x58] sm:$0xff]
  %v80 = vld [vmem:[%s1 + $0x60] sm:$0xff]
  %v81 = vld [vmem:[%s1 + $0x68] sm:$0xff]
  %v82 = vld [vmem:[%s1 + $0x70] sm:$0xff]
  %v83 = vld [vmem:[%s1 + $0x78] sm:$0xff]
  %v84 = vld [vmem:[%s1 + $0x80] sm:$0xff]
  %v85 = vld [vmem:[%s1 + $0x88] sm:$0xff]
  %v86 = vld [vmem:[%s1 + $0x90] sm:$0xff]
  %v87 = vld [vmem:[%s1 + $0x98] sm:$0xff]
  %v88 = vld [vmem:[%s1 + $0xa0] sm:$0xff]
  %v89 = vld [vmem:[%s1 + $0xa8] sm:$0xff]
  %v90 = vld [vmem:[%s1 + $0xb0] sm:$0xff]
  %v91 = vld [vmem:[%s1 + $0xb8] sm:$0xff]
  %v92 = vld [vmem:[%s1 + $0xc0] sm:$0xff]
  %v93 = vld [vmem:[%s1 + $0xc8] sm:$0xff]
  %v94 = vld [vmem:[%s1 + $0xd0] sm:$0xff]
  %v95 = vld [vmem:[%s1 + $0xd8] sm:$0xff]
  %v96 = vld [vmem:[%s1 + $0xe0] sm:$0xff]
  %v97 = vld [vmem:[%s1 + $0xe8] sm:$0xff]
  %v98 = vld [vmem:[%s1 + $0xf0] sm:$0xff]
  %v99 = vld [vmem:[%s1 + $0xf8] sm:$0xff]
  %v100 = vld [vmem:[%s1 + $0x100] sm:$0xff]
  %v101 = vld [vmem:[%s1 + $0x108] sm:$0xff]
  %v102 = vld [vmem:[%s1 + $0x110] sm:$0xff]
  %v103 = vld [vmem:[%s1 + $0x118] sm:$0xff]
  %v104 = vld [vmem:[%s2] sm:$0x1]
  %v106 = vperm.slane %v104, 0
  %vm108 = vcmask 261120
  %v110 = vsel %vm108, %v22, 0
  %v113 = vsel %vm108, %v25, 0
  %v116 = vsel %vm108, %v28, 0
  %v119 = vsel %vm108, %v31, 0
  %v122 = vsel %vm108, %v34, 0
  %v125 = vsel %vm108, %v37, 0
  %v128 = vsel %vm108, %v40, 0
  %v131 = vsel %vm108, %v43, 0
  %v134 = vsel %vm108, %v46, 0
  %v137 = vsel %vm108, %v49, 0
  %v140 = vsel %vm108, %v52, 0
  %v143 = vsel %vm108, %v55, 0
  %v146 = vsel %vm108, %v58, 0
  %v149 = vsel %vm108, %v61, 0
  %v152 = vsel %vm108, %v64, 0
  %v155 = vsel %vm108, %v67, 0
  %157 = vmatpush.msra.mxu0 %v83
  %158 = vmatpush.msra.mxu0 %v82
  %159 = vmatpush.msra.mxu0 %v81
  %160 = vmatpush.msra.mxu0 %v80
  %161 = vmatpush.msra.mxu0 %v79
  %162 = vmatpush.msra.mxu0 %v78
  %163 = vmatpush.msra.mxu0 %v77
  %164 = vmatpush.msra.mxu0 %v76
  %165 = vmatpush.msra.mxu0 %v75
  %166 = vmatpush.msra.mxu0 %v74
  %167 = vmatpush.msra.mxu0 %v73
  %168 = vmatpush.msra.mxu0 %v72
  %169 = vmatpush.msra.mxu0 %v71
  %170 = vmatpush.msra.mxu0 %v70
  %171 = vmatpush.msra.mxu0 %v69
  %172 = vmatpush.msra.mxu0 %v68
  %173 = vmatmul.f32.gmra.mxu0 %v20
  %v174 = vpop.f32.mrf.mxu0
  %v175 = vadd.f32 %v106, %v174
  %176 = vmatmul.f32.gmra.mxu0 %v23
  %v177 = vpop.f32.mrf.mxu0
  %v178 = vadd.f32 %v106, %v177
  %179 = vmatmul.f32.gmra.mxu0 %v26
  %v180 = vpop.f32.mrf.mxu0
  %v181 = vadd.f32 %v106, %v180
  %182 = vmatmul.f32.gmra.mxu0 %v29
  %v183 = vpop.f32.mrf.mxu0
  %v184 = vadd.f32 %v106, %v183
  %185 = vmatmul.f32.gmra.mxu0 %v32
  %v186 = vpop.f32.mrf.mxu0
  %v187 = vadd.f32 %v106, %v186
  %188 = vmatmul.f32.gmra.mxu0 %v35
  %v189 = vpop.f32.mrf.mxu0
  %v190 = vadd.f32 %v106, %v189
  %191 = vmatmul.f32.gmra.mxu0 %v38
  %v192 = vpop.f32.mrf.mxu0
  %v193 = vadd.f32 %v106, %v192
  %194 = vmatmul.f32.gmra.mxu0 %v41
  %v195 = vpop.f32.mrf.mxu0
  %v196 = vadd.f32 %v106, %v195
  %197 = vmatmul.f32.gmra.mxu0 %v44
  %v198 = vpop.f32.mrf.mxu0
  %v199 = vadd.f32 %v106, %v198
  %200 = vmatmul.f32.gmra.mxu0 %v47
  %v201 = vpop.f32.mrf.mxu0
  %v202 = vadd.f32 %v106, %v201
  %203 = vmatmul.f32.gmra.mxu0 %v50
  %v204 = vpop.f32.mrf.mxu0
  %v205 = vadd.f32 %v106, %v204
  %206 = vmatmul.f32.gmra.mxu0 %v53
  %v207 = vpop.f32.mrf.mxu0
  %v208 = vadd.f32 %v106, %v207
  %209 = vmatmul.f32.gmra.mxu0 %v56
  %v210 = vpop.f32.mrf.mxu0
  %v211 = vadd.f32 %v106, %v210
  %212 = vmatmul.f32.gmra.mxu0 %v59
  %v213 = vpop.f32.mrf.mxu0
  %v214 = vadd.f32 %v106, %v213
  %215 = vmatmul.f32.gmra.mxu0 %v62
  %v216 = vpop.f32.mrf.mxu0
  %v217 = vadd.f32 %v106, %v216
  %218 = vmatmul.f32.gmra.mxu0 %v65
  %v219 = vpop.f32.mrf.mxu0
  %v220 = vadd.f32 %v106, %v219
  %221 = vdwg.mxu0
  %222 = vmatpush.msra.mxu0 %v99
  %223 = vmatpush.msra.mxu0 %v98
  %224 = vmatpush.msra.mxu0 %v97
  %225 = vmatpush.msra.mxu0 %v96
  %226 = vmatpush.msra.mxu0 %v95
  %227 = vmatpush.msra.mxu0 %v94
  %228 = vmatpush.msra.mxu0 %v93
  %229 = vmatpush.msra.mxu0 %v92
  %230 = vmatpush.msra.mxu0 %v91
  %231 = vmatpush.msra.mxu0 %v90
  %232 = vmatpush.msra.mxu0 %v89
  %233 = vmatpush.msra.mxu0 %v88
  %234 = vmatpush.msra.mxu0 %v87
  %235 = vmatpush.msra.mxu0 %v86
  %236 = vmatpush.msra.mxu0 %v85
  %237 = vmatpush.msra.mxu0 %v84
  %238 = vmatmul.f32.gmra.mxu0 %v21
  %v239 = vpop.f32.mrf.mxu0
  %v240 = vadd.f32 %v175, %v239
  %241 = vmatmul.f32.gmra.mxu0 %v24
  %v242 = vpop.f32.mrf.mxu0
  %v243 = vadd.f32 %v178, %v242
  %244 = vmatmul.f32.gmra.mxu0 %v27
  %v245 = vpop.f32.mrf.mxu0
  %v246 = vadd.f32 %v181, %v245
  %247 = vmatmul.f32.gmra.mxu0 %v30
  %v248 = vpop.f32.mrf.mxu0
  %v249 = vadd.f32 %v184, %v248
  %250 = vmatmul.f32.gmra.mxu0 %v33
  %v251 = vpop.f32.mrf.mxu0
  %v252 = vadd.f32 %v187, %v251
  %253 = vmatmul.f32.gmra.mxu0 %v36
  %v254 = vpop.f32.mrf.mxu0
  %v255 = vadd.f32 %v190, %v254
  %256 = vmatmul.f32.gmra.mxu0 %v39
  %v257 = vpop.f32.mrf.mxu0
  %v258 = vadd.f32 %v193, %v257
  %259 = vmatmul.f32.gmra.mxu0 %v42
  %v260 = vpop.f32.mrf.mxu0
  %v261 = vadd.f32 %v196, %v260
  %262 = vmatmul.f32.gmra.mxu0 %v45
  %v263 = vpop.f32.mrf.mxu0
  %v264 = vadd.f32 %v199, %v263
  %265 = vmatmul.f32.gmra.mxu0 %v48
  %v266 = vpop.f32.mrf.mxu0
  %v267 = vadd.f32 %v202, %v266
  %268 = vmatmul.f32.gmra.mxu0 %v51
  %v269 = vpop.f32.mrf.mxu0
  %v270 = vadd.f32 %v205, %v269
  %271 = vmatmul.f32.gmra.mxu0 %v54
  %v272 = vpop.f32.mrf.mxu0
  %v273 = vadd.f32 %v208, %v272
  %274 = vmatmul.f32.gmra.mxu0 %v57
  %v275 = vpop.f32.mrf.mxu0
  %v276 = vadd.f32 %v211, %v275
  %277 = vmatmul.f32.gmra.mxu0 %v60
  %v278 = vpop.f32.mrf.mxu0
  %v279 = vadd.f32 %v214, %v278
  %280 = vmatmul.f32.gmra.mxu0 %v63
  %v281 = vpop.f32.mrf.mxu0
  %v282 = vadd.f32 %v217, %v281
  %283 = vmatmul.f32.gmra.mxu0 %v66
  %v284 = vpop.f32.mrf.mxu0
  %v285 = vadd.f32 %v220, %v284
  %286 = vdwg.mxu0
  %287 = vmatpush.msra.mxu0 0.0
  %288 = vmatpush.msra.mxu0 0.0
  %289 = vmatpush.msra.mxu0 0.0
  %290 = vmatpush.msra.mxu0 0.0
  %291 = vmatpush.msra.mxu0 0.0
  %292 = vmatpush.msra.mxu0 0.0
  %293 = vmatpush.msra.mxu0 0.0
  %294 = vmatpush.msra.mxu0 0.0
  %295 = vmatpush.msra.mxu0 0.0
  %296 = vmatpush.msra.mxu0 0.0
  %297 = vmatpush.msra.mxu0 0.0
  %298 = vmatpush.msra.mxu0 0.0
  %299 = vmatpush.msra.mxu0 %v103
  %300 = vmatpush.msra.mxu0 %v102
  %301 = vmatpush.msra.mxu0 %v101
  %302 = vmatpush.msra.mxu0 %v100
  %303 = vmatmul.f32.gmra.mxu0 %v110
  %v304 = vpop.f32.mrf.mxu0
  %v305 = vadd.f32 %v240, %v304
  %306 = vmatmul.f32.gmra.mxu0 %v113
  %v307 = vpop.f32.mrf.mxu0
  %v308 = vadd.f32 %v243, %v307
  %309 = vmatmul.f32.gmra.mxu0 %v116
  %v310 = vpop.f32.mrf.mxu0
  %v311 = vadd.f32 %v246, %v310
  %312 = vmatmul.f32.gmra.mxu0 %v119
  %v313 = vpop.f32.mrf.mxu0
  %v314 = vadd.f32 %v249, %v313
  %315 = vmatmul.f32.gmra.mxu0 %v122
  %v316 = vpop.f32.mrf.mxu0
  %v317 = vadd.f32 %v252, %v316
  %318 = vmatmul.f32.gmra.mxu0 %v125
  %v319 = vpop.f32.mrf.mxu0
  %v320 = vadd.f32 %v255, %v319
  %321 = vmatmul.f32.gmra.mxu0 %v128
  %v322 = vpop.f32.mrf.mxu0
  %v323 = vadd.f32 %v258, %v322
  %324 = vmatmul.f32.gmra.mxu0 %v131
  %v325 = vpop.f32.mrf.mxu0
  %v326 = vadd.f32 %v261, %v325
  %327 = vmatmul.f32.gmra.mxu0 %v134
  %v328 = vpop.f32.mrf.mxu0
  %v329 = vadd.f32 %v264, %v328
  %330 = vmatmul.f32.gmra.mxu0 %v137
  %v331 = vpop.f32.mrf.mxu0
  %v332 = vadd.f32 %v267, %v331
  %333 = vmatmul.f32.gmra.mxu0 %v140
  %v334 = vpop.f32.mrf.mxu0
  %v335 = vadd.f32 %v270, %v334
  %336 = vmatmul.f32.gmra.mxu0 %v143
  %v337 = vpop.f32.mrf.mxu0
  %v338 = vadd.f32 %v273, %v337
  %339 = vmatmul.f32.gmra.mxu0 %v146
  %v340 = vpop.f32.mrf.mxu0
  %v341 = vadd.f32 %v276, %v340
  %342 = vmatmul.f32.gmra.mxu0 %v149
  %v343 = vpop.f32.mrf.mxu0
  %v344 = vadd.f32 %v279, %v343
  %345 = vmatmul.f32.gmra.mxu0 %v152
  %v346 = vpop.f32.mrf.mxu0
  %v347 = vadd.f32 %v282, %v346
  %348 = vmatmul.f32.gmra.mxu0 %v155
  %v349 = vpop.f32.mrf.mxu0
  %v350 = vadd.f32 %v285, %v349
  %351 = vdwg.mxu0
  %v352 = vld [vmem:[%s3] sm:$0x1]
  %v353 = vld [vmem:[%s4] sm:$0x1]
  %vm354 = vcmask 523264
  %v355 = vsel %vm354, %v305, 0.0
  %356 = vadd.xlane.f32.xlu0 %v355
  %v357 = vpop.xlane.xlu0 %356
  %v358 = vsel %vm354, %v308, 0.0
  %359 = vadd.xlane.f32.xlu0 %v358
  %v360 = vpop.xlane.xlu0 %359
  %v361 = vsel %vm354, %v311, 0.0
  %362 = vadd.xlane.f32.xlu0 %v361
  %v363 = vpop.xlane.xlu0 %362
  %v364 = vsel %vm354, %v314, 0.0
  %365 = vadd.xlane.f32.xlu0 %v364
  %v366 = vpop.xlane.xlu0 %365
  %v367 = vsel %vm354, %v317, 0.0
  %368 = vadd.xlane.f32.xlu0 %v367
  %v369 = vpop.xlane.xlu0 %368
  %v370 = vsel %vm354, %v320, 0.0
  %371 = vadd.xlane.f32.xlu0 %v370
  %v372 = vpop.xlane.xlu0 %371
  %v373 = vsel %vm354, %v323, 0.0
  %374 = vadd.xlane.f32.xlu0 %v373
  %v375 = vpop.xlane.xlu0 %374
  %v376 = vsel %vm354, %v326, 0.0
  %377 = vadd.xlane.f32.xlu0 %v376
  %v378 = vpop.xlane.xlu0 %377
  %v379 = vsel %vm354, %v329, 0.0
  %380 = vadd.xlane.f32.xlu0 %v379
  %v381 = vpop.xlane.xlu0 %380
  %v382 = vsel %vm354, %v332, 0.0
  %383 = vadd.xlane.f32.xlu0 %v382
  %v384 = vpop.xlane.xlu0 %383
  %v385 = vsel %vm354, %v335, 0.0
  %386 = vadd.xlane.f32.xlu0 %v385
  %v387 = vpop.xlane.xlu0 %386
  %v388 = vsel %vm354, %v338, 0.0
  %389 = vadd.xlane.f32.xlu0 %v388
  %v390 = vpop.xlane.xlu0 %389
  %v391 = vsel %vm354, %v341, 0.0
  %392 = vadd.xlane.f32.xlu0 %v391
  %v393 = vpop.xlane.xlu0 %392
  %v394 = vsel %vm354, %v344, 0.0
  %395 = vadd.xlane.f32.xlu0 %v394
  %v396 = vpop.xlane.xlu0 %395
  %v397 = vsel %vm354, %v347, 0.0
  %398 = vadd.xlane.f32.xlu0 %v397
  %v399 = vpop.xlane.xlu0 %398
  %v400 = vsel %vm354, %v350, 0.0
  %401 = vadd.xlane.f32.xlu0 %v400
  %v402 = vpop.xlane.xlu0 %401
  %v403 = vrcp.pop 64.0
  %v404 = vmul.f32 64.0, %v403
  %v405 = vsub.f32 1.0, %v404
  %v406 = vmul.f32 %v403, %v405
  %v407 = vadd.f32 %v403, %v406
  %vm408 = vweird.f32 %v403
  %v409 = vsel %vm408, %v403, %v407
  %v410 = vmul.f32 %v357, %v409
  %v411 = vmul.f32 %v360, %v409
  %v412 = vmul.f32 %v363, %v409
  %v413 = vmul.f32 %v366, %v409
  %v414 = vmul.f32 %v369, %v409
  %v415 = vmul.f32 %v372, %v409
  %v416 = vmul.f32 %v375, %v409
  %v417 = vmul.f32 %v378, %v409
  %v418 = vmul.f32 %v381, %v409
  %v419 = vmul.f32 %v384, %v409
  %v420 = vmul.f32 %v387, %v409
  %v421 = vmul.f32 %v390, %v409
  %v422 = vmul.f32 %v393, %v409
  %v423 = vmul.f32 %v396, %v409
  %v424 = vmul.f32 %v399, %v409
  %v425 = vmul.f32 %v402, %v409
  %v426 = vsub.f32 %v305, %v410
  %v427 = vsub.f32 %v308, %v411
  %v428 = vsub.f32 %v311, %v412
  %v429 = vsub.f32 %v314, %v413
  %v430 = vsub.f32 %v317, %v414
  %v431 = vsub.f32 %v320, %v415
  %v432 = vsub.f32 %v323, %v416
  %v433 = vsub.f32 %v326, %v417
  %v434 = vsub.f32 %v329, %v418
  %v435 = vsub.f32 %v332, %v419
  %v436 = vsub.f32 %v335, %v420
  %v437 = vsub.f32 %v338, %v421
  %v438 = vsub.f32 %v341, %v422
  %v439 = vsub.f32 %v344, %v423
  %v440 = vsub.f32 %v347, %v424
  %v441 = vsub.f32 %v350, %v425
  %v442 = vmul.f32 %v426, %v426
  %v443 = vmul.f32 %v427, %v427
  %v444 = vmul.f32 %v428, %v428
  %v445 = vmul.f32 %v429, %v429
  %v446 = vmul.f32 %v430, %v430
  %v447 = vmul.f32 %v431, %v431
  %v448 = vmul.f32 %v432, %v432
  %v449 = vmul.f32 %v433, %v433
  %v450 = vmul.f32 %v434, %v434
  %v451 = vmul.f32 %v435, %v435
  %v452 = vmul.f32 %v436, %v436
  %v453 = vmul.f32 %v437, %v437
  %v454 = vmul.f32 %v438, %v438
  %v455 = vmul.f32 %v439, %v439
  %v456 = vmul.f32 %v440, %v440
  %v457 = vmul.f32 %v441, %v441
  %v458 = vsel %vm354, %v442, 0.0
  %459 = vadd.xlane.f32.xlu0 %v458
  %v460 = vpop.xlane.xlu0 %459
  %v461 = vsel %vm354, %v443, 0.0
  %462 = vadd.xlane.f32.xlu0 %v461
  %v463 = vpop.xlane.xlu0 %462
  %v464 = vsel %vm354, %v444, 0.0
  %465 = vadd.xlane.f32.xlu0 %v464
  %v466 = vpop.xlane.xlu0 %465
  %v467 = vsel %vm354, %v445, 0.0
  %468 = vadd.xlane.f32.xlu0 %v467
  %v469 = vpop.xlane.xlu0 %468
  %v470 = vsel %vm354, %v446, 0.0
  %471 = vadd.xlane.f32.xlu0 %v470
  %v472 = vpop.xlane.xlu0 %471
  %v473 = vsel %vm354, %v447, 0.0
  %474 = vadd.xlane.f32.xlu0 %v473
  %v475 = vpop.xlane.xlu0 %474
  %v476 = vsel %vm354, %v448, 0.0
  %477 = vadd.xlane.f32.xlu0 %v476
  %v478 = vpop.xlane.xlu0 %477
  %v479 = vsel %vm354, %v449, 0.0
  %480 = vadd.xlane.f32.xlu0 %v479
  %v481 = vpop.xlane.xlu0 %480
  %v482 = vsel %vm354, %v450, 0.0
  %483 = vadd.xlane.f32.xlu0 %v482
  %v484 = vpop.xlane.xlu0 %483
  %v485 = vsel %vm354, %v451, 0.0
  %486 = vadd.xlane.f32.xlu0 %v485
  %v487 = vpop.xlane.xlu0 %486
  %v488 = vsel %vm354, %v452, 0.0
  %489 = vadd.xlane.f32.xlu0 %v488
  %v490 = vpop.xlane.xlu0 %489
  %v491 = vsel %vm354, %v453, 0.0
  %492 = vadd.xlane.f32.xlu0 %v491
  %v493 = vpop.xlane.xlu0 %492
  %v494 = vsel %vm354, %v454, 0.0
  %495 = vadd.xlane.f32.xlu0 %v494
  %v496 = vpop.xlane.xlu0 %495
  %v497 = vsel %vm354, %v455, 0.0
  %498 = vadd.xlane.f32.xlu0 %v497
  %v499 = vpop.xlane.xlu0 %498
  %v500 = vsel %vm354, %v456, 0.0
  %501 = vadd.xlane.f32.xlu0 %v500
  %v502 = vpop.xlane.xlu0 %501
  %v503 = vsel %vm354, %v457, 0.0
  %504 = vadd.xlane.f32.xlu0 %v503
  %v505 = vpop.xlane.xlu0 %504
  %v506 = vmul.f32 %v460, %v409
  %v507 = vmul.f32 %v463, %v409
  %v508 = vmul.f32 %v466, %v409
  %v509 = vmul.f32 %v469, %v409
  %v510 = vmul.f32 %v472, %v409
  %v511 = vmul.f32 %v475, %v409
  %v512 = vmul.f32 %v478, %v409
  %v513 = vmul.f32 %v481, %v409
  %v514 = vmul.f32 %v484, %v409
  %v515 = vmul.f32 %v487, %v409
  %v516 = vmul.f32 %v490, %v409
  %v517 = vmul.f32 %v493, %v409
  %v518 = vmul.f32 %v496, %v409
  %v519 = vmul.f32 %v499, %v409
  %v520 = vmul.f32 %v502, %v409
  %v521 = vmul.f32 %v505, %v409
  %v522 = vadd.f32 %v506, 1e-05
  %v523 = vadd.f32 %v507, 1e-05
  %v524 = vadd.f32 %v508, 1e-05
  %v525 = vadd.f32 %v509, 1e-05
  %v526 = vadd.f32 %v510, 1e-05
  %v527 = vadd.f32 %v511, 1e-05
  %v528 = vadd.f32 %v512, 1e-05
  %v529 = vadd.f32 %v513, 1e-05
  %v530 = vadd.f32 %v514, 1e-05
  %v531 = vadd.f32 %v515, 1e-05
  %v532 = vadd.f32 %v516, 1e-05
  %v533 = vadd.f32 %v517, 1e-05
  %v534 = vadd.f32 %v518, 1e-05
  %v535 = vadd.f32 %v519, 1e-05
  %v536 = vadd.f32 %v520, 1e-05
  %v537 = vadd.f32 %v521, 1e-05
  %v538 = vrsqrt.pop %v522
  %v539 = vmul.f32 %v538, %v522
  %v540 = vmul.f32 %v539, %v538
  %v541 = vmul.f32 0.5, %v540
  %v542 = vsub.f32 1.5, %v541
  %v543 = vmul.f32 %v538, %v542
  %vm544 = vweird.f32 %v522
  %vm545 = vweird.f32 %v538
  %vm546 = vmor %vm544, %vm545
  %v547 = vsel %vm546, %v538, %v543
  %v548 = vrsqrt.pop %v523
  %v549 = vmul.f32 %v548, %v523
  %v550 = vmul.f32 %v549, %v548
  %v551 = vmul.f32 0.5, %v550
  %v552 = vsub.f32 1.5, %v551
  %v553 = vmul.f32 %v548, %v552
  %vm554 = vweird.f32 %v523
  %vm555 = vweird.f32 %v548
  %vm556 = vmor %vm554, %vm555
  %v557 = vsel %vm556, %v548, %v553
  %v558 = vrsqrt.pop %v524
  %v559 = vmul.f32 %v558, %v524
  %v560 = vmul.f32 %v559, %v558
  %v561 = vmul.f32 0.5, %v560
  %v562 = vsub.f32 1.5, %v561
  %v563 = vmul.f32 %v558, %v562
  %vm564 = vweird.f32 %v524
  %vm565 = vweird.f32 %v558
  %vm566 = vmor %vm564, %vm565
  %v567 = vsel %vm566, %v558, %v563
  %v568 = vrsqrt.pop %v525
  %v569 = vmul.f32 %v568, %v525
  %v570 = vmul.f32 %v569, %v568
  %v571 = vmul.f32 0.5, %v570
  %v572 = vsub.f32 1.5, %v571
  %v573 = vmul.f32 %v568, %v572
  %vm574 = vweird.f32 %v525
  %vm575 = vweird.f32 %v568
  %vm576 = vmor %vm574, %vm575
  %v577 = vsel %vm576, %v568, %v573
  %v578 = vrsqrt.pop %v526
  %v579 = vmul.f32 %v578, %v526
  %v580 = vmul.f32 %v579, %v578
  %v581 = vmul.f32 0.5, %v580
  %v582 = vsub.f32 1.5, %v581
  %v583 = vmul.f32 %v578, %v582
  %vm584 = vweird.f32 %v526
  %vm585 = vweird.f32 %v578
  %vm586 = vmor %vm584, %vm585
  %v587 = vsel %vm586, %v578, %v583
  %v588 = vrsqrt.pop %v527
  %v589 = vmul.f32 %v588, %v527
  %v590 = vmul.f32 %v589, %v588
  %v591 = vmul.f32 0.5, %v590
  %v592 = vsub.f32 1.5, %v591
  %v593 = vmul.f32 %v588, %v592
  %vm594 = vweird.f32 %v527
  %vm595 = vweird.f32 %v588
  %vm596 = vmor %vm594, %vm595
  %v597 = vsel %vm596, %v588, %v593
  %v598 = vrsqrt.pop %v528
  %v599 = vmul.f32 %v598, %v528
  %v600 = vmul.f32 %v599, %v598
  %v601 = vmul.f32 0.5, %v600
  %v602 = vsub.f32 1.5, %v601
  %v603 = vmul.f32 %v598, %v602
  %vm604 = vweird.f32 %v528
  %vm605 = vweird.f32 %v598
  %vm606 = vmor %vm604, %vm605
  %v607 = vsel %vm606, %v598, %v603
  %v608 = vrsqrt.pop %v529
  %v609 = vmul.f32 %v608, %v529
  %v610 = vmul.f32 %v609, %v608
  %v611 = vmul.f32 0.5, %v610
  %v612 = vsub.f32 1.5, %v611
  %v613 = vmul.f32 %v608, %v612
  %vm614 = vweird.f32 %v529
  %vm615 = vweird.f32 %v608
  %vm616 = vmor %vm614, %vm615
  %v617 = vsel %vm616, %v608, %v613
  %v618 = vrsqrt.pop %v530
  %v619 = vmul.f32 %v618, %v530
  %v620 = vmul.f32 %v619, %v618
  %v621 = vmul.f32 0.5, %v620
  %v622 = vsub.f32 1.5, %v621
  %v623 = vmul.f32 %v618, %v622
  %vm624 = vweird.f32 %v530
  %vm625 = vweird.f32 %v618
  %vm626 = vmor %vm624, %vm625
  %v627 = vsel %vm626, %v618, %v623
  %v628 = vrsqrt.pop %v531
  %v629 = vmul.f32 %v628, %v531
  %v630 = vmul.f32 %v629, %v628
  %v631 = vmul.f32 0.5, %v630
  %v632 = vsub.f32 1.5, %v631
  %v633 = vmul.f32 %v628, %v632
  %vm634 = vweird.f32 %v531
  %vm635 = vweird.f32 %v628
  %vm636 = vmor %vm634, %vm635
  %v637 = vsel %vm636, %v628, %v633
  %v638 = vrsqrt.pop %v532
  %v639 = vmul.f32 %v638, %v532
  %v640 = vmul.f32 %v639, %v638
  %v641 = vmul.f32 0.5, %v640
  %v642 = vsub.f32 1.5, %v641
  %v643 = vmul.f32 %v638, %v642
  %vm644 = vweird.f32 %v532
  %vm645 = vweird.f32 %v638
  %vm646 = vmor %vm644, %vm645
  %v647 = vsel %vm646, %v638, %v643
  %v648 = vrsqrt.pop %v533
  %v649 = vmul.f32 %v648, %v533
  %v650 = vmul.f32 %v649, %v648
  %v651 = vmul.f32 0.5, %v650
  %v652 = vsub.f32 1.5, %v651
  %v653 = vmul.f32 %v648, %v652
  %vm654 = vweird.f32 %v533
  %vm655 = vweird.f32 %v648
  %vm656 = vmor %vm654, %vm655
  %v657 = vsel %vm656, %v648, %v653
  %v658 = vrsqrt.pop %v534
  %v659 = vmul.f32 %v658, %v534
  %v660 = vmul.f32 %v659, %v658
  %v661 = vmul.f32 0.5, %v660
  %v662 = vsub.f32 1.5, %v661
  %v663 = vmul.f32 %v658, %v662
  %vm664 = vweird.f32 %v534
  %vm665 = vweird.f32 %v658
  %vm666 = vmor %vm664, %vm665
  %v667 = vsel %vm666, %v658, %v663
  %v668 = vrsqrt.pop %v535
  %v669 = vmul.f32 %v668, %v535
  %v670 = vmul.f32 %v669, %v668
  %v671 = vmul.f32 0.5, %v670
  %v672 = vsub.f32 1.5, %v671
  %v673 = vmul.f32 %v668, %v672
  %vm674 = vweird.f32 %v535
  %vm675 = vweird.f32 %v668
  %vm676 = vmor %vm674, %vm675
  %v677 = vsel %vm676, %v668, %v673
  %v678 = vrsqrt.pop %v536
  %v679 = vmul.f32 %v678, %v536
  %v680 = vmul.f32 %v679, %v678
  %v681 = vmul.f32 0.5, %v680
  %v682 = vsub.f32 1.5, %v681
  %v683 = vmul.f32 %v678, %v682
  %vm684 = vweird.f32 %v536
  %vm685 = vweird.f32 %v678
  %vm686 = vmor %vm684, %vm685
  %v687 = vsel %vm686, %v678, %v683
  %v688 = vrsqrt.pop %v537
  %v689 = vmul.f32 %v688, %v537
  %v690 = vmul.f32 %v689, %v688
  %v691 = vmul.f32 0.5, %v690
  %v692 = vsub.f32 1.5, %v691
  %v693 = vmul.f32 %v688, %v692
  %vm694 = vweird.f32 %v537
  %vm695 = vweird.f32 %v688
  %vm696 = vmor %vm694, %vm695
  %v697 = vsel %vm696, %v688, %v693
  %v698 = vmul.f32 %v426, %v547
  %v699 = vmul.f32 %v427, %v557
  %v700 = vmul.f32 %v428, %v567
  %v701 = vmul.f32 %v429, %v577
  %v702 = vmul.f32 %v430, %v587
  %v703 = vmul.f32 %v431, %v597
  %v704 = vmul.f32 %v432, %v607
  %v705 = vmul.f32 %v433, %v617
  %v706 = vmul.f32 %v434, %v627
  %v707 = vmul.f32 %v435, %v637
  %v708 = vmul.f32 %v436, %v647
  %v709 = vmul.f32 %v437, %v657
  %v710 = vmul.f32 %v438, %v667
  %v711 = vmul.f32 %v439, %v677
  %v712 = vmul.f32 %v440, %v687
  %v713 = vmul.f32 %v441, %v697
  %v715 = vperm.slane %v352, 0
  %v717 = vmul.f32 %v698, %v715
  %v718 = vmul.f32 %v699, %v715
  %v719 = vmul.f32 %v700, %v715
  %v720 = vmul.f32 %v701, %v715
  %v721 = vmul.f32 %v702, %v715
  %v722 = vmul.f32 %v703, %v715
  %v723 = vmul.f32 %v704, %v715
  %v724 = vmul.f32 %v705, %v715
  %v725 = vmul.f32 %v706, %v715
  %v726 = vmul.f32 %v707, %v715
  %v727 = vmul.f32 %v708, %v715
  %v728 = vmul.f32 %v709, %v715
  %v729 = vmul.f32 %v710, %v715
  %v730 = vmul.f32 %v711, %v715
  %v731 = vmul.f32 %v712, %v715
  %v732 = vmul.f32 %v713, %v715
  %v734 = vperm.slane %v353, 0
  %v736 = vadd.f32 %v717, %v734
  %v737 = vadd.f32 %v718, %v734
  %v738 = vadd.f32 %v719, %v734
  %v739 = vadd.f32 %v720, %v734
  %v740 = vadd.f32 %v721, %v734
  %v741 = vadd.f32 %v722, %v734
  %v742 = vadd.f32 %v723, %v734
  %v743 = vadd.f32 %v724, %v734
  %v744 = vadd.f32 %v725, %v734
  %v745 = vadd.f32 %v726, %v734
  %v746 = vadd.f32 %v727, %v734
  %v747 = vadd.f32 %v728, %v734
  %v748 = vadd.f32 %v729, %v734
  %v749 = vadd.f32 %v730, %v734
  %v750 = vadd.f32 %v731, %v734
  %v751 = vadd.f32 %v732, %v734
  %v752 = vmax.f32 %v736, 0.0
  %v753 = vmax.f32 %v737, 0.0
  %v754 = vmax.f32 %v738, 0.0
  %v755 = vmax.f32 %v739, 0.0
  %v756 = vmax.f32 %v740, 0.0
  %v757 = vmax.f32 %v741, 0.0
  %v758 = vmax.f32 %v742, 0.0
  %v759 = vmax.f32 %v743, 0.0
  %v760 = vmax.f32 %v744, 0.0
  %v761 = vmax.f32 %v745, 0.0
  %v762 = vmax.f32 %v746, 0.0
  %v763 = vmax.f32 %v747, 0.0
  %v764 = vmax.f32 %v748, 0.0
  %v765 = vmax.f32 %v749, 0.0
  %v766 = vmax.f32 %v750, 0.0
  %v767 = vmax.f32 %v751, 0.0
  %768 = vst.msk [vmem:[%s5] sm:$0xff] %vm354, %v752
  %769 = vst.msk [vmem:[%s5 + $0x8] sm:$0xff] %vm354, %v753
  %770 = vst.msk [vmem:[%s5 + $0x10] sm:$0xff] %vm354, %v754
  %771 = vst.msk [vmem:[%s5 + $0x18] sm:$0xff] %vm354, %v755
  %772 = vst.msk [vmem:[%s5 + $0x20] sm:$0xff] %vm354, %v756
  %773 = vst.msk [vmem:[%s5 + $0x28] sm:$0xff] %vm354, %v757
  %774 = vst.msk [vmem:[%s5 + $0x30] sm:$0xff] %vm354, %v758
  %775 = vst.msk [vmem:[%s5 + $0x38] sm:$0xff] %vm354, %v759
  %776 = vst.msk [vmem:[%s5 + $0x40] sm:$0xff] %vm354, %v760
  %777 = vst.msk [vmem:[%s5 + $0x48] sm:$0xff] %vm354, %v761
  %778 = vst.msk [vmem:[%s5 + $0x50] sm:$0xff] %vm354, %v762
  %779 = vst.msk [vmem:[%s5 + $0x58] sm:$0xff] %vm354, %v763
  %780 = vst.msk [vmem:[%s5 + $0x60] sm:$0xff] %vm354, %v764
  %781 = vst.msk [vmem:[%s5 + $0x68] sm:$0xff] %vm354, %v765
  %782 = vst.msk [vmem:[%s5 + $0x70] sm:$0xff] %vm354, %v766
  %783 = vst.msk [vmem:[%s5 + $0x78] sm:$0xff] %vm354, %v767
  // Predicated region
  $region22: #{visual_encoder_forward.4} parent=0 // pred_check
    _
  $region23: #{visual_encoder_forward.4} parent=0 // pred_check_branch
    %785 = sbr.rel (0) target = $region25
  $region24: #{visual_encoder_forward.4} parent=0 // pred_region
    _
  $region25: #{visual_encoder_forward.4} parent=0 // pred_fallthru
    _
  // Predicated region
  $region26: #{visual_encoder_forward.4} parent=0 // pred_check
    _
  $region27: #{visual_encoder_forward.4} parent=0 // pred_check_branch
    %787 = sbr.rel (0) target = $region29
  $region28: #{visual_encoder_forward.4} parent=0 // pred_region
    _
  $region29: #{visual_encoder_forward.4} parent=0 // pred_fallthru
    _

// kernel: visual_encoder_forward.5
$region0: #{visual_encoder_forward.5}
  #allocation0 [shape = 'u32[]', space=smem, size = 0x4, offset = 0x4, fixed_abs, tag = 'smem constant byte address 0x4 - core index']
  #allocation1 [shape = 'u32[72,128]{1,0:T(1,128)}', space=vmem, size = 0x9000, scoped, tag = 'internal scratch']
  #allocation2 [shape = 'f32[2,8,32]{2,1,0:T(8,128)}', space=vmem, size = 0x2000, scoped, tag = 'scratch operand']
  #allocation3 [shape = 'f32[16,32]{1,0:T(8,128)}', space=vmem, size = 0x2000, scoped, tag = 'scratch operand']
  %s0 = inlined_call_operand.vmem [shape: f32[8,1024], index: 0, kind: input, shape index: {}]
  %s1 = inlined_call_operand.vmem [shape: f32[1024,32], index: 1, kind: input, shape index: {}]
  %s2 = inlined_call_operand.vmem [shape: f32[1,32], index: 2, kind: input, shape index: {}]
  %s3 = inlined_call_operand.vmem [shape: f32[1,32], index: 3, kind: input, shape index: {}]
  %s4 = inlined_call_operand.vmem [shape: f32[8,32], index: 4, kind: input, shape index: {}]
  %s5 = inlined_call_operand.vmem [shape: f32[2,1,32], index: 5, kind: input, shape index: {}]
  %s6 = inlined_call_operand.vmem [shape: f32[2,1,32], index: 6, kind: input, shape index: {}]
  %s7 = inlined_call_operand.vmem [shape: f32[2,32,96], index: 7, kind: input, shape index: {}]
  %s8 = inlined_call_operand.vmem [shape: f32[2,32,32], index: 8, kind: input, shape index: {}]
  %s9 = inlined_call_operand.vmem [shape: f32[2,1,32], index: 9, kind: input, shape index: {}]
  %s10 = inlined_call_operand.vmem [shape: f32[2,1,32], index: 10, kind: input, shape index: {}]
  %s11 = inlined_call_operand.vmem [shape: f32[2,1,32], index: 11, kind: input, shape index: {}]
  %s12 = inlined_call_operand.vmem [shape: f32[2,32,128], index: 12, kind: input, shape index: {}]
  %s13 = inlined_call_operand.vmem [shape: f32[2,1,128], index: 13, kind: input, shape index: {}]
  %s14 = inlined_call_operand.vmem [shape: f32[2,128,32], index: 14, kind: input, shape index: {}]
  %s15 = inlined_call_operand.vmem [shape: f32[2,1,32], index: 15, kind: input, shape index: {}]
  %s16 = inlined_call_operand.vmem [shape: f32[1,32], index: 16, kind: input, shape index: {}]
  %s17 = inlined_call_operand.vmem [shape: f32[1,32], index: 17, kind: input, shape index: {}]
  %s18 = inlined_call_operand.vmem [shape: f32[2,8,32], index: 18, kind: output, shape index: {}]
  %s19 = sld [smem:[#allocation0]]
  $region113: #{visual_encoder_forward.5} parent=0
    _
  %s21 = ssub.s32 1, %s19
  %s22 = scalar_select 0, %s21, %s19
  loop: start=0, step=1, limit=4
  $region2: #{visual_encoder_forward.5} parent=0 // loop_pre_header
    _
  $region3: #{visual_encoder_forward.5} parent=0 // loop_header
    %s24 = sphi 0, %s28
    %p25 = scmp.ge.s32.totalorder %s24, 4
    %s32 = sphi 0, %s32
    %s34 = sphi 0, %s32
    %s35 = sphi 0, %s34
    %s49 = sphi 0, %s35
    %s53 = sphi 0, %s53
    %s55 = sphi 0, %s53
    %s56 = sphi 0, %s55
    %s70 = sphi 0, %s56
    %s74 = sphi 0, %s74
    %s76 = sphi 0, %s74
    %s77 = sphi 0, %s76
    %s91 = sphi 0, %s77
    %s95 = sphi 0, %s95
    %s97 = sphi 0, %s95
    %s98 = sphi 0, %s97
    %s112 = sphi 0, %s98
    %s116 = sphi 0, %s116
    %s118 = sphi 0, %s116
    %s119 = sphi 0, %s118
    %s133 = sphi 0, %s119
    %s139 = sphi 0, %s141
    %s142 = sphi 0, %s139
    %s143 = sphi 0, %s142
    %s159 = sphi 0, %s143
    %s165 = sphi 0, %s167
    %s168 = sphi 0, %s165
    %s169 = sphi 0, %s168
    %s185 = sphi 0, %s169
    %s191 = sphi 0, %s193
    %s194 = sphi 0, %s191
    %s195 = sphi 0, %s194
    %s211 = sphi 0, %s195
    %s217 = sphi 0, %s219
    %s220 = sphi 0, %s217
    %s221 = sphi 0, %s220
    %s237 = sphi 0, %s221
    %s243 = sphi 0, %s245
    %s246 = sphi 0, %s243
    %s247 = sphi 0, %s246
    %s263 = sphi 0, %s247
    %s269 = sphi 0, %s271
    %s272 = sphi 0, %s269
    %s273 = sphi 0, %s272
    %s289 = sphi 0, %s273
    %s295 = sphi 0, %s297
    %s298 = sphi 0, %s295
    %s299 = sphi 0, %s298
    %s315 = sphi 0, %s299
    %s321 = sphi 0, %s323
    %s324 = sphi 0, %s321
    %s325 = sphi 0, %s324
    %s341 = sphi 0, %s325
    %s347 = sphi 0, %s349
    %s350 = sphi 0, %s347
    %s351 = sphi 0, %s350
    %s367 = sphi 0, %s351
    %s373 = sphi 0, %s375
    %s376 = sphi 0, %s373
    %s377 = sphi 0, %s376
    %s393 = sphi 0, %s377
    %s399 = sphi 0, %s401
    %s402 = sphi 0, %s399
    %s403 = sphi 0, %s402
    %s419 = sphi 0, %s403
    %s423 = sphi 0, %s423
    %s425 = sphi 0, %s423
    %s426 = sphi 0, %s425
    %s440 = sphi 0, %s426
    %s444 = sphi 0, %s444
    %s446 = sphi 0, %s444
    %s447 = sphi 0, %s446
    %s461 = sphi 0, %s447
    %s465 = sphi 0, %s465
    %s467 = sphi 0, %s465
    %s468 = sphi 0, %s467
    %s482 = sphi 0, %s468
  $region4: #{visual_encoder_forward.5} parent=0 // loop_header_branch
    %27 = sbr.rel (%p25) target = $region8
  $region5: #{visual_encoder_forward.5} parent=0 // loop_body
    %s29 = ssub.s32 %s24, 1
    %s30 = ssub.s32 %s24, 2
    %s31 = sadd.s32 %s24, 1
    %s33 = sadd.s32 %s32, 1
    %p36 = scmp.eq.s32.totalorder %s24, 1
    %p37 = scmp.ne.s32.totalorder %s32, %s34
    %p38 = scmp.eq.s32.totalorder %s24, 0
    %p39 = por %p37, %p38
    %p40 = scmp.ne.s32.totalorder %s32, %s34
    %p41 = scmp.eq.s32.totalorder %s29, 1
    %p42 = por %p40, %p41
    %p43 = scmp.ne.s32.totalorder %s34, %s35
    %p44 = scmp.eq.s32.totalorder %s29, 0
    %p45 = por %p43, %p44
    %p46 = scmp.ne.s32.totalorder %s34, %s35
    %p47 = scmp.eq.s32.totalorder %s30, 1
    %p48 = por %p46, %p47
    %p50 = scmp.ne.s32.totalorder %s35, %s49
    %p51 = scmp.eq.s32.totalorder %s30, 0
    %p52 = por %p50, %p51
    %s54 = sadd.s32 %s53, 1
    %p57 = scmp.eq.s32.totalorder %s24, 1
    %p58 = scmp.ne.s32.totalorder %s53, %s55
    %p59 = scmp.eq.s32.totalorder %s24, 0
    %p60 = por %p58, %p59
    %p61 = scmp.ne.s32.totalorder %s53, %s55
    %p62 = scmp.eq.s32.totalorder %s29, 1
    %p63 = por %p61, %p62
    %p64 = scmp.ne.s32.totalorder %s55, %s56
    %p65 = scmp.eq.s32.totalorder %s29, 0
    %p66 = por %p64, %p65
    %p67 = scmp.ne.s32.totalorder %s55, %s56
    %p68 = scmp.eq.s32.totalorder %s30, 1
    %p69 = por %p67, %p68
    %p71 = scmp.ne.s32.totalorder %s56, %s70
    %p72 = scmp.eq.s32.totalorder %s30, 0
    %p73 = por %p71, %p72
    %s75 = sadd.s32 %s74, 1
    %p78 = scmp.eq.s32.totalorder %s24, 1
    %p79 = scmp.ne.s32.totalorder %s74, %s76
    %p80 = scmp.eq.s32.totalorder %s24, 0
    %p81 = por %p79, %p80
    %p82 = scmp.ne.s32.totalorder %s74, %s76
    %p83 = scmp.eq.s32.totalorder %s29, 1
    %p84 = por %p82, %p83
    %p85 = scmp.ne.s32.totalorder %s76, %s77
    %p86 = scmp.eq.s32.totalorder %s29, 0
    %p87 = por %p85, %p86
    %p88 = scmp.ne.s32.totalorder %s76, %s77
    %p89 = scmp.eq.s32.totalorder %s30, 1
    %p90 = por %p88, %p89
    %p92 = scmp.ne.s32.totalorder %s77, %s91
    %p93 = scmp.eq.s32.totalorder %s30, 0
    %p94 = por %p92, %p93
    %s96 = sadd.s32 %s95, 1
    %p99 = scmp.eq.s32.totalorder %s24, 1
    %p100 = scmp.ne.s32.totalorder %s95, %s97
    %p101 = scmp.eq.s32.totalorder %s24, 0
    %p102 = por %p100, %p101
    %p103 = scmp.ne.s32.totalorder %s95, %s97
    %p104 = scmp.eq.s32.totalorder %s29, 1
    %p105 = por %p103, %p104
    %p106 = scmp.ne.s32.totalorder %s97, %s98
    %p107 = scmp.eq.s32.totalorder %s29, 0
    %p108 = por %p106, %p107
    %p109 = scmp.ne.s32.totalorder %s97, %s98
    %p110 = scmp.eq.s32.totalorder %s30, 1
    %p111 = por %p109, %p110
    %p113 = scmp.ne.s32.totalorder %s98, %s112
    %p114 = scmp.eq.s32.totalorder %s30, 0
    %p115 = por %p113, %p114
    %s117 = sadd.s32 %s116, 1
    %p120 = scmp.eq.s32.totalorder %s24, 1
    %p121 = scmp.ne.s32.totalorder %s116, %s118
    %p122 = scmp.eq.s32.totalorder %s24, 0
    %p123 = por %p121, %p122
    %p124 = scmp.ne.s32.totalorder %s116, %s118
    %p125 = scmp.eq.s32.totalorder %s29, 1
    %p126 = por %p124, %p125
    %p127 = scmp.ne.s32.totalorder %s118, %s119
    %p128 = scmp.eq.s32.totalorder %s29, 0
    %p129 = por %p127, %p128
    %p130 = scmp.ne.s32.totalorder %s118, %s119
    %p131 = scmp.eq.s32.totalorder %s30, 1
    %p132 = por %p130, %p131
    %p134 = scmp.ne.s32.totalorder %s119, %s133
    %p135 = scmp.eq.s32.totalorder %s30, 0
    %p136 = por %p134, %p135
    %s137 = ssub.s32 %s24, %s31
    %p138 = scmp.eq.s32.totalorder %s137, 0
    %s140 = sadd.s32 %s139, 1
    %s141 = scalar_select %p138, %s139, %s140
    %p144 = pneg %p138
    %p145 = scmp.eq.s32.totalorder %s24, 1
    %p146 = por %p144, %p145
    %p147 = scmp.ne.s32.totalorder %s139, %s142
    %p148 = scmp.eq.s32.totalorder %s24, 0
    %p149 = por %p147, %p148
    %p150 = scmp.ne.s32.totalorder %s139, %s142
    %p151 = scmp.eq.s32.totalorder %s29, 1
    %p152 = por %p150, %p151
    %p153 = scmp.ne.s32.totalorder %s142, %s143
    %p154 = scmp.eq.s32.totalorder %s29, 0
    %p155 = por %p153, %p154
    %p156 = scmp.ne.s32.totalorder %s142, %s143
    %p157 = scmp.eq.s32.totalorder %s30, 1
    %p158 = por %p156, %p157
    %p160 = scmp.ne.s32.totalorder %s143, %s159
    %p161 = scmp.eq.s32.totalorder %s30, 0
    %p162 = por %p160, %p161
    %s163 = ssub.s32 %s24, %s31
    %p164 = scmp.eq.s32.totalorder %s163, 0
    %s166 = sadd.s32 %s165, 1
    %s167 = scalar_select %p164, %s165, %s166
    %p170 = pneg %p164
    %p171 = scmp.eq.s32.totalorder %s24, 1
    %p172 = por %p170, %p171
    %p173 = scmp.ne.s32.totalorder %s165, %s168
    %p174 = scmp.eq.s32.totalorder %s24, 0
    %p175 = por %p173, %p174
    %p176 = scmp.ne.s32.totalorder %s165, %s168
    %p177 = scmp.eq.s32.totalorder %s29, 1
    %p178 = por %p176, %p177
    %p179 = scmp.ne.s32.totalorder %s168, %s169
    %p180 = scmp.eq.s32.totalorder %s29, 0
    %p181 = por %p179, %p180
    %p182 = scmp.ne.s32.totalorder %s168, %s169
    %p183 = scmp.eq.s32.totalorder %s30, 1
    %p184 = por %p182, %p183
    %p186 = scmp.ne.s32.totalorder %s169, %s185
    %p187 = scmp.eq.s32.totalorder %s30, 0
    %p188 = por %p186, %p187
    %s189 = ssub.s32 %s24, %s31
    %p190 = scmp.eq.s32.totalorder %s189, 0
    %s192 = sadd.s32 %s191, 1
    %s193 = scalar_select %p190, %s191, %s192
    %p196 = pneg %p190
    %p197 = scmp.eq.s32.totalorder %s24, 1
    %p198 = por %p196, %p197
    %p199 = scmp.ne.s32.totalorder %s191, %s194
    %p200 = scmp.eq.s32.totalorder %s24, 0
    %p201 = por %p199, %p200
    %p202 = scmp.ne.s32.totalorder %s191, %s194
    %p203 = scmp.eq.s32.totalorder %s29, 1
    %p204 = por %p202, %p203
    %p205 = scmp.ne.s32.totalorder %s194, %s195
    %p206 = scmp.eq.s32.totalorder %s29, 0
    %p207 = por %p205, %p206
    %p208 = scmp.ne.s32.totalorder %s194, %s195
    %p209 = scmp.eq.s32.totalorder %s30, 1
    %p210 = por %p208, %p209
    %p212 = scmp.ne.s32.totalorder %s195, %s211
    %p213 = scmp.eq.s32.totalorder %s30, 0
    %p214 = por %p212, %p213
    %s215 = ssub.s32 %s24, %s31
    %p216 = scmp.eq.s32.totalorder %s215, 0
    %s218 = sadd.s32 %s217, 1
    %s219 = scalar_select %p216, %s217, %s218
    %p222 = pneg %p216
    %p223 = scmp.eq.s32.totalorder %s24, 1
    %p224 = por %p222, %p223
    %p225 = scmp.ne.s32.totalorder %s217, %s220
    %p226 = scmp.eq.s32.totalorder %s24, 0
    %p227 = por %p225, %p226
    %p228 = scmp.ne.s32.totalorder %s217, %s220
    %p229 = scmp.eq.s32.totalorder %s29, 1
    %p230 = por %p228, %p229
    %p231 = scmp.ne.s32.totalorder %s220, %s221
    %p232 = scmp.eq.s32.totalorder %s29, 0
    %p233 = por %p231, %p232
    %p234 = scmp.ne.s32.totalorder %s220, %s221
    %p235 = scmp.eq.s32.totalorder %s30, 1
    %p236 = por %p234, %p235
    %p238 = scmp.ne.s32.totalorder %s221, %s237
    %p239 = scmp.eq.s32.totalorder %s30, 0
    %p240 = por %p238, %p239
    %s241 = ssub.s32 %s24, %s31
    %p242 = scmp.eq.s32.totalorder %s241, 0
    %s244 = sadd.s32 %s243, 1
    %s245 = scalar_select %p242, %s243, %s244
    %p248 = pneg %p242
    %p249 = scmp.eq.s32.totalorder %s24, 1
    %p250 = por %p248, %p249
    %p251 = scmp.ne.s32.totalorder %s243, %s246
    %p252 = scmp.eq.s32.totalorder %s24, 0
    %p253 = por %p251, %p252
    %p254 = scmp.ne.s32.totalorder %s243, %s246
    %p255 = scmp.eq.s32.totalorder %s29, 1
    %p256 = por %p254, %p255
    %p257 = scmp.ne.s32.totalorder %s246, %s247
    %p258 = scmp.eq.s32.totalorder %s29, 0
    %p259 = por %p257, %p258
    %p260 = scmp.ne.s32.totalorder %s246, %s247
    %p261 = scmp.eq.s32.totalorder %s30, 1
    %p262 = por %p260, %p261
    %p264 = scmp.ne.s32.totalorder %s247, %s263
    %p265 = scmp.eq.s32.totalorder %s30, 0
    %p266 = por %p264, %p265
    %s267 = ssub.s32 %s24, %s31
    %p268 = scmp.eq.s32.totalorder %s267, 0
    %s270 = sadd.s32 %s269, 1
    %s271 = scalar_select %p268, %s269, %s270
    %p274 = pneg %p268
    %p275 = scmp.eq.s32.totalorder %s24, 1
    %p276 = por %p274, %p275
    %p277 = scmp.ne.s32.totalorder %s269, %s272
    %p278 = scmp.eq.s32.totalorder %s24, 0
    %p279 = por %p277, %p278
    %p280 = scmp.ne.s32.totalorder %s269, %s272
    %p281 = scmp.eq.s32.totalorder %s29, 1
    %p282 = por %p280, %p281
    %p283 = scmp.ne.s32.totalorder %s272, %s273
    %p284 = scmp.eq.s32.totalorder %s29, 0
    %p285 = por %p283, %p284
    %p286 = scmp.ne.s32.totalorder %s272, %s273
    %p287 = scmp.eq.s32.totalorder %s30, 1
    %p288 = por %p286, %p287
    %p290 = scmp.ne.s32.totalorder %s273, %s289
    %p291 = scmp.eq.s32.totalorder %s30, 0
    %p292 = por %p290, %p291
    %s293 = ssub.s32 %s24, %s31
    %p294 = scmp.eq.s32.totalorder %s293, 0
    %s296 = sadd.s32 %s295, 1
    %s297 = scalar_select %p294, %s295, %s296
    %p300 = pneg %p294
    %p301 = scmp.eq.s32.totalorder %s24, 1
    %p302 = por %p300, %p301
    %p303 = scmp.ne.s32.totalorder %s295, %s298
    %p304 = scmp.eq.s32.totalorder %s24, 0
    %p305 = por %p303, %p304
    %p306 = scmp.ne.s32.totalorder %s295, %s298
    %p307 = scmp.eq.s32.totalorder %s29, 1
    %p308 = por %p306, %p307
    %p309 = scmp.ne.s32.totalorder %s298, %s299
    %p310 = scmp.eq.s32.totalorder %s29, 0
    %p311 = por %p309, %p310
    %p312 = scmp.ne.s32.totalorder %s298, %s299
    %p313 = scmp.eq.s32.totalorder %s30, 1
    %p314 = por %p312, %p313
    %p316 = scmp.ne.s32.totalorder %s299, %s315
    %p317 = scmp.eq.s32.totalorder %s30, 0
    %p318 = por %p316, %p317
    %s319 = ssub.s32 %s24, %s31
    %p320 = scmp.eq.s32.totalorder %s319, 0
    %s322 = sadd.s32 %s321, 1
    %s323 = scalar_select %p320, %s321, %s322
    %p326 = pneg %p320
    %p327 = scmp.eq.s32.totalorder %s24, 1
    %p328 = por %p326, %p327
    %p329 = scmp.ne.s32.totalorder %s321, %s324
    %p330 = scmp.eq.s32.totalorder %s24, 0
    %p331 = por %p329, %p330
    %p332 = scmp.ne.s32.totalorder %s321, %s324
    %p333 = scmp.eq.s32.totalorder %s29, 1
    %p334 = por %p332, %p333
    %p335 = scmp.ne.s32.totalorder %s324, %s325
    %p336 = scmp.eq.s32.totalorder %s29, 0
    %p337 = por %p335, %p336
    %p338 = scmp.ne.s32.totalorder %s324, %s325
    %p339 = scmp.eq.s32.totalorder %s30, 1
    %p340 = por %p338, %p339
    %p342 = scmp.ne.s32.totalorder %s325, %s341
    %p343 = scmp.eq.s32.totalorder %s30, 0
    %p344 = por %p342, %p343
    %s345 = ssub.s32 %s24, %s31
    %p346 = scmp.eq.s32.totalorder %s345, 0
    %s348 = sadd.s32 %s347, 1
    %s349 = scalar_select %p346, %s347, %s348
    %p352 = pneg %p346
    %p353 = scmp.eq.s32.totalorder %s24, 1
    %p354 = por %p352, %p353
    %p355 = scmp.ne.s32.totalorder %s347, %s350
    %p356 = scmp.eq.s32.totalorder %s24, 0
    %p357 = por %p355, %p356
    %p358 = scmp.ne.s32.totalorder %s347, %s350
    %p359 = scmp.eq.s32.totalorder %s29, 1
    %p360 = por %p358, %p359
    %p361 = scmp.ne.s32.totalorder %s350, %s351
    %p362 = scmp.eq.s32.totalorder %s29, 0
    %p363 = por %p361, %p362
    %p364 = scmp.ne.s32.totalorder %s350, %s351
    %p365 = scmp.eq.s32.totalorder %s30, 1
    %p366 = por %p364, %p365
    %p368 = scmp.ne.s32.totalorder %s351, %s367
    %p369 = scmp.eq.s32.totalorder %s30, 0
    %p370 = por %p368, %p369
    %s371 = ssub.s32 %s24, %s31
    %p372 = scmp.eq.s32.totalorder %s371, 0
    %s374 = sadd.s32 %s373, 1
    %s375 = scalar_select %p372, %s373, %s374
    %p378 = pneg %p372
    %p379 = scmp.eq.s32.totalorder %s24, 1
    %p380 = por %p378, %p379
    %p381 = scmp.ne.s32.totalorder %s373, %s376
    %p382 = scmp.eq.s32.totalorder %s24, 0
    %p383 = por %p381, %p382
    %p384 = scmp.ne.s32.totalorder %s373, %s376
    %p385 = scmp.eq.s32.totalorder %s29, 1
    %p386 = por %p384, %p385
    %p387 = scmp.ne.s32.totalorder %s376, %s377
    %p388 = scmp.eq.s32.totalorder %s29, 0
    %p389 = por %p387, %p388
    %p390 = scmp.ne.s32.totalorder %s376, %s377
    %p391 = scmp.eq.s32.totalorder %s30, 1
    %p392 = por %p390, %p391
    %p394 = scmp.ne.s32.totalorder %s377, %s393
    %p395 = scmp.eq.s32.totalorder %s30, 0
    %p396 = por %p394, %p395
    %s397 = ssub.s32 %s24, %s31
    %p398 = scmp.eq.s32.totalorder %s397, 0
    %s400 = sadd.s32 %s399, 1
    %s401 = scalar_select %p398, %s399, %s400
    %p404 = pneg %p398
    %p405 = scmp.eq.s32.totalorder %s24, 1
    %p406 = por %p404, %p405
    %p407 = scmp.ne.s32.totalorder %s399, %s402
    %p408 = scmp.eq.s32.totalorder %s24, 0
    %p409 = por %p407, %p408
    %p410 = scmp.ne.s32.totalorder %s399, %s402
    %p411 = scmp.eq.s32.totalorder %s29, 1
    %p412 = por %p410, %p411
    %p413 = scmp.ne.s32.totalorder %s402, %s403
    %p414 = scmp.eq.s32.totalorder %s29, 0
    %p415 = por %p413, %p414
    %p416 = scmp.ne.s32.totalorder %s402, %s403
    %p417 = scmp.eq.s32.totalorder %s30, 1
    %p418 = por %p416, %p417
    %p420 = scmp.ne.s32.totalorder %s403, %s419
    %p421 = scmp.eq.s32.totalorder %s30, 0
    %p422 = por %p420, %p421
    %s424 = sadd.s32 %s423, 1
    %p427 = scmp.eq.s32.totalorder %s24, 1
    %p428 = scmp.ne.s32.totalorder %s423, %s425
    %p429 = scmp.eq.s32.totalorder %s24, 0
    %p430 = por %p428, %p429
    %p431 = scmp.ne.s32.totalorder %s423, %s425
    %p432 = scmp.eq.s32.totalorder %s29, 1
    %p433 = por %p431, %p432
    %p434 = scmp.ne.s32.totalorder %s425, %s426
    %p435 = scmp.eq.s32.totalorder %s29, 0
    %p436 = por %p434, %p435
    %p437 = scmp.ne.s32.totalorder %s425, %s426
    %p438 = scmp.eq.s32.totalorder %s30, 1
    %p439 = por %p437, %p438
    %p441 = scmp.ne.s32.totalorder %s426, %s440
    %p442 = scmp.eq.s32.totalorder %s30, 0
    %p443 = por %p441, %p442
    %s445 = sadd.s32 %s444, 1
    %p448 = scmp.eq.s32.totalorder %s24, 1
    %p449 = scmp.ne.s32.totalorder %s444, %s446
    %p450 = scmp.eq.s32.totalorder %s24, 0
    %p451 = por %p449, %p450
    %p452 = scmp.ne.s32.totalorder %s444, %s446
    %p453 = scmp.eq.s32.totalorder %s29, 1
    %p454 = por %p452, %p453
    %p455 = scmp.ne.s32.totalorder %s446, %s447
    %p456 = scmp.eq.s32.totalorder %s29, 0
    %p457 = por %p455, %p456
    %p458 = scmp.ne.s32.totalorder %s446, %s447
    %p459 = scmp.eq.s32.totalorder %s30, 1
    %p460 = por %p458, %p459
    %p462 = scmp.ne.s32.totalorder %s447, %s461
    %p463 = scmp.eq.s32.totalorder %s30, 0
    %p464 = por %p462, %p463
    %s466 = sadd.s32 %s465, 1
    %p469 = scmp.eq.s32.totalorder %s24, 1
    %p470 = scmp.ne.s32.totalorder %s465, %s467
    %p471 = scmp.eq.s32.totalorder %s24, 0
    %p472 = por %p470, %p471
    %p473 = scmp.ne.s32.totalorder %s465, %s467
    %p474 = scmp.eq.s32.totalorder %s29, 1
    %p475 = por %p473, %p474
    %p476 = scmp.ne.s32.totalorder %s467, %s468
    %p477 = scmp.eq.s32.totalorder %s29, 0
    %p478 = por %p476, %p477
    %p479 = scmp.ne.s32.totalorder %s467, %s468
    %p480 = scmp.eq.s32.totalorder %s30, 1
    %p481 = por %p479, %p480
    %p483 = scmp.ne.s32.totalorder %s468, %s482
    %p484 = scmp.eq.s32.totalorder %s30, 0
    %p485 = por %p483, %p484
    %p486 = scmp.le.s32.totalorder 1, %s24
    %p487 = scmp.lt.s32.totalorder %s24, 3
    %p488 = pnand %p486, %p487
    %p489 = pneg %p488
    // Predicated region
    $region9: #{visual_encoder_forward.5} parent=5 // pred_check
      _
    $region10: #{visual_encoder_forward.5} parent=5 // pred_check_branch
      %491 = sbr.rel (%p488) target = $region12
    $region11: #{visual_encoder_forward.5} parent=5 // pred_region
      %s492 = ssub.s32 %s24, 1
      // Predicated region
      $region13: #{visual_encoder_forward.5} parent=11 // pred_check
        %p493 = pneg %p45
      $region14: #{visual_encoder_forward.5} parent=11 // pred_check_branch
        %495 = sbr.rel (%p493) target = $region16
      $region15: #{visual_encoder_forward.5} parent=11 // pred_region
        _
      $region16: #{visual_encoder_forward.5} parent=11 // pred_fallthru
        _
      // Predicated region
      $region17: #{visual_encoder_forward.5} parent=11 // pred_check
        %p496 = pneg %p66
      $region18: #{visual_encoder_forward.5} parent=11 // pred_check_branch
        %498 = sbr.rel (%p496) target = $region20
      $region19: #{visual_encoder_forward.5} parent=11 // pred_region
        _
      $region20: #{visual_encoder_forward.5} parent=11 // pred_fallthru
        _
      // Predicated region
      $region21: #{visual_encoder_forward.5} parent=11 // pred_check
        %p499 = pneg %p87
      $region22: #{visual_encoder_forward.5} parent=11 // pred_check_branch
        %501 = sbr.rel (%p499) target = $region24
      $region23: #{visual_encoder_forward.5} parent=11 // pred_region
        _
      $region24: #{visual_encoder_forward.5} parent=11 // pred_fallthru
        _
      // Predicated region
      $region25: #{visual_encoder_forward.5} parent=11 // pred_check
        %p502 = pneg %p108
      $region26: #{visual_encoder_forward.5} parent=11 // pred_check_branch
        %504 = sbr.rel (%p502) target = $region28
      $region27: #{visual_encoder_forward.5} parent=11 // pred_region
        _
      $region28: #{visual_encoder_forward.5} parent=11 // pred_fallthru
        _
      // Predicated region
      $region29: #{visual_encoder_forward.5} parent=11 // pred_check
        %p505 = pneg %p129
      $region30: #{visual_encoder_forward.5} parent=11 // pred_check_branch
        %507 = sbr.rel (%p505) target = $region32
      $region31: #{visual_encoder_forward.5} parent=11 // pred_region
        _
      $region32: #{visual_encoder_forward.5} parent=11 // pred_fallthru
        _
      // Predicated region
      $region33: #{visual_encoder_forward.5} parent=11 // pred_check
        %p508 = pneg %p436
      $region34: #{visual_encoder_forward.5} parent=11 // pred_check_branch
        %510 = sbr.rel (%p508) target = $region36
      $region35: #{visual_encoder_forward.5} parent=11 // pred_region
        _
      $region36: #{visual_encoder_forward.5} parent=11 // pred_fallthru
        _
      // Predicated region
      $region37: #{visual_encoder_forward.5} parent=11 // pred_check
        %p511 = pneg %p457
      $region38: #{visual_encoder_forward.5} parent=11 // pred_check_branch
        %513 = sbr.rel (%p511) target = $region40
      $region39: #{visual_encoder_forward.5} parent=11 // pred_region
        _
      $region40: #{visual_encoder_forward.5} parent=11 // pred_fallthru
        _
    $region12: #{visual_encoder_forward.5} parent=5 // pred_fallthru
      _
    %p514 = scmp.lt.s32.totalorder %s24, 2
    // Predicated region
    $region41: #{visual_encoder_forward.5} parent=5 // pred_check
      %p515 = pneg %p514
    $region42: #{visual_encoder_forward.5} parent=5 // pred_check_branch
      %517 = sbr.rel (%p515) target = $region44
    $region43: #{visual_encoder_forward.5} parent=5 // pred_region
      // Predicated region
      $region45: #{visual_encoder_forward.5} parent=43 // pred_check
        %p518 = pneg %p149
      $region46: #{visual_encoder_forward.5} parent=43 // pred_check_branch
        %520 = sbr.rel (%p518) target = $region48
      $region47: #{visual_encoder_forward.5} parent=43 // pred_region
        %p521 = scmp.lt.s32.totalorder %s24, 1
        %s522 = scalar_select %p521, %s24, 1
        %s523 = scalar_lea.vmem %s5, %s522
      $region48: #{visual_encoder_forward.5} parent=43 // pred_fallthru
        _
      // Predicated region
      $region49: #{visual_encoder_forward.5} parent=43 // pred_check
        %p524 = pneg %p175
      $region50: #{visual_encoder_forward.5} parent=43 // pred_check_branch
        %526 = sbr.rel (%p524) target = $region52
      $region51: #{visual_encoder_forward.5} parent=43 // pred_region
        %p527 = scmp.lt.s32.totalorder %s24, 1
        %s528 = scalar_select %p527, %s24, 1
        %s529 = scalar_lea.vmem %s6, %s528
      $region52: #{visual_encoder_forward.5} parent=43 // pred_fallthru
        _
      // Predicated region
      $region53: #{visual_encoder_forward.5} parent=43 // pred_check
        %p530 = pneg %p201
      $region54: #{visual_encoder_forward.5} parent=43 // pred_check_branch
        %532 = sbr.rel (%p530) target = $region56
      $region55: #{visual_encoder_forward.5} parent=43 // pred_region
        %p533 = scmp.lt.s32.totalorder %s24, 1
        %s534 = scalar_select %p533, %s24, 1
        %s535 = smul.addr %s534, 4
        %s536 = smul.addr %s535, 8
        %s537 = scalar_lea.vmem %s7, %s536
      $region56: #{visual_encoder_forward.5} parent=43 // pred_fallthru
        _
      // Predicated region
      $region57: #{visual_encoder_forward.5} parent=43 // pred_check
        %p538 = pneg %p227
      $region58: #{visual_encoder_forward.5} parent=43 // pred_check_branch
        %540 = sbr.rel (%p538) target = $region60
      $region59: #{visual_encoder_forward.5} parent=43 // pred_region
        %p541 = scmp.lt.s32.totalorder %s24, 1
        %s542 = scalar_select %p541, %s24, 1
        %s543 = smul.addr %s542, 4
        %s544 = smul.addr %s543, 8
        %s545 = scalar_lea.vmem %s8, %s544
      $region60: #{visual_encoder_forward.5} parent=43 // pred_fallthru
        _
      // Predicated region
      $region61: #{visual_encoder_forward.5} parent=43 // pred_check
        %p546 = pneg %p253
      $region62: #{visual_encoder_forward.5} parent=43 // pred_check_branch
        %548 = sbr.rel (%p546) target = $region64
      $region63: #{visual_encoder_forward.5} parent=43 // pred_region
        %p549 = scmp.lt.s32.totalorder %s24, 1
        %s550 = scalar_select %p549, %s24, 1
        %s551 = scalar_lea.vmem %s9, %s550
      $region64: #{visual_encoder_forward.5} parent=43 // pred_fallthru
        _
      // Predicated region
      $region65: #{visual_encoder_forward.5} parent=43 // pred_check
        %p552 = pneg %p279
      $region66: #{visual_encoder_forward.5} parent=43 // pred_check_branch
        %554 = sbr.rel (%p552) target = $region68
      $region67: #{visual_encoder_forward.5} parent=43 // pred_region
        %p555 = scmp.lt.s32.totalorder %s24, 1
        %s556 = scalar_select %p555, %s24, 1
        %s557 = scalar_lea.vmem %s10, %s556
      $region68: #{visual_encoder_forward.5} parent=43 // pred_fallthru
        _
      // Predicated region
      $region69: #{visual_encoder_forward.5} parent=43 // pred_check
        %p558 = pneg %p305
      $region70: #{visual_encoder_forward.5} parent=43 // pred_check_branch
        %560 = sbr.rel (%p558) target = $region72
      $region71: #{visual_encoder_forward.5} parent=43 // pred_region
        %p561 = scmp.lt.s32.totalorder %s24, 1
        %s562 = scalar_select %p561, %s24, 1
        %s563 = scalar_lea.vmem %s11, %s562
      $region72: #{visual_encoder_forward.5} parent=43 // pred_fallthru
        _
      // Predicated region
      $region73: #{visual_encoder_forward.5} parent=43 // pred_check
        %p564 = pneg %p331
      $region74: #{visual_encoder_forward.5} parent=43 // pred_check_branch
        %566 = sbr.rel (%p564) target = $region76
      $region75: #{visual_encoder_forward.5} parent=43 // pred_region
        %p567 = scmp.lt.s32.totalorder %s24, 1
        %s568 = scalar_select %p567, %s24, 1
        %s569 = smul.addr %s568, 4
        %s570 = smul.addr %s569, 8
        %s571 = scalar_lea.vmem %s12, %s570
      $region76: #{visual_encoder_forward.5} parent=43 // pred_fallthru
        _
      // Predicated region
      $region77: #{visual_encoder_forward.5} parent=43 // pred_check
        %p572 = pneg %p357
      $region78: #{visual_encoder_forward.5} parent=43 // pred_check_branch
        %574 = sbr.rel (%p572) target = $region80
      $region79: #{visual_encoder_forward.5} parent=43 // pred_region
        %p575 = scmp.lt.s32.totalorder %s24, 1
        %s576 = scalar_select %p575, %s24, 1
        %s577 = scalar_lea.vmem %s13, %s576
      $region80: #{visual_encoder_forward.5} parent=43 // pred_fallthru
        _
      // Predicated region
      $region81: #{visual_encoder_forward.5} parent=43 // pred_check
        %p578 = pneg %p383
      $region82: #{visual_encoder_forward.5} parent=43 // pred_check_branch
        %580 = sbr.rel (%p578) target = $region84
      $region83: #{visual_encoder_forward.5} parent=43 // pred_region
        %p581 = scmp.lt.s32.totalorder %s24, 1
        %s582 = scalar_select %p581, %s24, 1
        %s583 = smul.addr %s582, 16
        %s584 = smul.addr %s583, 8
        %s585 = scalar_lea.vmem %s14, %s584
      $region84: #{visual_encoder_forward.5} parent=43 // pred_fallthru
        _
      // Predicated region
      $region85: #{visual_encoder_forward.5} parent=43 // pred_check
        %p586 = pneg %p409
      $region86: #{visual_encoder_forward.5} parent=43 // pred_check_branch
        %588 = sbr.rel (%p586) target = $region88
      $region87: #{visual_encoder_forward.5} parent=43 // pred_region
        %p589 = scmp.lt.s32.totalorder %s24, 1
        %s590 = scalar_select %p589, %s24, 1
        %s591 = scalar_lea.vmem %s15, %s590
      $region88: #{visual_encoder_forward.5} parent=43 // pred_fallthru
        _
    $region44: #{visual_encoder_forward.5} parent=5 // pred_fallthru
      _
    %p592 = scmp.le.s32.totalorder 1, %s24
    %p593 = scmp.lt.s32.totalorder %s24, 3
    %p594 = pnand %p592, %p593
    %p595 = pneg %p594
    // Predicated region
    $region89: #{visual_encoder_forward.5} parent=5 // pred_check
      _
    $region90: #{visual_encoder_forward.5} parent=5 // pred_check_branch
      %597 = sbr.rel (%p594) target = $region92
    $region91: #{visual_encoder_forward.5} parent=5 // pred_region
      %s598 = ssub.s32 %s24, 1
      %p599 = pneg %p45
      %p600 = pneg %p42
      %p601 = pneg %p66
      %p602 = pneg %p63
      %p603 = pneg %p87
      %p604 = pneg %p84
      %p605 = pneg %p108
      %p606 = pneg %p105
      %p607 = pneg %p129
      %p608 = pneg %p126
      %p609 = scmp.lt.s32.totalorder %s29, 1
      %s610 = scalar_select %p609, %s29, 1
      %s611 = scalar_lea.vmem %s5, %s610
      %p612 = pneg %p155
      %p613 = pneg %p152
      %p614 = scmp.lt.s32.totalorder %s29, 1
      %s615 = scalar_select %p614, %s29, 1
      %s616 = scalar_lea.vmem %s6, %s615
      %p617 = pneg %p181
      %p618 = pneg %p178
      %p619 = scmp.lt.s32.totalorder %s29, 1
      %s620 = scalar_select %p619, %s29, 1
      %s621 = smul.addr %s620, 4
      %s622 = smul.addr %s621, 8
      %s623 = scalar_lea.vmem %s7, %s622
      %p624 = pneg %p207
      %p625 = pneg %p204
      %p626 = scmp.lt.s32.totalorder %s29, 1
      %s627 = scalar_select %p626, %s29, 1
      %s628 = smul.addr %s627, 4
      %s629 = smul.addr %s628, 8
      %s630 = scalar_lea.vmem %s8, %s629
      %p631 = pneg %p233
      %p632 = pneg %p230
      %p633 = scmp.lt.s32.totalorder %s29, 1
      %s634 = scalar_select %p633, %s29, 1
      %s635 = scalar_lea.vmem %s9, %s634
      %p636 = pneg %p259
      %p637 = pneg %p256
      %p638 = scmp.lt.s32.totalorder %s29, 1
      %s639 = scalar_select %p638, %s29, 1
      %s640 = scalar_lea.vmem %s10, %s639
      %p641 = pneg %p285
      %p642 = pneg %p282
      %p643 = scmp.lt.s32.totalorder %s29, 1
      %s644 = scalar_select %p643, %s29, 1
      %s645 = scalar_lea.vmem %s11, %s644
      %p646 = pneg %p311
      %p647 = pneg %p308
      %p648 = scmp.lt.s32.totalorder %s29, 1
      %s649 = scalar_select %p648, %s29, 1
      %s650 = smul.addr %s649, 4
      %s651 = smul.addr %s650, 8
      %s652 = scalar_lea.vmem %s12, %s651
      %p653 = pneg %p337
      %p654 = pneg %p334
      %p655 = scmp.lt.s32.totalorder %s29, 1
      %s656 = scalar_select %p655, %s29, 1
      %s657 = scalar_lea.vmem %s13, %s656
      %p658 = pneg %p363
      %p659 = pneg %p360
      %p660 = scmp.lt.s32.totalorder %s29, 1
      %s661 = scalar_select %p660, %s29, 1
      %s662 = smul.addr %s661, 16
      %s663 = smul.addr %s662, 8
      %s664 = scalar_lea.vmem %s14, %s663
      %p665 = pneg %p389
      %p666 = pneg %p386
      %p667 = scmp.lt.s32.totalorder %s29, 1
      %s668 = scalar_select %p667, %s29, 1
      %s669 = scalar_lea.vmem %s15, %s668
      %p670 = pneg %p415
      %p671 = pneg %p412
      %p672 = pneg %p436
      %p673 = pneg %p433
      %p674 = pneg %p457
      %p675 = pneg %p454
      %p676 = pneg %p478
      %p677 = pneg %p475
      %p678 = scmp.lt.s32.totalorder %s29, 1
      %s679 = scalar_select %p678, %s29, 1
      %s680 = scalar_lea.vmem %s5, %s679
      %p681 = scmp.lt.s32.totalorder %s29, 1
      %s682 = scalar_select %p681, %s29, 1
      %s683 = scalar_lea.vmem %s6, %s682
      %p684 = scmp.lt.s32.totalorder %s29, 1
      %s685 = scalar_select %p684, %s29, 1
      %s686 = smul.addr %s685, 4
      %s687 = smul.addr %s686, 8
      %s688 = scalar_lea.vmem %s7, %s687
      %p689 = scmp.lt.s32.totalorder %s29, 1
      %s690 = scalar_select %p689, %s29, 1
      %s691 = smul.addr %s690, 4
      %s692 = smul.addr %s691, 8
      %s693 = scalar_lea.vmem %s8, %s692
      %p694 = scmp.lt.s32.totalorder %s29, 1
      %s695 = scalar_select %p694, %s29, 1
      %s696 = scalar_lea.vmem %s9, %s695
      %p697 = scmp.lt.s32.totalorder %s29, 1
      %s698 = scalar_select %p697, %s29, 1
      %s699 = scalar_lea.vmem %s10, %s698
      %p700 = scmp.lt.s32.totalorder %s29, 1
      %s701 = scalar_select %p700, %s29, 1
      %s702 = scalar_lea.vmem %s11, %s701
      %p703 = scmp.lt.s32.totalorder %s29, 1
      %s704 = scalar_select %p703, %s29, 1
      %s705 = smul.addr %s704, 4
      %s706 = smul.addr %s705, 8
      %s707 = scalar_lea.vmem %s12, %s706
      %p708 = scmp.lt.s32.totalorder %s29, 1
      %s709 = scalar_select %p708, %s29, 1
      %s710 = scalar_lea.vmem %s13, %s709
      %p711 = scmp.lt.s32.totalorder %s29, 1
      %s712 = scalar_select %p711, %s29, 1
      %s713 = smul.addr %s712, 16
      %s714 = smul.addr %s713, 8
      %s715 = scalar_lea.vmem %s14, %s714
      %p716 = scmp.lt.s32.totalorder %s29, 1
      %s717 = scalar_select %p716, %s29, 1
      %s718 = scalar_lea.vmem %s15, %s717
      %p719 = scmp.eq.s32.totalorder %s29, 0
      // Predicated region
      $region93: #{visual_encoder_forward.5} parent=91 // pred_check
        %p720 = pneg %p719
      $region94: #{visual_encoder_forward.5} parent=91 // pred_check_branch
        %722 = sbr.rel (%p720) target = $region96
      $region95: #{visual_encoder_forward.5} parent=91 // pred_region
        %v723 = vld [vmem:[%s0] sm:$0xff]
        %v724 = vld [vmem:[%s0 + $0x8] sm:$0xff]
        %v725 = vld [vmem:[%s0 + $0x10] sm:$0xff]
        %v726 = vld [vmem:[%s0 + $0x18] sm:$0xff]
        %v727 = vld [vmem:[%s0 + $0x20] sm:$0xff]
        %v728 = vld [vmem:[%s0 + $0x28] sm:$0xff]
        %v729 = vld [vmem:[%s0 + $0x30] sm:$0xff]
        %v730 = vld [vmem:[%s0 + $0x38] sm:$0xff]
        %v731 = vld [vmem:[%s1] sm:$0xff]
        %v732 = vld [vmem:[%s1 + $0x8] sm:$0xff]
        %v733 = vld [vmem:[%s1 + $0x10] sm:$0xff]
        %v734 = vld [vmem:[%s1 + $0x18] sm:$0xff]
        %v735 = vld [vmem:[%s1 + $0x20] sm:$0xff]
        %v736 = vld [vmem:[%s1 + $0x28] sm:$0xff]
        %v737 = vld [vmem:[%s1 + $0x30] sm:$0xff]
        %v738 = vld [vmem:[%s1 + $0x38] sm:$0xff]
        %v739 = vld [vmem:[%s1 + $0x40] sm:$0xff]
        %v740 = vld [vmem:[%s1 + $0x48] sm:$0xff]
        %v741 = vld [vmem:[%s1 + $0x50] sm:$0xff]
        %v742 = vld [vmem:[%s1 + $0x58] sm:$0xff]
        %v743 = vld [vmem:[%s1 + $0x60] sm:$0xff]
        %v744 = vld [vmem:[%s1 + $0x68] sm:$0xff]
        %v745 = vld [vmem:[%s1 + $0x70] sm:$0xff]
        %v746 = vld [vmem:[%s1 + $0x78] sm:$0xff]
        %v747 = vld [vmem:[%s1 + $0x80] sm:$0xff]
        %v748 = vld [vmem:[%s1 + $0x88] sm:$0xff]
        %v749 = vld [vmem:[%s1 + $0x90] sm:$0xff]
        %v750 = vld [vmem:[%s1 + $0x98] sm:$0xff]
        %v751 = vld [vmem:[%s1 + $0xa0] sm:$0xff]
        %v752 = vld [vmem:[%s1 + $0xa8] sm:$0xff]
        %v753 = vld [vmem:[%s1 + $0xb0] sm:$0xff]
        %v754 = vld [vmem:[%s1 + $0xb8] sm:$0xff]
        %v755 = vld [vmem:[%s1 + $0xc0] sm:$0xff]
        %v756 = vld [vmem:[%s1 + $0xc8] sm:$0xff]
        %v757 = vld [vmem:[%s1 + $0xd0] sm:$0xff]
        %v758 = vld [vmem:[%s1 + $0xd8] sm:$0xff]
        %v759 = vld [vmem:[%s1 + $0xe0] sm:$0xff]
        %v760 = vld [vmem:[%s1 + $0xe8] sm:$0xff]
        %v761 = vld [vmem:[%s1 + $0xf0] sm:$0xff]
        %v762 = vld [vmem:[%s1 + $0xf8] sm:$0xff]
        %v763 = vld [vmem:[%s1 + $0x100] sm:$0xff]
        %v764 = vld [vmem:[%s1 + $0x108] sm:$0xff]
        %v765 = vld [vmem:[%s1 + $0x110] sm:$0xff]
        %v766 = vld [vmem:[%s1 + $0x118] sm:$0xff]
        %v767 = vld [vmem:[%s1 + $0x120] sm:$0xff]
        %v768 = vld [vmem:[%s1 + $0x128] sm:$0xff]
        %v769 = vld [vmem:[%s1 + $0x130] sm:$0xff]
        %v770 = vld [vmem:[%s1 + $0x138] sm:$0xff]
        %v771 = vld [vmem:[%s1 + $0x140] sm:$0xff]
        %v772 = vld [vmem:[%s1 + $0x148] sm:$0xff]
        %v773 = vld [vmem:[%s1 + $0x150] sm:$0xff]
        %v774 = vld [vmem:[%s1 + $0x158] sm:$0xff]
        %v775 = vld [vmem:[%s1 + $0x160] sm:$0xff]
        %v776 = vld [vmem:[%s1 + $0x168] sm:$0xff]
        %v777 = vld [vmem:[%s1 + $0x170] sm:$0xff]
        %v778 = vld [vmem:[%s1 + $0x178] sm:$0xff]
        %v779 = vld [vmem:[%s1 + $0x180] sm:$0xff]
        %v780 = vld [vmem:[%s1 + $0x188] sm:$0xff]
        %v781 = vld [vmem:[%s1 + $0x190] sm:$0xff]
        %v782 = vld [vmem:[%s1 + $0x198] sm:$0xff]
        %v783 = vld [vmem:[%s1 + $0x1a0] sm:$0xff]
        %v784 = vld [vmem:[%s1 + $0x1a8] sm:$0xff]
        %v785 = vld [vmem:[%s1 + $0x1b0] sm:$0xff]
        %v786 = vld [vmem:[%s1 + $0x1b8] sm:$0xff]
        %v787 = vld [vmem:[%s1 + $0x1c0] sm:$0xff]
        %v788 = vld [vmem:[%s1 + $0x1c8] sm:$0xff]
        %v789 = vld [vmem:[%s1 + $0x1d0] sm:$0xff]
        %v790 = vld [vmem:[%s1 + $0x1d8] sm:$0xff]
        %v791 = vld [vmem:[%s1 + $0x1e0] sm:$0xff]
        %v792 = vld [vmem:[%s1 + $0x1e8] sm:$0xff]
        %v793 = vld [vmem:[%s1 + $0x1f0] sm:$0xff]
        %v794 = vld [vmem:[%s1 + $0x1f8] sm:$0xff]
        %v795 = vld [vmem:[%s1 + $0x200] sm:$0xff]
        %v796 = vld [vmem:[%s1 + $0x208] sm:$0xff]
        %v797 = vld [vmem:[%s1 + $0x210] sm:$0xff]
        %v798 = vld [vmem:[%s1 + $0x218] sm:$0xff]
        %v799 = vld [vmem:[%s1 + $0x220] sm:$0xff]
        %v800 = vld [vmem:[%s1 + $0x228] sm:$0xff]
        %v801 = vld [vmem:[%s1 + $0x230] sm:$0xff]
        %v802 = vld [vmem:[%s1 + $0x238] sm:$0xff]
        %v803 = vld [vmem:[%s1 + $0x240] sm:$0xff]
        %v804 = vld [vmem:[%s1 + $0x248] sm:$0xff]
        %v805 = vld [vmem:[%s1 + $0x250] sm:$0xff]
        %v806 = vld [vmem:[%s1 + $0x258] sm:$0xff]
        %v807 = vld [vmem:[%s1 + $0x260] sm:$0xff]
        %v808 = vld [vmem:[%s1 + $0x268] sm:$0xff]
        %v809 = vld [vmem:[%s1 + $0x270] sm:$0xff]
        %v810 = vld [vmem:[%s1 + $0x278] sm:$0xff]
        %v811 = vld [vmem:[%s1 + $0x280] sm:$0xff]
        %v812 = vld [vmem:[%s1 + $0x288] sm:$0xff]
        %v813 = vld [vmem:[%s1 + $0x290] sm:$0xff]
        %v814 = vld [vmem:[%s1 + $0x298] sm:$0xff]
        %v815 = vld [vmem:[%s1 + $0x2a0] sm:$0xff]
        %v816 = vld [vmem:[%s1 + $0x2a8] sm:$0xff]
        %v817 = vld [vmem:[%s1 + $0x2b0] sm:$0xff]
        %v818 = vld [vmem:[%s1 + $0x2b8] sm:$0xff]
        %v819 = vld [vmem:[%s1 + $0x2c0] sm:$0xff]
        %v820 = vld [vmem:[%s1 + $0x2c8] sm:$0xff]
        %v821 = vld [vmem:[%s1 + $0x2d0] sm:$0xff]
        %v822 = vld [vmem:[%s1 + $0x2d8] sm:$0xff]
        %v823 = vld [vmem:[%s1 + $0x2e0] sm:$0xff]
        %v824 = vld [vmem:[%s1 + $0x2e8] sm:$0xff]
        %v825 = vld [vmem:[%s1 + $0x2f0] sm:$0xff]
        %v826 = vld [vmem:[%s1 + $0x2f8] sm:$0xff]
        %v827 = vld [vmem:[%s1 + $0x300] sm:$0xff]
        %v828 = vld [vmem:[%s1 + $0x308] sm:$0xff]
        %v829 = vld [vmem:[%s1 + $0x310] sm:$0xff]
        %v830 = vld [vmem:[%s1 + $0x318] sm:$0xff]
        %v831 = vld [vmem:[%s1 + $0x320] sm:$0xff]
        %v832 = vld [vmem:[%s1 + $0x328] sm:$0xff]
        %v833 = vld [vmem:[%s1 + $0x330] sm:$0xff]
        %v834 = vld [vmem:[%s1 + $0x338] sm:$0xff]
        %v835 = vld [vmem:[%s1 + $0x340] sm:$0xff]
        %v836 = vld [vmem:[%s1 + $0x348] sm:$0xff]
        %v837 = vld [vmem:[%s1 + $0x350] sm:$0xff]
        %v838 = vld [vmem:[%s1 + $0x358] sm:$0xff]
        %v839 = vld [vmem:[%s1 + $0x360] sm:$0xff]
        %v840 = vld [vmem:[%s1 + $0x368] sm:$0xff]
        %v841 = vld [vmem:[%s1 + $0x370] sm:$0xff]
        %v842 = vld [vmem:[%s1 + $0x378] sm:$0xff]
        %v843 = vld [vmem:[%s1 + $0x380] sm:$0xff]
        %v844 = vld [vmem:[%s1 + $0x388] sm:$0xff]
        %v845 = vld [vmem:[%s1 + $0x390] sm:$0xff]
        %v846 = vld [vmem:[%s1 + $0x398] sm:$0xff]
        %v847 = vld [vmem:[%s1 + $0x3a0] sm:$0xff]
        %v848 = vld [vmem:[%s1 + $0x3a8] sm:$0xff]
        %v849 = vld [vmem:[%s1 + $0x3b0] sm:$0xff]
        %v850 = vld [vmem:[%s1 + $0x3b8] sm:$0xff]
        %v851 = vld [vmem:[%s1 + $0x3c0] sm:$0xff]
        %v852 = vld [vmem:[%s1 + $0x3c8] sm:$0xff]
        %v853 = vld [vmem:[%s1 + $0x3d0] sm:$0xff]
        %v854 = vld [vmem:[%s1 + $0x3d8] sm:$0xff]
        %v855 = vld [vmem:[%s1 + $0x3e0] sm:$0xff]
        %v856 = vld [vmem:[%s1 + $0x3e8] sm:$0xff]
        %v857 = vld [vmem:[%s1 + $0x3f0] sm:$0xff]
        %v858 = vld [vmem:[%s1 + $0x3f8] sm:$0xff]
        %v859 = vld [vmem:[%s2] sm:$0x1]
        %v861 = vperm.slane %v859, 0
        %863 = vmatpush.msra.mxu0 %v746
        %864 = vmatpush.msra.mxu0 %v745
        %865 = vmatpush.msra.mxu0 %v744
        %866 = vmatpush.msra.mxu0 %v743
        %867 = vmatpush.msra.mxu0 %v742
        %868 = vmatpush.msra.mxu0 %v741
        %869 = vmatpush.msra.mxu0 %v740
        %870 = vmatpush.msra.mxu0 %v739
        %871 = vmatpush.msra.mxu0 %v738
        %872 = vmatpush.msra.mxu0 %v737
        %873 = vmatpush.msra.mxu0 %v736
        %874 = vmatpush.msra.mxu0 %v735
        %875 = vmatpush.msra.mxu0 %v734
        %876 = vmatpush.msra.mxu0 %v733
        %877 = vmatpush.msra.mxu0 %v732
        %878 = vmatpush.msra.mxu0 %v731
        %879 = vmatmul.f32.gmra.mxu0 %v723
        %v880 = vpop.f32.mrf.mxu0
        %v881 = vadd.f32 %v861, %v880
        %882 = vdwg.mxu0
        %883 = vmatpush.msra.mxu0 %v762
        %884 = vmatpush.msra.mxu0 %v761
        %885 = vmatpush.msra.mxu0 %v760
        %886 = vmatpush.msra.mxu0 %v759
        %887 = vmatpush.msra.mxu0 %v758
        %888 = vmatpush.msra.mxu0 %v757
        %889 = vmatpush.msra.mxu0 %v756
        %890 = vmatpush.msra.mxu0 %v755
        %891 = vmatpush.msra.mxu0 %v754
        %892 = vmatpush.msra.mxu0 %v753
        %893 = vmatpush.msra.mxu0 %v752
        %894 = vmatpush.msra.mxu0 %v751
        %895 = vmatpush.msra.mxu0 %v750
        %896 = vmatpush.msra.mxu0 %v749
        %897 = vmatpush.msra.mxu0 %v748
        %898 = vmatpush.msra.mxu0 %v747
        %899 = vmatmul.f32.gmra.mxu0 %v724
        %v900 = vpop.f32.mrf.mxu0
        %v901 = vadd.f32 %v881, %v900
        %902 = vdwg.mxu0
        %903 = vmatpush.msra.mxu0 %v778
        %904 = vmatpush.msra.mxu0 %v777
        %905 = vmatpush.msra.mxu0 %v776
        %906 = vmatpush.msra.mxu0 %v775
        %907 = vmatpush.msra.mxu0 %v774
        %908 = vmatpush.msra.mxu0 %v773
        %909 = vmatpush.msra.mxu0 %v772
        %910 = vmatpush.msra.mxu0 %v771
        %911 = vmatpush.msra.mxu0 %v770
        %912 = vmatpush.msra.mxu0 %v769
        %913 = vmatpush.msra.mxu0 %v768
        %914 = vmatpush.msra.mxu0 %v767
        %915 = vmatpush.msra.mxu0 %v766
        %916 = vmatpush.msra.mxu0 %v765
        %917 = vmatpush.msra.mxu0 %v764
        %918 = vmatpush.msra.mxu0 %v763
        %919 = vmatmul.f32.gmra.mxu0 %v725
        %v920 = vpop.f32.mrf.mxu0
        %v921 = vadd.f32 %v901, %v920
        %922 = vdwg.mxu0
        %923 = vmatpush.msra.mxu0 %v794
        %924 = vmatpush.msra.mxu0 %v793
        %925 = vmatpush.msra.mxu0 %v792
        %926 = vmatpush.msra.mxu0 %v791
        %927 = vmatpush.msra.mxu0 %v790
        %928 = vmatpush.msra.mxu0 %v789
        %929 = vmatpush.msra.mxu0 %v788
        %930 = vmatpush.msra.mxu0 %v787
        %931 = vmatpush.msra.mxu0 %v786
        %932 = vmatpush.msra.mxu0 %v785
        %933 = vmatpush.msra.mxu0 %v784
        %934 = vmatpush.msra.mxu0 %v783
        %935 = vmatpush.msra.mxu0 %v782
        %936 = vmatpush.msra.mxu0 %v781
        %937 = vmatpush.msra.mxu0 %v780
        %938 = vmatpush.msra.mxu0 %v779
        %939 = vmatmul.f32.gmra.mxu0 %v726
        %v940 = vpop.f32.mrf.mxu0
        %v941 = vadd.f32 %v921, %v940
        %942 = vdwg.mxu0
        %943 = vmatpush.msra.mxu0 %v810
        %944 = vmatpush.msra.mxu0 %v809
        %945 = vmatpush.msra.mxu0 %v808
        %946 = vmatpush.msra.mxu0 %v807
        %947 = vmatpush.msra.mxu0 %v806
        %948 = vmatpush.msra.mxu0 %v805
        %949 = vmatpush.msra.mxu0 %v804
        %950 = vmatpush.msra.mxu0 %v803
        %951 = vmatpush.msra.mxu0 %v802
        %952 = vmatpush.msra.mxu0 %v801
        %953 = vmatpush.msra.mxu0 %v800
        %954 = vmatpush.msra.mxu0 %v799
        %955 = vmatpush.msra.mxu0 %v798
        %956 = vmatpush.msra.mxu0 %v797
        %957 = vmatpush.msra.mxu0 %v796
        %958 = vmatpush.msra.mxu0 %v795
        %959 = vmatmul.f32.gmra.mxu0 %v727
        %v960 = vpop.f32.mrf.mxu0
        %v961 = vadd.f32 %v941, %v960
        %962 = vdwg.mxu0
        %963 = vmatpush.msra.mxu0 %v826
        %964 = vmatpush.msra.mxu0 %v825
        %965 = vmatpush.msra.mxu0 %v824
        %966 = vmatpush.msra.mxu0 %v823
        %967 = vmatpush.msra.mxu0 %v822
        %968 = vmatpush.msra.mxu0 %v821
        %969 = vmatpush.msra.mxu0 %v820
        %970 = vmatpush.msra.mxu0 %v819
        %971 = vmatpush.msra.mxu0 %v818
        %972 = vmatpush.msra.mxu0 %v817
        %973 = vmatpush.msra.mxu0 %v816
        %974 = vmatpush.msra.mxu0 %v815
        %975 = vmatpush.msra.mxu0 %v814
        %976 = vmatpush.msra.mxu0 %v813
        %977 = vmatpush.msra.mxu0 %v812
        %978 = vmatpush.msra.mxu0 %v811
        %979 = vmatmul.f32.gmra.mxu0 %v728
        %v980 = vpop.f32.mrf.mxu0
        %v981 = vadd.f32 %v961, %v980
        %982 = vdwg.mxu0
        %983 = vmatpush.msra.mxu0 %v842
        %984 = vmatpush.msra.mxu0 %v841
        %985 = vmatpush.msra.mxu0 %v840
        %986 = vmatpush.msra.mxu0 %v839
        %987 = vmatpush.msra.mxu0 %v838
        %988 = vmatpush.msra.mxu0 %v837
        %989 = vmatpush.msra.mxu0 %v836
        %990 = vmatpush.msra.mxu0 %v835
        %991 = vmatpush.msra.mxu0 %v834
        %992 = vmatpush.msra.mxu0 %v833
        %993 = vmatpush.msra.mxu0 %v832
        %994 = vmatpush.msra.mxu0 %v831
        %995 = vmatpush.msra.mxu0 %v830
        %996 = vmatpush.msra.mxu0 %v829
        %997 = vmatpush.msra.mxu0 %v828
        %998 = vmatpush.msra.mxu0 %v827
        %999 = vmatmul.f32.gmra.mxu0 %v729
        %v1000 = vpop.f32.mrf.mxu0
        %v1001 = vadd.f32 %v981, %v1000
        %1002 = vdwg.mxu0
        %1003 = vmatpush.msra.mxu0 %v858
        %1004 = vmatpush.msra.mxu0 %v857
        %1005 = vmatpush.msra.mxu0 %v856
        %1006 = vmatpush.msra.mxu0 %v855
        %1007 = vmatpush.msra.mxu0 %v854
        %1008 = vmatpush.msra.mxu0 %v853
        %1009 = vmatpush.msra.mxu0 %v852
        %1010 = vmatpush.msra.mxu0 %v851
        %1011 = vmatpush.msra.mxu0 %v850
        %1012 = vmatpush.msra.mxu0 %v849
        %1013 = vmatpush.msra.mxu0 %v848
        %1014 = vmatpush.msra.mxu0 %v847
        %1015 = vmatpush.msra.mxu0 %v846
        %1016 = vmatpush.msra.mxu0 %v845
        %1017 = vmatpush.msra.mxu0 %v844
        %1018 = vmatpush.msra.mxu0 %v843
        %1019 = vmatmul.f32.gmra.mxu0 %v730
        %v1020 = vpop.f32.mrf.mxu0
        %v1021 = vadd.f32 %v1001, %v1020
        %1022 = vdwg.mxu0
        %v1023 = vld [vmem:[%s3] sm:$0x1]
        %v1024 = vld [vmem:[%s4] sm:$0x1]
        %v1025 = vadd.f32 %v1023, %v1024
        %vm1026 = vcmask 253952
        %1027 = vst.msk [vmem:[#allocation2] sm:$0x1] %vm1026, %v1025
        %1028 = vst.msk [vmem:[#allocation2 + $0x8] sm:$0x1] %vm1026, %v1025
        %v1030 = vrot.slane %v1021, 4
        %v1032 = vld [vmem:[%s4 + $0x1] sm:$0xf]
        %v1033 = vadd.f32 %v1021, %v1032
        %v1034 = vadd.f32 %v1030, %v1032
        %vm1035 = vcmask 257024
        %1036 = vst.msk [vmem:[#allocation2 + $0x1] sm:$0xf] %vm1035, %v1033
        %1037 = vst.msk [vmem:[#allocation2 + $0x9] sm:$0xf] %vm1035, %v1034
        %vm1038 = vcmask 256000
        %1039 = vst.msk [vmem:[#allocation2 + $0x5] sm:$0x7] %vm1038, 0.0
        %1040 = vst.msk [vmem:[#allocation2 + $0xd] sm:$0x7] %vm1038, 0.0
      $region96: #{visual_encoder_forward.5} parent=91 // pred_fallthru
        _
      %v1041 = vld [vmem:[#allocation2] sm:$0xff]
      %v1042 = vld [vmem:[#allocation2 + $0x8] sm:$0xff]
      %v1043 = vld [vmem:[%s680] sm:$0x1]
      %v1044 = vld [vmem:[%s683] sm:$0x1]
      %vm1045 = vcmask 261120
      %v1046 = vsel %vm1045, %v1041, 0.0
      %1047 = vadd.xlane.f32.xlu0 %v1046
      %v1048 = vpop.xlane.xlu0 %1047
      %v1049 = vsel %vm1045, %v1042, 0.0
      %1050 = vadd.xlane.f32.xlu0 %v1049
      %v1051 = vpop.xlane.xlu0 %1050
      %v1052 = vrcp.pop 32.0
      %v1053 = vmul.f32 32.0, %v1052
      %v1054 = vsub.f32 1.0, %v1053
      %v1055 = vmul.f32 %v1052, %v1054
      %v1056 = vadd.f32 %v1052, %v1055
      %vm1057 = vweird.f32 %v1052
      %v1058 = vsel %vm1057, %v1052, %v1056
      %v1059 = vmul.f32 %v1048, %v1058
      %v1060 = vmul.f32 %v1051, %v1058
      %v1061 = vsub.f32 %v1041, %v1059
      %v1062 = vsub.f32 %v1042, %v1060
      %v1063 = vmul.f32 %v1061, %v1061
      %v1064 = vmul.f32 %v1062, %v1062
      %v1065 = vsel %vm1045, %v1063, 0.0
      %1066 = vadd.xlane.f32.xlu0 %v1065
      %v1067 = vpop.xlane.xlu0 %1066
      %v1068 = vsel %vm1045, %v1064, 0.0
      %1069 = vadd.xlane.f32.xlu0 %v1068
      %v1070 = vpop.xlane.xlu0 %1069
      %v1071 = vmul.f32 %v1067, %v1058
      %v1072 = vmul.f32 %v1070, %v1058
      %v1073 = vadd.f32 %v1071, 1e-05
      %v1074 = vadd.f32 %v1072, 1e-05
      %v1075 = vrsqrt.pop %v1073
      %v1076 = vmul.f32 %v1075, %v1073
      %v1077 = vmul.f32 %v1076, %v1075
      %v1078 = vmul.f32 0.5, %v1077
      %v1079 = vsub.f32 1.5, %v1078
      %v1080 = vmul.f32 %v1075, %v1079
      %vm1081 = vweird.f32 %v1073
      %vm1082 = vweird.f32 %v1075
      %vm1083 = vmor %vm1081, %vm1082
      %v1084 = vsel %vm1083, %v1075, %v1080
      %v1085 = vrsqrt.pop %v1074
      %v1086 = vmul.f32 %v1085, %v1074
      %v1087 = vmul.f32 %v1086, %v1085
      %v1088 = vmul.f32 0.5, %v1087
      %v1089 = vsub.f32 1.5, %v1088
      %v1090 = vmul.f32 %v1085, %v1089
      %vm1091 = vweird.f32 %v1074
      %vm1092 = vweird.f32 %v1085
      %vm1093 = vmor %vm1091, %vm1092
      %v1094 = vsel %vm1093, %v1085, %v1090
      %v1095 = vmul.f32 %v1061, %v1084
      %v1096 = vmul.f32 %v1062, %v1094
      %v1098 = vperm.slane %v1043, 0
      %v1100 = vmul.f32 %v1095, %v1098
      %v1101 = vmul.f32 %v1096, %v1098
      %v1103 = vperm.slane %v1044, 0
      %v1105 = vadd.f32 %v1100, %v1103
      %v1106 = vadd.f32 %v1101, %v1103
      %v1107 = vld [vmem:[%s688] sm:$0xff]
      %v1108 = vld [vmem:[%s688 + $0x8] sm:$0xff]
      %v1109 = vld [vmem:[%s688 + $0x10] sm:$0xff]
      %v1110 = vld [vmem:[%s688 + $0x18] sm:$0xff]
      %v1112 = vsel %vm1045, %v1105, 0
      %v1115 = vsel %vm1045, %v1106, 0
      %1117 = vmatpush.msra.mxu0 0.0
      %1118 = vmatpush.msra.mxu0 0.0
      %1119 = vmatpush.msra.mxu0 0.0
      %1120 = vmatpush.msra.mxu0 0.0
      %1121 = vmatpush.msra.mxu0 0.0
      %1122 = vmatpush.msra.mxu0 0.0
      %1123 = vmatpush.msra.mxu0 0.0
      %1124 = vmatpush.msra.mxu0 0.0
      %1125 = vmatpush.msra.mxu0 0.0
      %1126 = vmatpush.msra.mxu0 0.0
      %1127 = vmatpush.msra.mxu0 0.0
      %1128 = vmatpush.msra.mxu0 0.0
      %1129 = vmatpush.msra.mxu0 %v1110
      %1130 = vmatpush.msra.mxu0 %v1109
      %1131 = vmatpush.msra.mxu0 %v1108
      %1132 = vmatpush.msra.mxu0 %v1107
      %1133 = vmatmul.f32.gmra.mxu0 %v1112
      %v1134 = vpop.f32.mrf.mxu0
      %v1135 = vadd.f32 0.0, %v1134
      %1136 = vmatmul.f32.gmra.mxu0 %v1115
      %v1137 = vpop.f32.mrf.mxu0
      %v1138 = vadd.f32 0.0, %v1137
      %1139 = vdwg.mxu0
      %v1140 = vlaneseq
      %v1141 = vand.u32 %v1140, 127
      %vm1142 = vcmp.lt.s32.totalorder %v1141, 5
      %1144 = vrot.lane.b32.xlu0 %v1135, 96
      %v1145 = vpop.permute.xlu0 %1144
      %vm1146 = vcmask 64512
      %v1147 = vsel %vm1146, %v1135, 0
      %v1149 = vsel %vm1146, %v1145, 0
      %1151 = vmatpush.xpose.msra.mxu0 0.0
      %1152 = vmatpush.xpose.msra.mxu0 0.0
      %1153 = vmatpush.xpose.msra.mxu0 0.0
      %1154 = vmatpush.xpose.msra.mxu0 0.0
      %1155 = vmatpush.xpose.msra.mxu0 0.0
      %1156 = vmatpush.xpose.msra.mxu0 0.0
      %1157 = vmatpush.xpose.msra.mxu0 0.0
      %1158 = vmatpush.xpose.msra.mxu0 0.0
      %1159 = vmatpush.xpose.msra.mxu0 0.0
      %1160 = vmatpush.xpose.msra.mxu0 0.0
      %1161 = vmatpush.xpose.msra.mxu0 0.0
      %1162 = vmatpush.xpose.msra.mxu0 0.0
      %1163 = vmatpush.xpose.msra.mxu0 0.0
      %1164 = vmatpush.xpose.msra.mxu0 0.0
      %1165 = vmatpush.xpose.msra.mxu0 0.0
      %1166 = vmatpush.xpose.msra.mxu0 %v1149
      %1167 = vmatmul.f32.gmra.mxu0 %v1147
      %v1168 = vpop.f32.mrf.mxu0
      %v1169 = vadd.f32 0.0, %v1168
      %1170 = vdwg.mxu0
      %1172 = vrot.lane.b32.xlu0 %v1138, 96
      %v1173 = vpop.permute.xlu0 %1172
      %v1174 = vsel %vm1146, %v1138, 0
      %v1176 = vsel %vm1146, %v1173, 0
      %1178 = vmatpush.xpose.msra.mxu0 0.0
      %1179 = vmatpush.xpose.msra.mxu0 0.0
      %1180 = vmatpush.xpose.msra.mxu0 0.0
      %1181 = vmatpush.xpose.msra.mxu0 0.0
      %1182 = vmatpush.xpose.msra.mxu0 0.0
      %1183 = vmatpush.xpose.msra.mxu0 0.0
      %1184 = vmatpush.xpose.msra.mxu0 0.0
      %1185 = vmatpush.xpose.msra.mxu0 0.0
      %1186 = vmatpush.xpose.msra.mxu0 0.0
      %1187 = vmatpush.xpose.msra.mxu0 0.0
      %1188 = vmatpush.xpose.msra.mxu0 0.0
      %1189 = vmatpush.xpose.msra.mxu0 0.0
      %1190 = vmatpush.xpose.msra.mxu0 0.0
      %1191 = vmatpush.xpose.msra.mxu0 0.0
      %1192 = vmatpush.xpose.msra.mxu0 0.0
      %1193 = vmatpush.xpose.msra.mxu0 %v1176
      %1194 = vmatmul.f32.gmra.mxu0 %v1174
      %v1195 = vpop.f32.mrf.mxu0
      %v1196 = vadd.f32 0.0, %v1195
      %1197 = vdwg.mxu0
      %v1198 = vsel %vm1142, 1, 0
      %vm1199 = vcmp.eq.s32.totalorder %v1198, 1
      %v1200 = vsel %vm1199, %v1169, -1e+30
      %v1201 = vsel %vm1199, %v1196, -1e+30
      %v1202 = vsel %vm1146, %v1200, -inf
      %1203 = vmax.xlane.f32.xlu0 %v1202
      %v1204 = vpop.xlane.xlu0 %1203
      %v1205 = vsel %vm1146, %v1201, -inf
      %1206 = vmax.xlane.f32.xlu0 %v1205
      %v1207 = vpop.xlane.xlu0 %1206
      %v1208 = vsub.f32 %v1200, %v1204
      %v1209 = vsub.f32 %v1201, %v1207
      %v1210 = vmul.f32 %v1208, 1.442695
      %v1211 = vpow.pop %v1210
      %v1212 = vmul.f32 %v1209, 1.442695
      %v1213 = vpow.pop %v1212
      %v1214 = vsel %vm1146, %v1211, 0.0
      %1215 = vadd.xlane.f32.xlu0 %v1214
      %v1216 = vpop.xlane.xlu0 %1215
      %v1217 = vsel %vm1146, %v1213, 0.0
      %1218 = vadd.xlane.f32.xlu0 %v1217
      %v1219 = vpop.xlane.xlu0 %1218
      %v1220 = vrcp.pop %v1216
      %v1221 = vrcp.pop %v1219
      %v1222 = vmul.f32 %v1211, %v1220
      %v1223 = vmul.f32 %v1213, %v1221
      %1224 = vrot.lane.b32.xlu0 %v1135, 64
      %v1225 = vpop.permute.xlu0 %1224
      %v1228 = vsel %vm1146, %v1222, 0
      %1230 = vmatpush.msra.mxu0 0.0
      %1231 = vmatpush.msra.mxu0 0.0
      %1232 = vmatpush.msra.mxu0 0.0
      %1233 = vmatpush.msra.mxu0 0.0
      %1234 = vmatpush.msra.mxu0 0.0
      %1235 = vmatpush.msra.mxu0 0.0
      %1236 = vmatpush.msra.mxu0 0.0
      %1237 = vmatpush.msra.mxu0 0.0
      %1238 = vmatpush.msra.mxu0 0.0
      %1239 = vmatpush.msra.mxu0 0.0
      %1240 = vmatpush.msra.mxu0 0.0
      %1241 = vmatpush.msra.mxu0 0.0
      %1242 = vmatpush.msra.mxu0 0.0
      %1243 = vmatpush.msra.mxu0 0.0
      %1244 = vmatpush.msra.mxu0 0.0
      %1245 = vmatpush.msra.mxu0 %v1225
      %1246 = vmatmul.f32.gmra.mxu0 %v1228
      %v1247 = vpop.f32.mrf.mxu0
      %v1248 = vadd.f32 0.0, %v1247
      %1249 = vdwg.mxu0
      %1250 = vrot.lane.b32.xlu0 %v1138, 64
      %v1251 = vpop.permute.xlu0 %1250
      %v1254 = vsel %vm1146, %v1223, 0
      %1256 = vmatpush.msra.mxu0 0.0
      %1257 = vmatpush.msra.mxu0 0.0
      %1258 = vmatpush.msra.mxu0 0.0
      %1259 = vmatpush.msra.mxu0 0.0
      %1260 = vmatpush.msra.mxu0 0.0
      %1261 = vmatpush.msra.mxu0 0.0
      %1262 = vmatpush.msra.mxu0 0.0
      %1263 = vmatpush.msra.mxu0 0.0
      %1264 = vmatpush.msra.mxu0 0.0
      %1265 = vmatpush.msra.mxu0 0.0
      %1266 = vmatpush.msra.mxu0 0.0
      %1267 = vmatpush.msra.mxu0 0.0
      %1268 = vmatpush.msra.mxu0 0.0
      %1269 = vmatpush.msra.mxu0 0.0
      %1270 = vmatpush.msra.mxu0 0.0
      %1271 = vmatpush.msra.mxu0 %v1251
      %1272 = vmatmul.f32.gmra.mxu0 %v1254
      %v1273 = vpop.f32.mrf.mxu0
      %v1274 = vadd.f32 0.0, %v1273
      %1275 = vdwg.mxu0
      %1276 = vst.msk [vmem:[#allocation3] sm:$0xff] %vm1146, %v1248
      %1277 = vst.msk [vmem:[#allocation3 + $0x8] sm:$0xff] %vm1146, %v1274
      %1278 = vrot.lane.b32.xlu0 %v1135, 120
      %v1279 = vpop.permute.xlu0 %1278
      %1280 = vrot.lane.b32.xlu0 %v1135, 88
      %v1281 = vpop.permute.xlu0 %1280
      %v1282 = vsel %vm1146, %v1279, 0
      %v1284 = vsel %vm1146, %v1281, 0
      %1286 = vmatpush.xpose.msra.mxu0 0.0
      %1287 = vmatpush.xpose.msra.mxu0 0.0
      %1288 = vmatpush.xpose.msra.mxu0 0.0
      %1289 = vmatpush.xpose.msra.mxu0 0.0
      %1290 = vmatpush.xpose.msra.mxu0 0.0
      %1291 = vmatpush.xpose.msra.mxu0 0.0
      %1292 = vmatpush.xpose.msra.mxu0 0.0
      %1293 = vmatpush.xpose.msra.mxu0 0.0
      %1294 = vmatpush.xpose.msra.mxu0 0.0
      %1295 = vmatpush.xpose.msra.mxu0 0.0
      %1296 = vmatpush.xpose.msra.mxu0 0.0
      %1297 = vmatpush.xpose.msra.mxu0 0.0
      %1298 = vmatpush.xpose.msra.mxu0 0.0
      %1299 = vmatpush.xpose.msra.mxu0 0.0
      %1300 = vmatpush.xpose.msra.mxu0 0.0
      %1301 = vmatpush.xpose.msra.mxu0 %v1284
      %1302 = vmatmul.f32.gmra.mxu0 %v1282
      %v1303 = vpop.f32.mrf.mxu0
      %v1304 = vadd.f32 0.0, %v1303
      %1305 = vdwg.mxu0
      %1306 = vrot.lane.b32.xlu0 %v1138, 120
      %v1307 = vpop.permute.xlu0 %1306
      %1308 = vrot.lane.b32.xlu0 %v1138, 88
      %v1309 = vpop.permute.xlu0 %1308
      %v1310 = vsel %vm1146, %v1307, 0
      %v1312 = vsel %vm1146, %v1309, 0
      %1314 = vmatpush.xpose.msra.mxu0 0.0
      %1315 = vmatpush.xpose.msra.mxu0 0.0
      %1316 = vmatpush.xpose.msra.mxu0 0.0
      %1317 = vmatpush.xpose.msra.mxu0 0.0
      %1318 = vmatpush.xpose.msra.mxu0 0.0
      %1319 = vmatpush.xpose.msra.mxu0 0.0
      %1320 = vmatpush.xpose.msra.mxu0 0.0
      %1321 = vmatpush.xpose.msra.mxu0 0.0
      %1322 = vmatpush.xpose.msra.mxu0 0.0
      %1323 = vmatpush.xpose.msra.mxu0 0.0
      %1324 = vmatpush.xpose.msra.mxu0 0.0
      %1325 = vmatpush.xpose.msra.mxu0 0.0
      %1326 = vmatpush.xpose.msra.mxu0 0.0
      %1327 = vmatpush.xpose.msra.mxu0 0.0
      %1328 = vmatpush.xpose.msra.mxu0 0.0
      %1329 = vmatpush.xpose.msra.mxu0 %v1312
      %1330 = vmatmul.f32.gmra.mxu0 %v1310
      %v1331 = vpop.f32.mrf.mxu0
      %v1332 = vadd.f32 0.0, %v1331
      %1333 = vdwg.mxu0
      %v1334 = vsel %vm1199, %v1304, -1e+30
      %v1335 = vsel %vm1199, %v1332, -1e+30
      %v1336 = vsel %vm1146, %v1334, -inf
      %1337 = vmax.xlane.f32.xlu0 %v1336
      %v1338 = vpop.xlane.xlu0 %1337
      %v1339 = vsel %vm1146, %v1335, -inf
      %1340 = vmax.xlane.f32.xlu0 %v1339
      %v1341 = vpop.xlane.xlu0 %1340
      %v1342 = vsub.f32 %v1334, %v1338
      %v1343 = vsub.f32 %v1335, %v1341
      %v1344 = vmul.f32 %v1342, 1.442695
      %v1345 = vpow.pop %v1344
      %v1346 = vmul.f32 %v1343, 1.442695
      %v1347 = vpow.pop %v1346
      %v1348 = vsel %vm1146, %v1345, 0.0
      %1349 = vadd.xlane.f32.xlu0 %v1348
      %v1350 = vpop.xlane.xlu0 %1349
      %v1351 = vsel %vm1146, %v1347, 0.0
      %1352 = vadd.xlane.f32.xlu0 %v1351
      %v1353 = vpop.xlane.xlu0 %1352
      %v1354 = vrcp.pop %v1350
      %v1355 = vrcp.pop %v1353
      %v1356 = vmul.f32 %v1345, %v1354
      %v1357 = vmul.f32 %v1347, %v1355
      %1358 = vrot.lane.b32.xlu0 %v1135, 56
      %v1359 = vpop.permute.xlu0 %1358
      %v1362 = vsel %vm1146, %v1356, 0
      %1364 = vmatpush.msra.mxu0 0.0
      %1365 = vmatpush.msra.mxu0 0.0
      %1366 = vmatpush.msra.mxu0 0.0
      %1367 = vmatpush.msra.mxu0 0.0
      %1368 = vmatpush.msra.mxu0 0.0
      %1369 = vmatpush.msra.mxu0 0.0
      %1370 = vmatpush.msra.mxu0 0.0
      %1371 = vmatpush.msra.mxu0 0.0
      %1372 = vmatpush.msra.mxu0 0.0
      %1373 = vmatpush.msra.mxu0 0.0
      %1374 = vmatpush.msra.mxu0 0.0
      %1375 = vmatpush.msra.mxu0 0.0
      %1376 = vmatpush.msra.mxu0 0.0
      %1377 = vmatpush.msra.mxu0 0.0
      %1378 = vmatpush.msra.mxu0 0.0
      %1379 = vmatpush.msra.mxu0 %v1359
      %1380 = vmatmul.f32.gmra.mxu0 %v1362
      %v1381 = vpop.f32.mrf.mxu0
      %v1382 = vadd.f32 0.0, %v1381
      %1383 = vdwg.mxu0
      %1384 = vrot.lane.b32.xlu0 %v1138, 56
      %v1385 = vpop.permute.xlu0 %1384
      %v1388 = vsel %vm1146, %v1357, 0
      %1390 = vmatpush.msra.mxu0 0.0
      %1391 = vmatpush.msra.mxu0 0.0
      %1392 = vmatpush.msra.mxu0 0.0
      %1393 = vmatpush.msra.mxu0 0.0
      %1394 = vmatpush.msra.mxu0 0.0
      %1395 = vmatpush.msra.mxu0 0.0
      %1396 = vmatpush.msra.mxu0 0.0
      %1397 = vmatpush.msra.mxu0 0.0
      %1398 = vmatpush.msra.mxu0 0.0
      %1399 = vmatpush.msra.mxu0 0.0
      %1400 = vmatpush.msra.mxu0 0.0
      %1401 = vmatpush.msra.mxu0 0.0
      %1402 = vmatpush.msra.mxu0 0.0
      %1403 = vmatpush.msra.mxu0 0.0
      %1404 = vmatpush.msra.mxu0 0.0
      %1405 = vmatpush.msra.mxu0 %v1385
      %1406 = vmatmul.f32.gmra.mxu0 %v1388
      %v1407 = vpop.f32.mrf.mxu0
      %v1408 = vadd.f32 0.0, %v1407
      %1409 = vdwg.mxu0
      %1412 = vrot.lane.b32.xlu0 %v1382, 8
      %v1413 = vpop.permute.xlu0 %1412
      %1414 = vrot.lane.b32.xlu0 %v1408, 8
      %v1415 = vpop.permute.xlu0 %1414
      %vm1418 = vcmask 130112
      %1419 = vst.msk [vmem:[#allocation3] sm:$0xff] %vm1418, %v1413
      %1420 = vst.msk [vmem:[#allocation3 + $0x8] sm:$0xff] %vm1418, %v1415
      %1421 = vrot.lane.b32.xlu0 %v1135, 112
      %v1422 = vpop.permute.xlu0 %1421
      %1423 = vrot.lane.b32.xlu0 %v1135, 80
      %v1424 = vpop.permute.xlu0 %1423
      %v1425 = vsel %vm1146, %v1422, 0
      %v1427 = vsel %vm1146, %v1424, 0
      %1429 = vmatpush.xpose.msra.mxu0 0.0
      %1430 = vmatpush.xpose.msra.mxu0 0.0
      %1431 = vmatpush.xpose.msra.mxu0 0.0
      %1432 = vmatpush.xpose.msra.mxu0 0.0
      %1433 = vmatpush.xpose.msra.mxu0 0.0
      %1434 = vmatpush.xpose.msra.mxu0 0.0
      %1435 = vmatpush.xpose.msra.mxu0 0.0
      %1436 = vmatpush.xpose.msra.mxu0 0.0
      %1437 = vmatpush.xpose.msra.mxu0 0.0
      %1438 = vmatpush.xpose.msra.mxu0 0.0
      %1439 = vmatpush.xpose.msra.mxu0 0.0
      %1440 = vmatpush.xpose.msra.mxu0 0.0
      %1441 = vmatpush.xpose.msra.mxu0 0.0
      %1442 = vmatpush.xpose.msra.mxu0 0.0
      %1443 = vmatpush.xpose.msra.mxu0 0.0
      %1444 = vmatpush.xpose.msra.mxu0 %v1427
      %1445 = vmatmul.f32.gmra.mxu0 %v1425
      %v1446 = vpop.f32.mrf.mxu0
      %v1447 = vadd.f32 0.0, %v1446
      %1448 = vdwg.mxu0
      %1449 = vrot.lane.b32.xlu0 %v1138, 112
      %v1450 = vpop.permute.xlu0 %1449
      %1451 = vrot.lane.b32.xlu0 %v1138, 80
      %v1452 = vpop.permute.xlu0 %1451
      %v1453 = vsel %vm1146, %v1450, 0
      %v1455 = vsel %vm1146, %v1452, 0
      %1457 = vmatpush.xpose.msra.mxu0 0.0
      %1458 = vmatpush.xpose.msra.mxu0 0.0
      %1459 = vmatpush.xpose.msra.mxu0 0.0
      %1460 = vmatpush.xpose.msra.mxu0 0.0
      %1461 = vmatpush.xpose.msra.mxu0 0.0
      %1462 = vmatpush.xpose.msra.mxu0 0.0
      %1463 = vmatpush.xpose.msra.mxu0 0.0
      %1464 = vmatpush.xpose.msra.mxu0 0.0
      %1465 = vmatpush.xpose.msra.mxu0 0.0
      %1466 = vmatpush.xpose.msra.mxu0 0.0
      %1467 = vmatpush.xpose.msra.mxu0 0.0
      %1468 = vmatpush.xpose.msra.mxu0 0.0
      %1469 = vmatpush.xpose.msra.mxu0 0.0
      %1470 = vmatpush.xpose.msra.mxu0 0.0
      %1471 = vmatpush.xpose.msra.mxu0 0.0
      %1472 = vmatpush.xpose.msra.mxu0 %v1455
      %1473 = vmatmul.f32.gmra.mxu0 %v1453
      %v1474 = vpop.f32.mrf.mxu0
      %v1475 = vadd.f32 0.0, %v1474
      %1476 = vdwg.mxu0
      %v1477 = vsel %vm1199, %v1447, -1e+30
      %v1478 = vsel %vm1199, %v1475, -1e+30
      %v1479 = vsel %vm1146, %v1477, -inf
      %1480 = vmax.xlane.f32.xlu0 %v1479
      %v1481 = vpop.xlane.xlu0 %1480
      %v1482 = vsel %vm1146, %v1478, -inf
      %1483 = vmax.xlane.f32.xlu0 %v1482
      %v1484 = vpop.xlane.xlu0 %1483
      %v1485 = vsub.f32 %v1477, %v1481
      %v1486 = vsub.f32 %v1478, %v1484
      %v1487 = vmul.f32 %v1485, 1.442695
      %v1488 = vpow.pop %v1487
      %v1489 = vmul.f32 %v1486, 1.442695
      %v1490 = vpow.pop %v1489
      %v1491 = vsel %vm1146, %v1488, 0.0
      %1492 = vadd.xlane.f32.xlu0 %v1491
      %v1493 = vpop.xlane.xlu0 %1492
      %v1494 = vsel %vm1146, %v1490, 0.0
      %1495 = vadd.xlane.f32.xlu0 %v1494
      %v1496 = vpop.xlane.xlu0 %1495
      %v1497 = vrcp.pop %v1493
      %v1498 = vrcp.pop %v1496
      %v1499 = vmul.f32 %v1488, %v1497
      %v1500 = vmul.f32 %v1490, %v1498
      %1501 = vrot.lane.b32.xlu0 %v1135, 48
      %v1502 = vpop.permute.xlu0 %1501
      %v1505 = vsel %vm1146, %v1499, 0
      %1507 = vmatpush.msra.mxu0 0.0
      %1508 = vmatpush.msra.mxu0 0.0
      %1509 = vmatpush.msra.mxu0 0.0
      %1510 = vmatpush.msra.mxu0 0.0
      %1511 = vmatpush.msra.mxu0 0.0
      %1512 = vmatpush.msra.mxu0 0.0
      %1513 = vmatpush.msra.mxu0 0.0
      %1514 = vmatpush.msra.mxu0 0.0
      %1515 = vmatpush.msra.mxu0 0.0
      %1516 = vmatpush.msra.mxu0 0.0
      %1517 = vmatpush.msra.mxu0 0.0
      %1518 = vmatpush.msra.mxu0 0.0
      %1519 = vmatpush.msra.mxu0 0.0
      %1520 = vmatpush.msra.mxu0 0.0
      %1521 = vmatpush.msra.mxu0 0.0
      %1522 = vmatpush.msra.mxu0 %v1502
      %1523 = vmatmul.f32.gmra.mxu0 %v1505
      %v1524 = vpop.f32.mrf.mxu0
      %v1525 = vadd.f32 0.0, %v1524
      %1526 = vdwg.mxu0
      %1527 = vrot.lane.b32.xlu0 %v1138, 48
      %v1528 = vpop.permute.xlu0 %1527
      %v1531 = vsel %vm1146, %v1500, 0
      %1533 = vmatpush.msra.mxu0 0.0
      %1534 = vmatpush.msra.mxu0 0.0
      %1535 = vmatpush.msra.mxu0 0.0
      %1536 = vmatpush.msra.mxu0 0.0
      %1537 = vmatpush.msra.mxu0 0.0
      %1538 = vmatpush.msra.mxu0 0.0
      %1539 = vmatpush.msra.mxu0 0.0
      %1540 = vmatpush.msra.mxu0 0.0
      %1541 = vmatpush.msra.mxu0 0.0
      %1542 = vmatpush.msra.mxu0 0.0
      %1543 = vmatpush.msra.mxu0 0.0
      %1544 = vmatpush.msra.mxu0 0.0
      %1545 = vmatpush.msra.mxu0 0.0
      %1546 = vmatpush.msra.mxu0 0.0
      %1547 = vmatpush.msra.mxu0 0.0
      %1548 = vmatpush.msra.mxu0 %v1528
      %1549 = vmatmul.f32.gmra.mxu0 %v1531
      %v1550 = vpop.f32.mrf.mxu0
      %v1551 = vadd.f32 0.0, %v1550
      %1552 = vdwg.mxu0
      %1555 = vrot.lane.b32.xlu0 %v1525, 16
      %v1556 = vpop.permute.xlu0 %1555
      %1557 = vrot.lane.b32.xlu0 %v1551, 16
      %v1558 = vpop.permute.xlu0 %1557
      %vm1561 = vcmask 195712
      %1562 = vst.msk [vmem:[#allocation3] sm:$0xff] %vm1561, %v1556
      %1563 = vst.msk [vmem:[#allocation3 + $0x8] sm:$0xff] %vm1561, %v1558
      %1564 = vrot.lane.b32.xlu0 %v1135, 104
      %v1565 = vpop.permute.xlu0 %1564
      %1566 = vrot.lane.b32.xlu0 %v1135, 72
      %v1567 = vpop.permute.xlu0 %1566
      %v1568 = vsel %vm1146, %v1565, 0
      %v1570 = vsel %vm1146, %v1567, 0
      %1572 = vmatpush.xpose.msra.mxu0 0.0
      %1573 = vmatpush.xpose.msra.mxu0 0.0
      %1574 = vmatpush.xpose.msra.mxu0 0.0
      %1575 = vmatpush.xpose.msra.mxu0 0.0
      %1576 = vmatpush.xpose.msra.mxu0 0.0
      %1577 = vmatpush.xpose.msra.mxu0 0.0
      %1578 = vmatpush.xpose.msra.mxu0 0.0
      %1579 = vmatpush.xpose.msra.mxu0 0.0
      %1580 = vmatpush.xpose.msra.mxu0 0.0
      %1581 = vmatpush.xpose.msra.mxu0 0.0
      %1582 = vmatpush.xpose.msra.mxu0 0.0
      %1583 = vmatpush.xpose.msra.mxu0 0.0
      %1584 = vmatpush.xpose.msra.mxu0 0.0
      %1585 = vmatpush.xpose.msra.mxu0 0.0
      %1586 = vmatpush.xpose.msra.mxu0 0.0
      %1587 = vmatpush.xpose.msra.mxu0 %v1570
      %1588 = vmatmul.f32.gmra.mxu0 %v1568
      %v1589 = vpop.f32.mrf.mxu0
      %v1590 = vadd.f32 0.0, %v1589
      %1591 = vdwg.mxu0
      %1592 = vrot.lane.b32.xlu0 %v1138, 104
      %v1593 = vpop.permute.xlu0 %1592
      %1594 = vrot.lane.b32.xlu0 %v1138, 72
      %v1595 = vpop.permute.xlu0 %1594
      %v1596 = vsel %vm1146, %v1593, 0
      %v1598 = vsel %vm1146, %v1595, 0
      %1600 = vmatpush.xpose.msra.mxu0 0.0
      %1601 = vmatpush.xpose.msra.mxu0 0.0
      %1602 = vmatpush.xpose.msra.mxu0 0.0
      %1603 = vmatpush.xpose.msra.mxu0 0.0
      %1604 = vmatpush.xpose.msra.mxu0 0.0
      %1605 = vmatpush.xpose.msra.mxu0 0.0
      %1606 = vmatpush.xpose.msra.mxu0 0.0
      %1607 = vmatpush.xpose.msra.mxu0 0.0
      %1608 = vmatpush.xpose.msra.mxu0 0.0
      %1609 = vmatpush.xpose.msra.mxu0 0.0
      %1610 = vmatpush.xpose.msra.mxu0 0.0
      %1611 = vmatpush.xpose.msra.mxu0 0.0
      %1612 = vmatpush.xpose.msra.mxu0 0.0
      %1613 = vmatpush.xpose.msra.mxu0 0.0
      %1614 = vmatpush.xpose.msra.mxu0 0.0
      %1615 = vmatpush.xpose.msra.mxu0 %v1598
      %1616 = vmatmul.f32.gmra.mxu0 %v1596
      %v1617 = vpop.f32.mrf.mxu0
      %v1618 = vadd.f32 0.0, %v1617
      %1619 = vdwg.mxu0
      %v1620 = vsel %vm1199, %v1590, -1e+30
      %v1621 = vsel %vm1199, %v1618, -1e+30
      %v1622 = vsel %vm1146, %v1620, -inf
      %1623 = vmax.xlane.f32.xlu0 %v1622
      %v1624 = vpop.xlane.xlu0 %1623
      %v1625 = vsel %vm1146, %v1621, -inf
      %1626 = vmax.xlane.f32.xlu0 %v1625
      %v1627 = vpop.xlane.xlu0 %1626
      %v1628 = vsub.f32 %v1620, %v1624
      %v1629 = vsub.f32 %v1621, %v1627
      %v1630 = vmul.f32 %v1628, 1.442695
      %v1631 = vpow.pop %v1630
      %v1632 = vmul.f32 %v1629, 1.442695
      %v1633 = vpow.pop %v1632
      %v1634 = vsel %vm1146, %v1631, 0.0
      %1635 = vadd.xlane.f32.xlu0 %v1634
      %v1636 = vpop.xlane.xlu0 %1635
      %v1637 = vsel %vm1146, %v1633, 0.0
      %1638 = vadd.xlane.f32.xlu0 %v1637
      %v1639 = vpop.xlane.xlu0 %1638
      %v1640 = vrcp.pop %v1636
      %v1641 = vrcp.pop %v1639
      %v1642 = vmul.f32 %v1631, %v1640
      %v1643 = vmul.f32 %v1633, %v1641
      %1644 = vrot.lane.b32.xlu0 %v1135, 40
      %v1645 = vpop.permute.xlu0 %1644
      %v1648 = vsel %vm1146, %v1642, 0
      %1650 = vmatpush.msra.mxu0 0.0
      %1651 = vmatpush.msra.mxu0 0.0
      %1652 = vmatpush.msra.mxu0 0.0
      %1653 = vmatpush.msra.mxu0 0.0
      %1654 = vmatpush.msra.mxu0 0.0
      %1655 = vmatpush.msra.mxu0 0.0
      %1656 = vmatpush.msra.mxu0 0.0
      %1657 = vmatpush.msra.mxu0 0.0
      %1658 = vmatpush.msra.mxu0 0.0
      %1659 = vmatpush.msra.mxu0 0.0
      %1660 = vmatpush.msra.mxu0 0.0
      %1661 = vmatpush.msra.mxu0 0.0
      %1662 = vmatpush.msra.mxu0 0.0
      %1663 = vmatpush.msra.mxu0 0.0
      %1664 = vmatpush.msra.mxu0 0.0
      %1665 = vmatpush.msra.mxu0 %v1645
      %1666 = vmatmul.f32.gmra.mxu0 %v1648
      %v1667 = vpop.f32.mrf.mxu0
      %v1668 = vadd.f32 0.0, %v1667
      %1669 = vdwg.mxu0
      %1670 = vrot.lane.b32.xlu0 %v1138, 40
      %v1671 = vpop.permute.xlu0 %1670
      %v1674 = vsel %vm1146, %v1643, 0
      %1676 = vmatpush.msra.mxu0 0.0
      %1677 = vmatpush.msra.mxu0 0.0
      %1678 = vmatpush.msra.mxu0 0.0
      %1679 = vmatpush.msra.mxu0 0.0
      %1680 = vmatpush.msra.mxu0 0.0
      %1681 = vmatpush.msra.mxu0 0.0
      %1682 = vmatpush.msra.mxu0 0.0
      %1683 = vmatpush.msra.mxu0 0.0
      %1684 = vmatpush.msra.mxu0 0.0
      %1685 = vmatpush.msra.mxu0 0.0
      %1686 = vmatpush.msra.mxu0 0.0
      %1687 = vmatpush.msra.mxu0 0.0
      %1688 = vmatpush.msra.mxu0 0.0
      %1689 = vmatpush.msra.mxu0 0.0
      %1690 = vmatpush.msra.mxu0 0.0
      %1691 = vmatpush.msra.mxu0 %v1671
      %1692 = vmatmul.f32.gmra.mxu0 %v1674
      %v1693 = vpop.f32.mrf.mxu0
      %v1694 = vadd.f32 0.0, %v1693
      %1695 = vdwg.mxu0
      %1698 = vrot.lane.b32.xlu0 %v1668, 24
      %v1699 = vpop.permute.xlu0 %1698
      %1700 = vrot.lane.b32.xlu0 %v1694, 24
      %v1701 = vpop.permute.xlu0 %1700
      %vm1704 = vcmask 261312
      %1705 = vst.msk [vmem:[#allocation3] sm:$0xff] %vm1704, %v1699
      %1706 = vst.msk [vmem:[#allocation3 + $0x8] sm:$0xff] %vm1704, %v1701
      %v1707 = vld [vmem:[#allocation3] sm:$0xff]
      %v1708 = vld [vmem:[#allocation3 + $0x8] sm:$0xff]
      %v1709 = vld [vmem:[%s693] sm:$0xff]
      %v1710 = vld [vmem:[%s693 + $0x8] sm:$0xff]
      %v1711 = vld [vmem:[%s693 + $0x10] sm:$0xff]
      %v1712 = vld [vmem:[%s693 + $0x18] sm:$0xff]
      %v1713 = vld [vmem:[%s696] sm:$0x1]
      %v1715 = vperm.slane %v1713, 0
      %v1718 = vsel %vm1045, %v1707, 0
      %v1721 = vsel %vm1045, %v1708, 0
      %1723 = vmatpush.msra.mxu0 0.0
      %1724 = vmatpush.msra.mxu0 0.0
      %1725 = vmatpush.msra.mxu0 0.0
      %1726 = vmatpush.msra.mxu0 0.0
      %1727 = vmatpush.msra.mxu0 0.0
      %1728 = vmatpush.msra.mxu0 0.0
      %1729 = vmatpush.msra.mxu0 0.0
      %1730 = vmatpush.msra.mxu0 0.0
      %1731 = vmatpush.msra.mxu0 0.0
      %1732 = vmatpush.msra.mxu0 0.0
      %1733 = vmatpush.msra.mxu0 0.0
      %1734 = vmatpush.msra.mxu0 0.0
      %1735 = vmatpush.msra.mxu0 %v1712
      %1736 = vmatpush.msra.mxu0 %v1711
      %1737 = vmatpush.msra.mxu0 %v1710
      %1738 = vmatpush.msra.mxu0 %v1709
      %1739 = vmatmul.f32.gmra.mxu0 %v1718
      %v1740 = vpop.f32.mrf.mxu0
      %v1741 = vadd.f32 %v1715, %v1740
      %1742 = vmatmul.f32.gmra.mxu0 %v1721
      %v1743 = vpop.f32.mrf.mxu0
      %v1744 = vadd.f32 %v1715, %v1743
      %1745 = vdwg.mxu0
      %v1746 = vadd.f32 %v1041, %v1741
      %v1747 = vadd.f32 %v1042, %v1744
      %v1748 = vld [vmem:[%s699] sm:$0x1]
      %v1749 = vld [vmem:[%s702] sm:$0x1]
      %v1750 = vsel %vm1045, %v1746, 0.0
      %1751 = vadd.xlane.f32.xlu0 %v1750
      %v1752 = vpop.xlane.xlu0 %1751
      %v1753 = vsel %vm1045, %v1747, 0.0
      %1754 = vadd.xlane.f32.xlu0 %v1753
      %v1755 = vpop.xlane.xlu0 %1754
      %v1756 = vmul.f32 %v1752, %v1058
      %v1757 = vmul.f32 %v1755, %v1058
      %v1758 = vsub.f32 %v1746, %v1756
      %v1759 = vsub.f32 %v1747, %v1757
      %v1760 = vmul.f32 %v1758, %v1758
      %v1761 = vmul.f32 %v1759, %v1759
      %v1762 = vsel %vm1045, %v1760, 0.0
      %1763 = vadd.xlane.f32.xlu0 %v1762
      %v1764 = vpop.xlane.xlu0 %1763
      %v1765 = vsel %vm1045, %v1761, 0.0
      %1766 = vadd.xlane.f32.xlu0 %v1765
      %v1767 = vpop.xlane.xlu0 %1766
      %v1768 = vmul.f32 %v1764, %v1058
      %v1769 = vmul.f32 %v1767, %v1058
      %v1770 = vadd.f32 %v1768, 1e-05
      %v1771 = vadd.f32 %v1769, 1e-05
      %v1772 = vrsqrt.pop %v1770
      %v1773 = vmul.f32 %v1772, %v1770
      %v1774 = vmul.f32 %v1773, %v1772
      %v1775 = vmul.f32 0.5, %v1774
      %v1776 = vsub.f32 1.5, %v1775
      %v1777 = vmul.f32 %v1772, %v1776
      %vm1778 = vweird.f32 %v1770
      %vm1779 = vweird.f32 %v1772
      %vm1780 = vmor %vm1778, %vm1779
      %v1781 = vsel %vm1780, %v1772, %v1777
      %v1782 = vrsqrt.pop %v1771
      %v1783 = vmul.f32 %v1782, %v1771
      %v1784 = vmul.f32 %v1783, %v1782
      %v1785 = vmul.f32 0.5, %v1784
      %v1786 = vsub.f32 1.5, %v1785
      %v1787 = vmul.f32 %v1782, %v1786
      %vm1788 = vweird.f32 %v1771
      %vm1789 = vweird.f32 %v1782
      %vm1790 = vmor %vm1788, %vm1789
      %v1791 = vsel %vm1790, %v1782, %v1787
      %v1792 = vmul.f32 %v1758, %v1781
      %v1793 = vmul.f32 %v1759, %v1791
      %v1795 = vperm.slane %v1748, 0
      %v1797 = vmul.f32 %v1792, %v1795
      %v1798 = vmul.f32 %v1793, %v1795
      %v1800 = vperm.slane %v1749, 0
      %v1802 = vadd.f32 %v1797, %v1800
      %v1803 = vadd.f32 %v1798, %v1800
      %v1804 = vld [vmem:[%s707] sm:$0xff]
      %v1805 = vld [vmem:[%s707 + $0x8] sm:$0xff]
      %v1806 = vld [vmem:[%s707 + $0x10] sm:$0xff]
      %v1807 = vld [vmem:[%s707 + $0x18] sm:$0xff]
      %v1808 = vld [vmem:[%s710] sm:$0x1]
      %v1810 = vperm.slane %v1808, 0
      %v1813 = vsel %vm1045, %v1802, 0
      %v1816 = vsel %vm1045, %v1803, 0
      %1818 = vmatpush.msra.mxu0 0.0
      %1819 = vmatpush.msra.mxu0 0.0
      %1820 = vmatpush.msra.mxu0 0.0
      %1821 = vmatpush.msra.mxu0 0.0
      %1822 = vmatpush.msra.mxu0 0.0
      %1823 = vmatpush.msra.mxu0 0.0
      %1824 = vmatpush.msra.mxu0 0.0
      %1825 = vmatpush.msra.mxu0 0.0
      %1826 = vmatpush.msra.mxu0 0.0
      %1827 = vmatpush.msra.mxu0 0.0
      %1828 = vmatpush.msra.mxu0 0.0
      %1829 = vmatpush.msra.mxu0 0.0
      %1830 = vmatpush.msra.mxu0 %v1807
      %1831 = vmatpush.msra.mxu0 %v1806
      %1832 = vmatpush.msra.mxu0 %v1805
      %1833 = vmatpush.msra.mxu0 %v1804
      %1834 = vmatmul.f32.gmra.mxu0 %v1813
      %v1835 = vpop.f32.mrf.mxu0
      %v1836 = vadd.f32 %v1810, %v1835
      %1837 = vmatmul.f32.gmra.mxu0 %v1816
      %v1838 = vpop.f32.mrf.mxu0
      %v1839 = vadd.f32 %v1810, %v1838
      %1840 = vdwg.mxu0
      %v1841 = vmax.f32 %v1836, 0.0
      %v1842 = vmax.f32 %v1839, 0.0
      %v1843 = vld [vmem:[%s715] sm:$0xff]
      %v1844 = vld [vmem:[%s715 + $0x8] sm:$0xff]
      %v1845 = vld [vmem:[%s715 + $0x10] sm:$0xff]
      %v1846 = vld [vmem:[%s715 + $0x18] sm:$0xff]
      %v1847 = vld [vmem:[%s715 + $0x20] sm:$0xff]
      %v1848 = vld [vmem:[%s715 + $0x28] sm:$0xff]
      %v1849 = vld [vmem:[%s715 + $0x30] sm:$0xff]
      %v1850 = vld [vmem:[%s715 + $0x38] sm:$0xff]
      %v1851 = vld [vmem:[%s715 + $0x40] sm:$0xff]
      %v1852 = vld [vmem:[%s715 + $0x48] sm:$0xff]
      %v1853 = vld [vmem:[%s715 + $0x50] sm:$0xff]
      %v1854 = vld [vmem:[%s715 + $0x58] sm:$0xff]
      %v1855 = vld [vmem:[%s715 + $0x60] sm:$0xff]
      %v1856 = vld [vmem:[%s715 + $0x68] sm:$0xff]
      %v1857 = vld [vmem:[%s715 + $0x70] sm:$0xff]
      %v1858 = vld [vmem:[%s715 + $0x78] sm:$0xff]
      %v1859 = vld [vmem:[%s718] sm:$0x1]
      %v1861 = vperm.slane %v1859, 0
      %1863 = vmatpush.msra.mxu0 %v1858
      %1864 = vmatpush.msra.mxu0 %v1857
      %1865 = vmatpush.msra.mxu0 %v1856
      %1866 = vmatpush.msra.mxu0 %v1855
      %1867 = vmatpush.msra.mxu0 %v1854
      %1868 = vmatpush.msra.mxu0 %v1853
      %1869 = vmatpush.msra.mxu0 %v1852
      %1870 = vmatpush.msra.mxu0 %v1851
      %1871 = vmatpush.msra.mxu0 %v1850
      %1872 = vmatpush.msra.mxu0 %v1849
      %1873 = vmatpush.msra.mxu0 %v1848
      %1874 = vmatpush.msra.mxu0 %v1847
      %1875 = vmatpush.msra.mxu0 %v1846
      %1876 = vmatpush.msra.mxu0 %v1845
      %1877 = vmatpush.msra.mxu0 %v1844
      %1878 = vmatpush.msra.mxu0 %v1843
      %1879 = vmatmul.f32.gmra.mxu0 %v1841
      %v1880 = vpop.f32.mrf.mxu0
      %v1881 = vadd.f32 %v1861, %v1880
      %1882 = vmatmul.f32.gmra.mxu0 %v1842
      %v1883 = vpop.f32.mrf.mxu0
      %v1884 = vadd.f32 %v1861, %v1883
      %1885 = vdwg.mxu0
      %v1886 = vadd.f32 %v1746, %v1881
      %v1887 = vadd.f32 %v1747, %v1884
      %1888 = vst.msk [vmem:[#allocation2] sm:$0xff] %vm1045, %v1886
      %1889 = vst.msk [vmem:[#allocation2 + $0x8] sm:$0xff] %vm1045, %v1887
      %p1890 = scmp.eq.s32.totalorder %s29, 1
      // Predicated region
      $region97: #{visual_encoder_forward.5} parent=91 // pred_check
        %p1891 = pneg %p1890
      $region98: #{visual_encoder_forward.5} parent=91 // pred_check_branch
        %1893 = sbr.rel (%p1891) target = $region100
      $region99: #{visual_encoder_forward.5} parent=91 // pred_region
        %v1894 = vld [vmem:[%s16] sm:$0x1]
        %v1895 = vld [vmem:[%s17] sm:$0x1]
        %v1896 = vsel %vm1045, %v1886, 0.0
        %1897 = vadd.xlane.f32.xlu0 %v1896
        %v1898 = vpop.xlane.xlu0 %1897
        %v1899 = vsel %vm1045, %v1887, 0.0
        %1900 = vadd.xlane.f32.xlu0 %v1899
        %v1901 = vpop.xlane.xlu0 %1900
        %v1902 = vmul.f32 %v1898, %v1058
        %v1903 = vmul.f32 %v1901, %v1058
        %v1904 = vsub.f32 %v1886, %v1902
        %v1905 = vsub.f32 %v1887, %v1903
        %v1906 = vmul.f32 %v1904, %v1904
        %v1907 = vmul.f32 %v1905, %v1905
        %v1908 = vsel %vm1045, %v1906, 0.0
        %1909 = vadd.xlane.f32.xlu0 %v1908
        %v1910 = vpop.xlane.xlu0 %1909
        %v1911 = vsel %vm1045, %v1907, 0.0
        %1912 = vadd.xlane.f32.xlu0 %v1911
        %v1913 = vpop.xlane.xlu0 %1912
        %v1914 = vmul.f32 %v1910, %v1058
        %v1915 = vmul.f32 %v1913, %v1058
        %v1916 = vadd.f32 %v1914, 1e-05
        %v1917 = vadd.f32 %v1915, 1e-05
        %v1918 = vrsqrt.pop %v1916
        %v1919 = vmul.f32 %v1918, %v1916
        %v1920 = vmul.f32 %v1919, %v1918
        %v1921 = vmul.f32 0.5, %v1920
        %v1922 = vsub.f32 1.5, %v1921
        %v1923 = vmul.f32 %v1918, %v1922
        %vm1924 = vweird.f32 %v1916
        %vm1925 = vweird.f32 %v1918
        %vm1926 = vmor %vm1924, %vm1925
        %v1927 = vsel %vm1926, %v1918, %v1923
        %v1928 = vrsqrt.pop %v1917
        %v1929 = vmul.f32 %v1928, %v1917
        %v1930 = vmul.f32 %v1929, %v1928
        %v1931 = vmul.f32 0.5, %v1930
        %v1932 = vsub.f32 1.5, %v1931
        %v1933 = vmul.f32 %v1928, %v1932
        %vm1934 = vweird.f32 %v1917
        %vm1935 = vweird.f32 %v1928
        %vm1936 = vmor %vm1934, %vm1935
        %v1937 = vsel %vm1936, %v1928, %v1933
        %v1938 = vmul.f32 %v1904, %v1927
        %v1939 = vmul.f32 %v1905, %v1937
        %v1941 = vperm.slane %v1894, 0
        %v1943 = vmul.f32 %v1938, %v1941
        %v1944 = vmul.f32 %v1939, %v1941
        %v1946 = vperm.slane %v1895, 0
        %v1948 = vadd.f32 %v1943, %v1946
        %v1949 = vadd.f32 %v1944, %v1946
        %1950 = vst.msk [vmem:[%s18] sm:$0xff] %vm1045, %v1948
        %1951 = vst.msk [vmem:[%s18 + $0x8] sm:$0xff] %vm1045, %v1949
      $region100: #{visual_encoder_forward.5} parent=91 // pred_fallthru
        _
      // Predicated region
      $region101: #{visual_encoder_forward.5} parent=91 // pred_check
        %p1952 = pneg %p475
      $region102: #{visual_encoder_forward.5} parent=91 // pred_check_branch
        %1954 = sbr.rel (%p1952) target = $region104
      $region103: #{visual_encoder_forward.5} parent=91 // pred_region
        _
      $region104: #{visual_encoder_forward.5} parent=91 // pred_fallthru
        _
      // Predicated region
      $region105: #{visual_encoder_forward.5} parent=91 // pred_check
        %p1955 = pneg %p475
      $region106: #{visual_encoder_forward.5} parent=91 // pred_check_branch
        %1957 = sbr.rel (%p1955) target = $region108
      $region107: #{visual_encoder_forward.5} parent=91 // pred_region
        _
      $region108: #{visual_encoder_forward.5} parent=91 // pred_fallthru
        _
    $region92: #{visual_encoder_forward.5} parent=5 // pred_fallthru
      _
    %p1958 = scmp.le.s32.totalorder 2, %s24
    // Predicated region
    $region109: #{visual_encoder_forward.5} parent=5 // pred_check
      %p1959 = pneg %p1958
    $region110: #{visual_encoder_forward.5} parent=5 // pred_check_branch
      %1961 = sbr.rel (%p1959) target = $region112
    $region111: #{visual_encoder_forward.5} parent=5 // pred_region
      %s1962 = ssub.s32 %s24, 2
    $region112: #{visual_encoder_forward.5} parent=5 // pred_fallthru
      _
  $region6: #{visual_encoder_forward.5} parent=0 // loop_footer
    %s28 = sadd.s32 1, %s24
  $region7: #{visual_encoder_forward.5} parent=0 // loop_footer_branch
    %23 = sbr.rel target = $region3
  $region8: #{visual_encoder_forward.5} parent=0 // loop_exit
    _

</llo_original>
